<compile_context>
chip_gen: v7x
topology: tpu7x:2x2x1
jax: 0.10.0
libtpu: 0.0.40
codegen_flags: <defaults>
</compile_context>

<pallas_src>
import jax
import jax.numpy as jnp
import numpy as np
from jax.experimental import pallas as pl
from jax.experimental.pallas import tpu as pltpu

# ---------------- model / layout constants ----------------
B  = 256          # batch
HW = 16           # spatial side -> x is (B, 16, 16)
D  = HW * HW      # flattened feature dim = 256 (lane multiple)
H_LOGICAL = 64    # logical hidden width of encoder/decoder MLPs
HP = 128          # hidden width padded to a full lane tile
M  = 8            # logical latent dim
MP = 128          # latent dim padded to a full lane tile

# Packed weight slab (bf16): stacked weight matrices, zero-padded.
R_WE1 = 0                 # we1: rows [0, D)           cols [0, HP)
R_WE2 = D                 # we2: rows [D, D+HP)        cols [0, 2*MP)
R_WD1 = D + HP            # wd1: rows [D+HP, D+HP+MP)  cols [0, HP)
R_WD2 = D + HP + MP       # wd2: rows [.., ..+HP)      cols [0, D)
W_ROWS = D + 2 * HP + MP  # 640
W_COLS = 2 * MP           # 256 == max(HP, 2*MP, D)

# Packed bias row (f32): one (1, 768) vector, sliced at lane boundaries.
C_BE1 = 0
C_BE2 = HP
C_BD1 = HP + 2 * MP
C_BD2 = 2 * HP + 2 * MP
B_COLS = 2 * HP + 2 * MP + D   # 768


def _num_tensorcores():
    """2 TensorCores per chip on v7x; 1 on v5e/v6e. Conservative fallback: 1."""
    try:
        kind = jax.devices()[0].device_kind.lower()
        if "v7" in kind or "7x" in kind:
            return 2
    except Exception:
        pass
    return 1


def vae_nelbo_kernel(x_ref, eps_ref, w_ref, b_ref, out_ref):
    x_bf = x_ref[...]                         # (TB, D)  bf16, values in {0,1}
    eps  = eps_ref[...]                       # (TB, MP) f32 reparam noise

    # ---- Encoder q(z|x): x -> ReLU -> (mean, log_std) ----------------------
    h = jnp.dot(x_bf, w_ref[R_WE1:R_WE1 + D, 0:HP],
                preferred_element_type=jnp.float32)
    h = jnp.maximum(h + b_ref[:, C_BE1:C_BE1 + HP], 0.0)            # (TB, HP)

    enc = jnp.dot(h.astype(jnp.bfloat16), w_ref[R_WE2:R_WE2 + HP, 0:2 * MP],
                  preferred_element_type=jnp.float32)
    enc = enc + b_ref[:, C_BE2:C_BE2 + 2 * MP]                      # (TB, 2MP)
    mean    = enc[:, :MP]                     # split exactly on lane boundary
    log_std = enc[:, MP:]
    std = jnp.exp(log_std)

    # ---- rsample + KL( N(mean, std) || N(0, I) ) ---------------------------
    z  = mean + std * eps                                           # (TB, MP)
    kl = 0.5 * jnp.sum(mean * mean + std * std - 1.0 - 2.0 * log_std,
                       axis=-1, keepdims=True)                      # (TB, 1)

    # ---- Decoder p(x|z): z -> ReLU -> Bernoulli logits ---------------------
    hd = jnp.dot(z.astype(jnp.bfloat16), w_ref[R_WD1:R_WD1 + MP, 0:HP],
                 preferred_element_type=jnp.float32)
    hd = jnp.maximum(hd + b_ref[:, C_BD1:C_BD1 + HP], 0.0)          # (TB, HP)

    logits = jnp.dot(hd.astype(jnp.bfloat16), w_ref[R_WD2:R_WD2 + HP, 0:D],
                     preferred_element_type=jnp.float32)
    logits = logits + b_ref[:, C_BD2:C_BD2 + D]                     # (TB, D)

    # Bernoulli log-prob for binary x:
    #   x*l - softplus(l) == -softplus(where(x==1, -l, l))
    # (no f32 copy of x needed; only the bf16 tile stays live).
    signed = jnp.where(x_bf > 0, -logits, logits)
    log_px = -jnp.sum(jax.nn.softplus(signed), axis=-1, keepdims=True)  # (TB,1)

    # Per-tile ELBO partial sum, written as one fully-aligned (8, 128) block.
    tile_sum = jnp.sum(log_px - kl, axis=0, keepdims=True)          # (1, 1)
    out_ref[...] = jnp.broadcast_to(tile_sum, (8, 128))


def vae_forward(x_img, eps, w_slab, b_row, *, tb=None):
    """x_img: (B, HW, HW) in {0,1}; returns scalar negative ELBO."""
    b = x_img.shape[0]
    xf = x_img.reshape(b, D).astype(jnp.bfloat16)   # 0/1 exact in bf16

    if tb is None:
        # One tile per TensorCore: whole batch on v5e/v6e, split in two on v7x.
        if _num_tensorcores() >= 2 and b % 2 == 0 and (b // 2) % 8 == 0:
            tb = b // 2
        else:
            tb = b
    grid_b = b // tb

    flops = 2 * b * (D * HP + HP * 2 * MP + MP * HP + HP * D)
    transcendentals = b * (MP + 2 * D)              # exp + softplus(exp/log)
    bytes_accessed = (xf.size * 2 + eps.size * 4 + w_slab.size * 2
                      + b_row.size * 4 + grid_b * 8 * 128 * 4)

    partials = pl.pallas_call(
        vae_nelbo_kernel,
        out_shape=jax.ShapeDtypeStruct((grid_b * 8, 128), jnp.float32),
        grid=(grid_b,),
        in_specs=[
            pl.BlockSpec((tb, D), lambda i: (i, 0)),            # x tile
            pl.BlockSpec((tb, MP), lambda i: (i, 0)),           # eps tile
            pl.BlockSpec((W_ROWS, W_COLS), lambda i: (0, 0)),   # resident weights
            pl.BlockSpec((1, B_COLS), lambda i: (0, 0)),        # resident biases
        ],
        out_specs=pl.BlockSpec((8, 128), lambda i: (i, 0)),     # lane-dense partial
        compiler_params=pltpu.CompilerParams(
            dimension_semantics=("parallel",)),
        cost_estimate=pl.CostEstimate(flops=flops,
                                      transcendentals=transcendentals,
                                      bytes_accessed=bytes_accessed),
    )(xf, eps, w_slab, b_row)

    # Each tile's partial sum is broadcast over its (8, 128) block; take one
    # representative per tile and finish the mean (<=2 scalars) in XLA.
    tile_sums = partials.reshape(grid_b, 8, 128)[:, 0, 0]
    return -jnp.sum(tile_sums) / b


# ---------------- parameters: logical init + packed/padded form -------------
def init_params(key):
    ks = jax.random.split(key, 8)
    s = lambda fan_in: 1.0 / np.sqrt(fan_in)
    return {
        # encoder: D -> H -> (mean, log_std)
        "we1": jax.random.normal(ks[0], (D, H_LOGICAL), jnp.float32) * s(D),
        "be1": jax.random.normal(ks[1], (H_LOGICAL,), jnp.float32) * 0.1,
        "we2": jax.random.normal(ks[2], (H_LOGICAL, 2 * M), jnp.float32) * s(H_LOGICAL),
        "be2": jax.random.normal(ks[3], (2 * M,), jnp.float32) * 0.1,
        # decoder: M -> H -> D (logits)
        "wd1": jax.random.normal(ks[4], (M, H_LOGICAL), jnp.float32) * s(M),
        "bd1": jax.random.normal(ks[5], (H_LOGICAL,), jnp.float32) * 0.1,
        "wd2": jax.random.normal(ks[6], (H_LOGICAL, D), jnp.float32) * s(H_LOGICAL),
        "bd2": jax.random.normal(ks[7], (D,), jnp.float32) * 0.1,
    }


def pack_params(p):
    """Pack 4 weights into one zero-padded bf16 slab and 4 biases into one f32 row."""
    Hh = H_LOGICAL
    w = np.zeros((W_ROWS, W_COLS), np.float32)
    w[R_WE1:R_WE1 + D, 0:Hh]            = np.asarray(p["we1"])
    w[R_WE2:R_WE2 + Hh, 0:M]            = np.asarray(p["we2"])[:, :M]   # mean head
    w[R_WE2:R_WE2 + Hh, MP:MP + M]      = np.asarray(p["we2"])[:, M:]   # log_std head
    w[R_WD1:R_WD1 + M, 0:Hh]            = np.asarray(p["wd1"])
    w[R_WD2:R_WD2 + Hh, 0:D]            = np.asarray(p["wd2"])

    b = np.zeros((1, B_COLS), np.float32)
    b[0, C_BE1:C_BE1 + Hh]              = np.asarray(p["be1"])
    b[0, C_BE2:C_BE2 + M]               = np.asarray(p["be2"])[:M]
    b[0, C_BE2 + MP:C_BE2 + MP + M]     = np.asarray(p["be2"])[M:]
    b[0, C_BD1:C_BD1 + Hh]              = np.asarray(p["bd1"])
    b[0, C_BD2:C_BD2 + D]               = np.asarray(p["bd2"])

    return jnp.asarray(w, jnp.bfloat16), jnp.asarray(b, jnp.float32)


# ---------------- pure-JAX reference (unpadded, mirrors bf16 rounding) ------
def vae_forward_ref(x_img, eps_full, p):
    bf = lambda a: a.astype(jnp.bfloat16).astype(jnp.float32)
    xf = x_img.reshape(B, D).astype(jnp.float32)
    eps = eps_full[:, :M]
    h = jnp.maximum(bf(xf) @ bf(p["we1"]) + p["be1"], 0.0)
    enc = bf(h) @ bf(p["we2"]) + p["be2"]
    mean, log_std = enc[:, :M], enc[:, M:]
    std = jnp.exp(log_std)
    z = mean + std * eps
    kl = 0.5 * jnp.sum(mean ** 2 + std ** 2 - 1.0 - 2.0 * log_std, axis=-1)
    hd = jnp.maximum(bf(z) @ bf(p["wd1"]) + p["bd1"], 0.0)
    logits = bf(hd) @ bf(p["wd2"]) + p["bd2"]
    log_px = jnp.sum(xf * logits - jax.nn.softplus(logits), axis=-1)
    return -jnp.mean(log_px - kl)


if __name__ == "__main__":
    root = jax.random.PRNGKey(0)
    k_params, k_x, k_eps = jax.random.split(root, 3)

    params = init_params(k_params)
    w_slab, b_row = pack_params(params)

    # Binarized observations (Bernoulli decoder) and deterministic rsample noise.
    x = (jax.random.uniform(k_x, (B, HW, HW)) > 0.5).astype(jnp.float32)
    eps = jax.random.normal(k_eps, (B, MP), jnp.float32)  # only first M cols matter

    nelbo = jax.block_until_ready(jax.jit(vae_forward)(x, eps, w_slab, b_row))
    nelbo_ref = jax.block_until_ready(vae_forward_ref(x, eps, params))

    assert np.allclose(float(nelbo), float(nelbo_ref), rtol=5e-3, atol=1e-2), (
        float(nelbo), float(nelbo_ref))
    print("KERNEL_OK")
</pallas_src>

<mosaic_0001>
module attributes {stable_mosaic.version = 11 : i64} {
  func.func @vae_nelbo_kernel(%arg0: i32, %arg1: memref<256x256xbf16, #tpu.memory_space<vmem>>, %arg2: memref<256x128xf32, #tpu.memory_space<vmem>>, %arg3: memref<640x256xbf16, #tpu.memory_space<vmem>>, %arg4: memref<1x768xf32, #tpu.memory_space<vmem>>, %arg5: memref<8x128xf32, #tpu.memory_space<vmem>>) attributes {dimension_semantics = [#tpu.dimension_semantics<parallel>], iteration_bounds = array<i64: 1>, scalar_prefetch = 0 : i64, scratch_operands = 0 : i64, tpu.core_type = #tpu.core_type<tc>, window_params = [{transform_indices = @transform_0, window_bounds = array<i64: 256, 256>}, {transform_indices = @transform_1, window_bounds = array<i64: 256, 128>}, {pipeline_mode = #tpu.pipeline_mode<synchronous>, transform_indices = @transform_2, window_bounds = array<i64: 640, 256>}, {pipeline_mode = #tpu.pipeline_mode<synchronous>, transform_indices = @transform_3, window_bounds = array<i64: 1, 768>}, {transform_indices = @transform_4, window_bounds = array<i64: 8, 128>}]} {
    %c0 = arith.constant 0 : index
    %c0_0 = arith.constant 0 : index
    %0 = vector.load %arg1[%c0, %c0_0] : memref<256x256xbf16, #tpu.memory_space<vmem>>, vector<256x256xbf16>
    %c0_1 = arith.constant 0 : index
    %c0_2 = arith.constant 0 : index
    %1 = vector.load %arg2[%c0_1, %c0_2] : memref<256x128xf32, #tpu.memory_space<vmem>>, vector<256x128xf32>
    %c0_3 = arith.constant 0 : index
    %c0_4 = arith.constant 0 : index
    %2 = vector.load %arg3[%c0_3, %c0_4] : memref<640x256xbf16, #tpu.memory_space<vmem>>, vector<256x128xbf16>
    %cst = arith.constant dense<0.000000e+00> : vector<256x128xf32>
    %3 = tpu.matmul %0, %2, %cst {dimension_numbers = #tpu.dot_dimension_numbers<[1], [0], [0], [1], [0, 0, 1, 1], [], []>} : vector<256x256xbf16>, vector<256x128xbf16>, vector<256x128xf32> -> vector<256x128xf32>
    %c0_5 = arith.constant 0 : index
    %c0_6 = arith.constant 0 : index
    %4 = vector.load %arg4[%c0_5, %c0_6] : memref<1x768xf32, #tpu.memory_space<vmem>>, vector<1x128xf32>
    %5 = vector.broadcast %4 : vector<1x128xf32> to vector<256x128xf32>
    %6 = arith.addf %3, %5 : vector<256x128xf32>
    %cst_7 = arith.constant 0.000000e+00 : f32
    %7 = vector.broadcast %cst_7 : f32 to vector<256x128xf32>
    %8 = arith.maximumf %6, %7 : vector<256x128xf32>
    %9 = arith.truncf %8 : vector<256x128xf32> to vector<256x128xbf16>
    %c256 = arith.constant 256 : index
    %c0_8 = arith.constant 0 : index
    %10 = vector.load %arg3[%c256, %c0_8] : memref<640x256xbf16, #tpu.memory_space<vmem>>, vector<128x256xbf16>
    %cst_9 = arith.constant dense<0.000000e+00> : vector<256x256xf32>
    %11 = tpu.matmul %9, %10, %cst_9 {dimension_numbers = #tpu.dot_dimension_numbers<[1], [0], [0], [1], [0, 0, 1, 1], [], []>} : vector<256x128xbf16>, vector<128x256xbf16>, vector<256x256xf32> -> vector<256x256xf32>
    %c0_10 = arith.constant 0 : index
    %c128 = arith.constant 128 : index
    %12 = vector.load %arg4[%c0_10, %c128] : memref<1x768xf32, #tpu.memory_space<vmem>>, vector<1x256xf32>
    %13 = vector.broadcast %12 : vector<1x256xf32> to vector<256x256xf32>
    %14 = arith.addf %11, %13 : vector<256x256xf32>
    %15 = vector.extract_strided_slice %14 {offsets = [0, 0], sizes = [256, 128], strides = [1, 1]} : vector<256x256xf32> to vector<256x128xf32>
    %16 = vector.extract_strided_slice %14 {offsets = [0, 128], sizes = [256, 128], strides = [1, 1]} : vector<256x256xf32> to vector<256x128xf32>
    %17 = math.exp %16 : vector<256x128xf32>
    %18 = arith.mulf %17, %1 : vector<256x128xf32>
    %19 = arith.addf %15, %18 : vector<256x128xf32>
    %20 = arith.mulf %15, %15 : vector<256x128xf32>
    %21 = arith.mulf %17, %17 : vector<256x128xf32>
    %22 = arith.addf %20, %21 : vector<256x128xf32>
    %cst_11 = arith.constant 1.000000e+00 : f32
    %23 = vector.broadcast %cst_11 : f32 to vector<256x128xf32>
    %24 = arith.subf %22, %23 : vector<256x128xf32>
    %cst_12 = arith.constant 2.000000e+00 : f32
    %25 = vector.broadcast %cst_12 : f32 to vector<256x128xf32>
    %26 = arith.mulf %25, %16 : vector<256x128xf32>
    %27 = arith.subf %24, %26 : vector<256x128xf32>
    %cst_13 = arith.constant dense<0.000000e+00> : vector<256xf32>
    %28 = vector.multi_reduction <add>, %27, %cst_13 [1] : vector<256x128xf32> to vector<256xf32>
    %29 = vector.shape_cast %28 : vector<256xf32> to vector<256x1xf32>
    %cst_14 = arith.constant 5.000000e-01 : f32
    %30 = vector.broadcast %cst_14 : f32 to vector<256x1xf32>
    %31 = arith.mulf %30, %29 : vector<256x1xf32>
    %32 = arith.truncf %19 : vector<256x128xf32> to vector<256x128xbf16>
    %c384 = arith.constant 384 : index
    %c0_15 = arith.constant 0 : index
    %33 = vector.load %arg3[%c384, %c0_15] : memref<640x256xbf16, #tpu.memory_space<vmem>>, vector<128x128xbf16>
    %cst_16 = arith.constant dense<0.000000e+00> : vector<256x128xf32>
    %34 = tpu.matmul %32, %33, %cst_16 {dimension_numbers = #tpu.dot_dimension_numbers<[1], [0], [0], [1], [0, 0, 1, 1], [], []>} : vector<256x128xbf16>, vector<128x128xbf16>, vector<256x128xf32> -> vector<256x128xf32>
    %c0_17 = arith.constant 0 : index
    %c384_18 = arith.constant 384 : index
    %35 = vector.load %arg4[%c0_17, %c384_18] : memref<1x768xf32, #tpu.memory_space<vmem>>, vector<1x128xf32>
    %36 = vector.broadcast %35 : vector<1x128xf32> to vector<256x128xf32>
    %37 = arith.addf %34, %36 : vector<256x128xf32>
    %cst_19 = arith.constant 0.000000e+00 : f32
    %38 = vector.broadcast %cst_19 : f32 to vector<256x128xf32>
    %39 = arith.maximumf %37, %38 : vector<256x128xf32>
    %40 = arith.truncf %39 : vector<256x128xf32> to vector<256x128xbf16>
    %c512 = arith.constant 512 : index
    %c0_20 = arith.constant 0 : index
    %41 = vector.load %arg3[%c512, %c0_20] : memref<640x256xbf16, #tpu.memory_space<vmem>>, vector<128x256xbf16>
    %cst_21 = arith.constant dense<0.000000e+00> : vector<256x256xf32>
    %42 = tpu.matmul %40, %41, %cst_21 {dimension_numbers = #tpu.dot_dimension_numbers<[1], [0], [0], [1], [0, 0, 1, 1], [], []>} : vector<256x128xbf16>, vector<128x256xbf16>, vector<256x256xf32> -> vector<256x256xf32>
    %c0_22 = arith.constant 0 : index
    %c512_23 = arith.constant 512 : index
    %43 = vector.load %arg4[%c0_22, %c512_23] : memref<1x768xf32, #tpu.memory_space<vmem>>, vector<1x256xf32>
    %44 = vector.broadcast %43 : vector<1x256xf32> to vector<256x256xf32>
    %45 = arith.addf %42, %44 : vector<256x256xf32>
    %cst_24 = arith.constant 0.000000e+00 : bf16
    %46 = vector.broadcast %cst_24 : bf16 to vector<256x256xbf16>
    %47 = arith.cmpf ogt, %0, %46 : vector<256x256xbf16>
    %cst_25 = arith.constant 0.000000e+00 : f32
    %48 = vector.broadcast %cst_25 : f32 to vector<256x256xf32>
    %49 = arith.subf %48, %45 : vector<256x256xf32>
    %50 = arith.select %47, %49, %45 : vector<256x256xi1>, vector<256x256xf32>
    %cst_26 = arith.constant 0.000000e+00 : f32
    %51 = vector.broadcast %cst_26 : f32 to vector<256x256xf32>
    %52 = arith.maximumf %50, %51 : vector<256x256xf32>
    %53 = vector.broadcast %cst_26 : f32 to vector<256x256xf32>
    %54 = arith.subf %50, %53 : vector<256x256xf32>
    %55 = arith.cmpf one, %54, %54 : vector<256x256xf32>
    %56 = vector.broadcast %cst_26 : f32 to vector<256x256xf32>
    %57 = arith.addf %50, %56 : vector<256x256xf32>
    %58 = math.absf %54 : vector<256x256xf32>
    %cst_27 = arith.constant 0.000000e+00 : f32
    %59 = vector.broadcast %cst_27 : f32 to vector<256x256xf32>
    %60 = arith.subf %59, %58 : vector<256x256xf32>
    %61 = math.exp %60 : vector<256x256xf32>
    %62 = math.log1p %61 : vector<256x256xf32>
    %63 = arith.addf %52, %62 : vector<256x256xf32>
    %64 = arith.select %55, %57, %63 : vector<256x256xi1>, vector<256x256xf32>
    %cst_28 = arith.constant dense<0.000000e+00> : vector<256xf32>
    %65 = vector.multi_reduction <add>, %64, %cst_28 [1] : vector<256x256xf32> to vector<256xf32>
    %66 = vector.shape_cast %65 : vector<256xf32> to vector<256x1xf32>
    %cst_29 = arith.constant 0.000000e+00 : f32
    %67 = vector.broadcast %cst_29 : f32 to vector<256x1xf32>
    %68 = arith.subf %67, %66 : vector<256x1xf32>
    %69 = arith.subf %68, %31 : vector<256x1xf32>
    %cst_30 = arith.constant dense<0.000000e+00> : vector<1xf32>
    %70 = vector.multi_reduction <add>, %69, %cst_30 [0] : vector<256x1xf32> to vector<1xf32>
    %71 = vector.shape_cast %70 : vector<1xf32> to vector<1x1xf32>
    %72 = vector.shape_cast %71 : vector<1x1xf32> to vector<1x1xf32>
    %73 = vector.broadcast %72 : vector<1x1xf32> to vector<8x128xf32>
    %c0_31 = arith.constant 0 : index
    %c0_32 = arith.constant 0 : index
    %74 = vector.load %arg5[%c0_31, %c0_32] : memref<8x128xf32, #tpu.memory_space<vmem>>, vector<8x128xf32>
    tpu.vector_store %arg5[%c0_31, %c0_32], %73 {strides = array<i32>} : memref<8x128xf32, #tpu.memory_space<vmem>>, vector<8x128xf32>,
    return
  }
  func.func @transform_0(%arg0: i32) -> (i32, i32) {
    %c0_i32 = arith.constant 0 : i32
    %c0_i32_0 = arith.constant 0 : i32
    return %arg0, %c0_i32 : i32, i32
  }
  func.func @transform_1(%arg0: i32) -> (i32, i32) {
    %c0_i32 = arith.constant 0 : i32
    %c0_i32_0 = arith.constant 0 : i32
    return %arg0, %c0_i32 : i32, i32
  }
  func.func @transform_2(%arg0: i32) -> (i32, i32) {
    %c0_i32 = arith.constant 0 : i32
    %c0_i32_0 = arith.constant 0 : i32
    %c0_i32_1 = arith.constant 0 : i32
    return %c0_i32, %c0_i32_0 : i32, i32
  }
  func.func @transform_3(%arg0: i32) -> (i32, i32) {
    %c0_i32 = arith.constant 0 : i32
    %c0_i32_0 = arith.constant 0 : i32
    %c0_i32_1 = arith.constant 0 : i32
    return %c0_i32, %c0_i32_0 : i32, i32
  }
  func.func @transform_4(%arg0: i32) -> (i32, i32) {
    %c0_i32 = arith.constant 0 : i32
    %c0_i32_0 = arith.constant 0 : i32
    return %arg0, %c0_i32 : i32, i32
  }
}

</mosaic_0001>

<llo_original>
// kernel: vae_forward.1
$region0: #{vae_forward.1}
  #allocation0 [shape = 'u32[]', space=smem, size = 0x4, offset = 0x4, fixed_abs, tag = 'smem constant byte address 0x4 - core index']
  #allocation1 [shape = 'u32[144,128]{1,0:T(1,128)}', space=vmem, size = 0x12000, scoped, tag = 'internal scratch']
  %s0 = inlined_call_operand.vmem [shape: bf16[256,256], index: 0, kind: input, shape index: {}]
  %s1 = inlined_call_operand.vmem [shape: f32[256,128], index: 1, kind: input, shape index: {}]
  %s2 = inlined_call_operand.vmem [shape: bf16[640,256], index: 2, kind: input, shape index: {}]
  %s3 = inlined_call_operand.vmem [shape: f32[1,768], index: 3, kind: input, shape index: {}]
  %s4 = inlined_call_operand.vmem [shape: f32[8,128], index: 4, kind: output, shape index: {}]
  %s5 = sld [smem:[#allocation0]]
  $region26: #{vae_forward.1} parent=0
    _
  %s7 = ssub.s32 1, %s5
  %s8 = scalar_select 0, %s7, %s5
  // Predicated region
  $region2: #{vae_forward.1} parent=0 // pred_check
    _
  $region3: #{vae_forward.1} parent=0 // pred_check_branch
    %10 = sbr.rel (0) target = $region5
  $region4: #{vae_forward.1} parent=0 // pred_region
    _
  $region5: #{vae_forward.1} parent=0 // pred_fallthru
    _
  // Predicated region
  $region6: #{vae_forward.1} parent=0 // pred_check
    _
  $region7: #{vae_forward.1} parent=0 // pred_check_branch
    %12 = sbr.rel (0) target = $region9
  $region8: #{vae_forward.1} parent=0 // pred_region
    _
  $region9: #{vae_forward.1} parent=0 // pred_fallthru
    _
  // Predicated region
  $region10: #{vae_forward.1} parent=0 // pred_check
    _
  $region11: #{vae_forward.1} parent=0 // pred_check_branch
    %14 = sbr.rel (0) target = $region13
  $region12: #{vae_forward.1} parent=0 // pred_region
    _
  $region13: #{vae_forward.1} parent=0 // pred_fallthru
    _
  // Predicated region
  $region14: #{vae_forward.1} parent=0 // pred_check
    _
  $region15: #{vae_forward.1} parent=0 // pred_check_branch
    %16 = sbr.rel (0) target = $region17
  $region16: #{vae_forward.1} parent=0 // pred_region
    _
  $region17: #{vae_forward.1} parent=0 // pred_fallthru
    _
  %v20 = vld [vmem:[%s0] sm:$0xff]
  %v21 = vld [vmem:[%s0 + $0x8] sm:$0xff]
  %v22 = vld [vmem:[%s0 + $0x10] sm:$0xff]
  %v23 = vld [vmem:[%s0 + $0x18] sm:$0xff]
  %v24 = vld [vmem:[%s0 + $0x20] sm:$0xff]
  %v25 = vld [vmem:[%s0 + $0x28] sm:$0xff]
  %v26 = vld [vmem:[%s0 + $0x30] sm:$0xff]
  %v27 = vld [vmem:[%s0 + $0x38] sm:$0xff]
  %v28 = vld [vmem:[%s0 + $0x40] sm:$0xff]
  %v29 = vld [vmem:[%s0 + $0x48] sm:$0xff]
  %v30 = vld [vmem:[%s0 + $0x50] sm:$0xff]
  %v31 = vld [vmem:[%s0 + $0x58] sm:$0xff]
  %v32 = vld [vmem:[%s0 + $0x60] sm:$0xff]
  %v33 = vld [vmem:[%s0 + $0x68] sm:$0xff]
  %v34 = vld [vmem:[%s0 + $0x70] sm:$0xff]
  %v35 = vld [vmem:[%s0 + $0x78] sm:$0xff]
  %v36 = vld [vmem:[%s0 + $0x80] sm:$0xff]
  %v37 = vld [vmem:[%s0 + $0x88] sm:$0xff]
  %v38 = vld [vmem:[%s0 + $0x90] sm:$0xff]
  %v39 = vld [vmem:[%s0 + $0x98] sm:$0xff]
  %v40 = vld [vmem:[%s0 + $0xa0] sm:$0xff]
  %v41 = vld [vmem:[%s0 + $0xa8] sm:$0xff]
  %v42 = vld [vmem:[%s0 + $0xb0] sm:$0xff]
  %v43 = vld [vmem:[%s0 + $0xb8] sm:$0xff]
  %v44 = vld [vmem:[%s0 + $0xc0] sm:$0xff]
  %v45 = vld [vmem:[%s0 + $0xc8] sm:$0xff]
  %v46 = vld [vmem:[%s0 + $0xd0] sm:$0xff]
  %v47 = vld [vmem:[%s0 + $0xd8] sm:$0xff]
  %v48 = vld [vmem:[%s0 + $0xe0] sm:$0xff]
  %v49 = vld [vmem:[%s0 + $0xe8] sm:$0xff]
  %v50 = vld [vmem:[%s0 + $0xf0] sm:$0xff]
  %v51 = vld [vmem:[%s0 + $0xf8] sm:$0xff]
  %v52 = vld [vmem:[%s1] sm:$0xff]
  %v53 = vld [vmem:[%s1 + $0x8] sm:$0xff]
  %v54 = vld [vmem:[%s1 + $0x10] sm:$0xff]
  %v55 = vld [vmem:[%s1 + $0x18] sm:$0xff]
  %v56 = vld [vmem:[%s1 + $0x20] sm:$0xff]
  %v57 = vld [vmem:[%s1 + $0x28] sm:$0xff]
  %v58 = vld [vmem:[%s1 + $0x30] sm:$0xff]
  %v59 = vld [vmem:[%s1 + $0x38] sm:$0xff]
  %v60 = vld [vmem:[%s1 + $0x40] sm:$0xff]
  %v61 = vld [vmem:[%s1 + $0x48] sm:$0xff]
  %v62 = vld [vmem:[%s1 + $0x50] sm:$0xff]
  %v63 = vld [vmem:[%s1 + $0x58] sm:$0xff]
  %v64 = vld [vmem:[%s1 + $0x60] sm:$0xff]
  %v65 = vld [vmem:[%s1 + $0x68] sm:$0xff]
  %v66 = vld [vmem:[%s1 + $0x70] sm:$0xff]
  %v67 = vld [vmem:[%s1 + $0x78] sm:$0xff]
  %v68 = vld [vmem:[%s1 + $0x80] sm:$0xff]
  %v69 = vld [vmem:[%s1 + $0x88] sm:$0xff]
  %v70 = vld [vmem:[%s1 + $0x90] sm:$0xff]
  %v71 = vld [vmem:[%s1 + $0x98] sm:$0xff]
  %v72 = vld [vmem:[%s1 + $0xa0] sm:$0xff]
  %v73 = vld [vmem:[%s1 + $0xa8] sm:$0xff]
  %v74 = vld [vmem:[%s1 + $0xb0] sm:$0xff]
  %v75 = vld [vmem:[%s1 + $0xb8] sm:$0xff]
  %v76 = vld [vmem:[%s1 + $0xc0] sm:$0xff]
  %v77 = vld [vmem:[%s1 + $0xc8] sm:$0xff]
  %v78 = vld [vmem:[%s1 + $0xd0] sm:$0xff]
  %v79 = vld [vmem:[%s1 + $0xd8] sm:$0xff]
  %v80 = vld [vmem:[%s1 + $0xe0] sm:$0xff]
  %v81 = vld [vmem:[%s1 + $0xe8] sm:$0xff]
  %v82 = vld [vmem:[%s1 + $0xf0] sm:$0xff]
  %v83 = vld [vmem:[%s1 + $0xf8] sm:$0xff]
  %v84 = vld [vmem:[%s2] sm:$0xf]
  %v85 = vld [vmem:[%s2 + $0x8] sm:$0xf]
  %v86 = vld [vmem:[%s2 + $0x10] sm:$0xf]
  %v87 = vld [vmem:[%s2 + $0x18] sm:$0xf]
  %v88 = vld [vmem:[%s2 + $0x20] sm:$0xf]
  %v89 = vld [vmem:[%s2 + $0x28] sm:$0xf]
  %v90 = vld [vmem:[%s2 + $0x30] sm:$0xf]
  %v91 = vld [vmem:[%s2 + $0x38] sm:$0xf]
  %v92 = vld [vmem:[%s2 + $0x40] sm:$0xf]
  %v93 = vld [vmem:[%s2 + $0x48] sm:$0xf]
  %v94 = vld [vmem:[%s2 + $0x50] sm:$0xf]
  %v95 = vld [vmem:[%s2 + $0x58] sm:$0xf]
  %v96 = vld [vmem:[%s2 + $0x60] sm:$0xf]
  %v97 = vld [vmem:[%s2 + $0x68] sm:$0xf]
  %v98 = vld [vmem:[%s2 + $0x70] sm:$0xf]
  %v99 = vld [vmem:[%s2 + $0x78] sm:$0xf]
  %v100 = vld [vmem:[%s2 + $0x80] sm:$0xf]
  %v101 = vld [vmem:[%s2 + $0x88] sm:$0xf]
  %v102 = vld [vmem:[%s2 + $0x90] sm:$0xf]
  %v103 = vld [vmem:[%s2 + $0x98] sm:$0xf]
  %v104 = vld [vmem:[%s2 + $0xa0] sm:$0xf]
  %v105 = vld [vmem:[%s2 + $0xa8] sm:$0xf]
  %v106 = vld [vmem:[%s2 + $0xb0] sm:$0xf]
  %v107 = vld [vmem:[%s2 + $0xb8] sm:$0xf]
  %v108 = vld [vmem:[%s2 + $0xc0] sm:$0xf]
  %v109 = vld [vmem:[%s2 + $0xc8] sm:$0xf]
  %v110 = vld [vmem:[%s2 + $0xd0] sm:$0xf]
  %v111 = vld [vmem:[%s2 + $0xd8] sm:$0xf]
  %v112 = vld [vmem:[%s2 + $0xe0] sm:$0xf]
  %v113 = vld [vmem:[%s2 + $0xe8] sm:$0xf]
  %v114 = vld [vmem:[%s2 + $0xf0] sm:$0xf]
  %v115 = vld [vmem:[%s2 + $0xf8] sm:$0xf]
  %v116 = vld [vmem:[%s3] sm:$0x1]
  %v118 = vlaneseq
  %v119 = vshrl.u32 %v118, 7
  %v120 = vsub.s32 0, %v119
  %v121 = vrot.slane %v116, %v120
  %v155 = vunpack.c.l.b16 %v20
  %v156 = vunpack.c.h.b16 %v20
  %v157 = vunpack.c.l.b16 %v21
  %v158 = vunpack.c.h.b16 %v21
  %v159 = vunpack.c.l.b16 %v22
  %v160 = vunpack.c.h.b16 %v22
  %v161 = vunpack.c.l.b16 %v23
  %v162 = vunpack.c.h.b16 %v23
  %v163 = vunpack.c.l.b16 %v24
  %v164 = vunpack.c.h.b16 %v24
  %v165 = vunpack.c.l.b16 %v25
  %v166 = vunpack.c.h.b16 %v25
  %v167 = vunpack.c.l.b16 %v26
  %v168 = vunpack.c.h.b16 %v26
  %v169 = vunpack.c.l.b16 %v27
  %v170 = vunpack.c.h.b16 %v27
  %v171 = vunpack.c.l.b16 %v28
  %v172 = vunpack.c.h.b16 %v28
  %v173 = vunpack.c.l.b16 %v29
  %v174 = vunpack.c.h.b16 %v29
  %v175 = vunpack.c.l.b16 %v30
  %v176 = vunpack.c.h.b16 %v30
  %v177 = vunpack.c.l.b16 %v31
  %v178 = vunpack.c.h.b16 %v31
  %v179 = vunpack.c.l.b16 %v32
  %v180 = vunpack.c.h.b16 %v32
  %v181 = vunpack.c.l.b16 %v33
  %v182 = vunpack.c.h.b16 %v33
  %v183 = vunpack.c.l.b16 %v34
  %v184 = vunpack.c.h.b16 %v34
  %v185 = vunpack.c.l.b16 %v35
  %v186 = vunpack.c.h.b16 %v35
  %v187 = vunpack.c.l.b16 %v36
  %v188 = vunpack.c.h.b16 %v36
  %v189 = vunpack.c.l.b16 %v37
  %v190 = vunpack.c.h.b16 %v37
  %v191 = vunpack.c.l.b16 %v38
  %v192 = vunpack.c.h.b16 %v38
  %v193 = vunpack.c.l.b16 %v39
  %v194 = vunpack.c.h.b16 %v39
  %v195 = vunpack.c.l.b16 %v40
  %v196 = vunpack.c.h.b16 %v40
  %v197 = vunpack.c.l.b16 %v41
  %v198 = vunpack.c.h.b16 %v41
  %v199 = vunpack.c.l.b16 %v42
  %v200 = vunpack.c.h.b16 %v42
  %v201 = vunpack.c.l.b16 %v43
  %v202 = vunpack.c.h.b16 %v43
  %v203 = vunpack.c.l.b16 %v44
  %v204 = vunpack.c.h.b16 %v44
  %v205 = vunpack.c.l.b16 %v45
  %v206 = vunpack.c.h.b16 %v45
  %v207 = vunpack.c.l.b16 %v46
  %v208 = vunpack.c.h.b16 %v46
  %v209 = vunpack.c.l.b16 %v47
  %v210 = vunpack.c.h.b16 %v47
  %v211 = vunpack.c.l.b16 %v48
  %v212 = vunpack.c.h.b16 %v48
  %v213 = vunpack.c.l.b16 %v49
  %v214 = vunpack.c.h.b16 %v49
  %v215 = vunpack.c.l.b16 %v50
  %v216 = vunpack.c.h.b16 %v50
  %v217 = vunpack.c.l.b16 %v51
  %v218 = vunpack.c.h.b16 %v51
  %v219 = vpack.c.b16 %v157, %v155
  %v220 = vpack.c.b16 %v158, %v156
  %v221 = vpack.c.b16 %v161, %v159
  %v222 = vpack.c.b16 %v162, %v160
  %v223 = vpack.c.b16 %v165, %v163
  %v224 = vpack.c.b16 %v166, %v164
  %v225 = vpack.c.b16 %v169, %v167
  %v226 = vpack.c.b16 %v170, %v168
  %v227 = vpack.c.b16 %v173, %v171
  %v228 = vpack.c.b16 %v174, %v172
  %v229 = vpack.c.b16 %v177, %v175
  %v230 = vpack.c.b16 %v178, %v176
  %v231 = vpack.c.b16 %v181, %v179
  %v232 = vpack.c.b16 %v182, %v180
  %v233 = vpack.c.b16 %v185, %v183
  %v234 = vpack.c.b16 %v186, %v184
  %v235 = vpack.c.b16 %v189, %v187
  %v236 = vpack.c.b16 %v190, %v188
  %v237 = vpack.c.b16 %v193, %v191
  %v238 = vpack.c.b16 %v194, %v192
  %v239 = vpack.c.b16 %v197, %v195
  %v240 = vpack.c.b16 %v198, %v196
  %v241 = vpack.c.b16 %v201, %v199
  %v242 = vpack.c.b16 %v202, %v200
  %v243 = vpack.c.b16 %v205, %v203
  %v244 = vpack.c.b16 %v206, %v204
  %v245 = vpack.c.b16 %v209, %v207
  %v246 = vpack.c.b16 %v210, %v208
  %v247 = vpack.c.b16 %v213, %v211
  %v248 = vpack.c.b16 %v214, %v212
  %v249 = vpack.c.b16 %v217, %v215
  %v250 = vpack.c.b16 %v218, %v216
  %v315 = vunpack.c.l.b16 %v84
  %v316 = vunpack.c.l.b16 %v85
  %v317 = vunpack.c.l.b16 %v86
  %v318 = vunpack.c.l.b16 %v87
  %v319 = vunpack.c.l.b16 %v88
  %v320 = vunpack.c.l.b16 %v89
  %v321 = vunpack.c.l.b16 %v90
  %v322 = vunpack.c.l.b16 %v91
  %v323 = vunpack.c.l.b16 %v92
  %v324 = vunpack.c.l.b16 %v93
  %v325 = vunpack.c.l.b16 %v94
  %v326 = vunpack.c.l.b16 %v95
  %v327 = vunpack.c.l.b16 %v96
  %v328 = vunpack.c.l.b16 %v97
  %v329 = vunpack.c.l.b16 %v98
  %v330 = vunpack.c.l.b16 %v99
  %v331 = vunpack.c.l.b16 %v100
  %v332 = vunpack.c.l.b16 %v101
  %v333 = vunpack.c.l.b16 %v102
  %v334 = vunpack.c.l.b16 %v103
  %v335 = vunpack.c.l.b16 %v104
  %v336 = vunpack.c.l.b16 %v105
  %v337 = vunpack.c.l.b16 %v106
  %v338 = vunpack.c.l.b16 %v107
  %v339 = vunpack.c.l.b16 %v108
  %v340 = vunpack.c.l.b16 %v109
  %v341 = vunpack.c.l.b16 %v110
  %v342 = vunpack.c.l.b16 %v111
  %v343 = vunpack.c.l.b16 %v112
  %v344 = vunpack.c.l.b16 %v113
  %v345 = vunpack.c.l.b16 %v114
  %v346 = vunpack.c.l.b16 %v115
  %v347 = vpack.c.b16 %v316, %v315
  %v348 = vpack.c.b16 %v318, %v317
  %v349 = vpack.c.b16 %v320, %v319
  %v350 = vpack.c.b16 %v322, %v321
  %v351 = vpack.c.b16 %v324, %v323
  %v352 = vpack.c.b16 %v326, %v325
  %v353 = vpack.c.b16 %v328, %v327
  %v354 = vpack.c.b16 %v330, %v329
  %v355 = vpack.c.b16 %v332, %v331
  %v356 = vpack.c.b16 %v334, %v333
  %v357 = vpack.c.b16 %v336, %v335
  %v358 = vpack.c.b16 %v338, %v337
  %v359 = vpack.c.b16 %v340, %v339
  %v360 = vpack.c.b16 %v342, %v341
  %v361 = vpack.c.b16 %v344, %v343
  %v362 = vpack.c.b16 %v346, %v345
  %379 = vmatprep.subr.bf16.mxu0 0
  %380 = vmatpush1.bf16.msra.mxu0 %v347
  %381 = vmatprep.subr.bf16.mxu0 0
  %382 = vmatpush1.bf16.msra.mxu0 %v348
  %383 = vmatprep.subr.bf16.mxu0 0
  %384 = vmatpush1.bf16.msra.mxu0 %v349
  %385 = vmatprep.subr.bf16.mxu0 0
  %386 = vmatpush1.bf16.msra.mxu0 %v350
  %387 = vmatprep.subr.bf16.mxu0 0
  %388 = vmatpush1.bf16.msra.mxu0 %v351
  %389 = vmatprep.subr.bf16.mxu0 0
  %390 = vmatpush1.bf16.msra.mxu0 %v352
  %391 = vmatprep.subr.bf16.mxu0 0
  %392 = vmatpush1.bf16.msra.mxu0 %v353
  %393 = vmatprep.subr.bf16.mxu0 0
  %394 = vmatpush1.bf16.msra.mxu0 %v354
  %395 = vmatprep.subr.bf16.mxu0 0
  %396 = vmatpush1.bf16.msra.mxu0 %v355
  %397 = vmatprep.subr.bf16.mxu0 0
  %398 = vmatpush1.bf16.msra.mxu0 %v356
  %399 = vmatprep.subr.bf16.mxu0 0
  %400 = vmatpush1.bf16.msra.mxu0 %v357
  %401 = vmatprep.subr.bf16.mxu0 0
  %402 = vmatpush1.bf16.msra.mxu0 %v358
  %403 = vmatprep.subr.bf16.mxu0 0
  %404 = vmatpush1.bf16.msra.mxu0 %v359
  %405 = vmatprep.subr.bf16.mxu0 0
  %406 = vmatpush1.bf16.msra.mxu0 %v360
  %407 = vmatprep.subr.bf16.mxu0 0
  %408 = vmatpush1.bf16.msra.mxu0 %v361
  %409 = vmatprep.subr.bf16.mxu0 0
  %410 = vmatpush1.bf16.msra.mxu0 %v362
  %411 = vmatprep.mubr.bf16.mxu0 %v220
  %412 = vmatmul.mubr.bf16.gmra.mrb[0].mxu0 %v219
  %v413 = vpop.f32.mrb[0].mxu0
  %v414 = vadd.f32 %v121, %v413
  %v415 = vpop.f32.mrb[0].mxu0
  %v416 = vpop.f32.mrb[0].mxu0
  %v417 = vadd.f32 %v121, %v416
  %v418 = vpop.f32.mrb[0].mxu0
  %419 = vmatprep.mubr.bf16.mxu0 %v222
  %420 = vmatmul.mubr.bf16.gmra.mrb[0].mxu0 %v221
  %v421 = vpop.f32.mrb[0].mxu0
  %v422 = vadd.f32 %v121, %v421
  %v423 = vpop.f32.mrb[0].mxu0
  %v424 = vpop.f32.mrb[0].mxu0
  %v425 = vadd.f32 %v121, %v424
  %v426 = vpop.f32.mrb[0].mxu0
  %427 = vmatprep.mubr.bf16.mxu0 %v224
  %428 = vmatmul.mubr.bf16.gmra.mrb[0].mxu0 %v223
  %v429 = vpop.f32.mrb[0].mxu0
  %v430 = vadd.f32 %v121, %v429
  %v431 = vpop.f32.mrb[0].mxu0
  %v432 = vpop.f32.mrb[0].mxu0
  %v433 = vadd.f32 %v121, %v432
  %v434 = vpop.f32.mrb[0].mxu0
  %435 = vmatprep.mubr.bf16.mxu0 %v226
  %436 = vmatmul.mubr.bf16.gmra.mrb[0].mxu0 %v225
  %v437 = vpop.f32.mrb[0].mxu0
  %v438 = vadd.f32 %v121, %v437
  %v439 = vpop.f32.mrb[0].mxu0
  %v440 = vpop.f32.mrb[0].mxu0
  %v441 = vadd.f32 %v121, %v440
  %v442 = vpop.f32.mrb[0].mxu0
  %443 = vmatprep.mubr.bf16.mxu0 %v228
  %444 = vmatmul.mubr.bf16.gmra.mrb[0].mxu0 %v227
  %v445 = vpop.f32.mrb[0].mxu0
  %v446 = vadd.f32 %v121, %v445
  %v447 = vpop.f32.mrb[0].mxu0
  %v448 = vpop.f32.mrb[0].mxu0
  %v449 = vadd.f32 %v121, %v448
  %v450 = vpop.f32.mrb[0].mxu0
  %451 = vmatprep.mubr.bf16.mxu0 %v230
  %452 = vmatmul.mubr.bf16.gmra.mrb[0].mxu0 %v229
  %v453 = vpop.f32.mrb[0].mxu0
  %v454 = vadd.f32 %v121, %v453
  %v455 = vpop.f32.mrb[0].mxu0
  %v456 = vpop.f32.mrb[0].mxu0
  %v457 = vadd.f32 %v121, %v456
  %v458 = vpop.f32.mrb[0].mxu0
  %459 = vmatprep.mubr.bf16.mxu0 %v232
  %460 = vmatmul.mubr.bf16.gmra.mrb[0].mxu0 %v231
  %v461 = vpop.f32.mrb[0].mxu0
  %v462 = vadd.f32 %v121, %v461
  %v463 = vpop.f32.mrb[0].mxu0
  %v464 = vpop.f32.mrb[0].mxu0
  %v465 = vadd.f32 %v121, %v464
  %v466 = vpop.f32.mrb[0].mxu0
  %467 = vmatprep.mubr.bf16.mxu0 %v234
  %468 = vmatmul.mubr.bf16.gmra.mrb[0].mxu0 %v233
  %v469 = vpop.f32.mrb[0].mxu0
  %v470 = vadd.f32 %v121, %v469
  %v471 = vpop.f32.mrb[0].mxu0
  %v472 = vpop.f32.mrb[0].mxu0
  %v473 = vadd.f32 %v121, %v472
  %v474 = vpop.f32.mrb[0].mxu0
  %475 = vmatprep.mubr.bf16.mxu0 %v236
  %476 = vmatmul.mubr.bf16.gmra.mrb[0].mxu0 %v235
  %v477 = vpop.f32.mrb[0].mxu0
  %v478 = vadd.f32 %v121, %v477
  %v479 = vpop.f32.mrb[0].mxu0
  %v480 = vpop.f32.mrb[0].mxu0
  %v481 = vadd.f32 %v121, %v480
  %v482 = vpop.f32.mrb[0].mxu0
  %483 = vmatprep.mubr.bf16.mxu0 %v238
  %484 = vmatmul.mubr.bf16.gmra.mrb[0].mxu0 %v237
  %v485 = vpop.f32.mrb[0].mxu0
  %v486 = vadd.f32 %v121, %v485
  %v487 = vpop.f32.mrb[0].mxu0
  %v488 = vpop.f32.mrb[0].mxu0
  %v489 = vadd.f32 %v121, %v488
  %v490 = vpop.f32.mrb[0].mxu0
  %491 = vmatprep.mubr.bf16.mxu0 %v240
  %492 = vmatmul.mubr.bf16.gmra.mrb[0].mxu0 %v239
  %v493 = vpop.f32.mrb[0].mxu0
  %v494 = vadd.f32 %v121, %v493
  %v495 = vpop.f32.mrb[0].mxu0
  %v496 = vpop.f32.mrb[0].mxu0
  %v497 = vadd.f32 %v121, %v496
  %v498 = vpop.f32.mrb[0].mxu0
  %499 = vmatprep.mubr.bf16.mxu0 %v242
  %500 = vmatmul.mubr.bf16.gmra.mrb[0].mxu0 %v241
  %v501 = vpop.f32.mrb[0].mxu0
  %v502 = vadd.f32 %v121, %v501
  %v503 = vpop.f32.mrb[0].mxu0
  %v504 = vpop.f32.mrb[0].mxu0
  %v505 = vadd.f32 %v121, %v504
  %v506 = vpop.f32.mrb[0].mxu0
  %507 = vmatprep.mubr.bf16.mxu0 %v244
  %508 = vmatmul.mubr.bf16.gmra.mrb[0].mxu0 %v243
  %v509 = vpop.f32.mrb[0].mxu0
  %v510 = vadd.f32 %v121, %v509
  %v511 = vpop.f32.mrb[0].mxu0
  %v512 = vpop.f32.mrb[0].mxu0
  %v513 = vadd.f32 %v121, %v512
  %v514 = vpop.f32.mrb[0].mxu0
  %515 = vmatprep.mubr.bf16.mxu0 %v246
  %516 = vmatmul.mubr.bf16.gmra.mrb[0].mxu0 %v245
  %v517 = vpop.f32.mrb[0].mxu0
  %v518 = vadd.f32 %v121, %v517
  %v519 = vpop.f32.mrb[0].mxu0
  %v520 = vpop.f32.mrb[0].mxu0
  %v521 = vadd.f32 %v121, %v520
  %v522 = vpop.f32.mrb[0].mxu0
  %523 = vmatprep.mubr.bf16.mxu0 %v248
  %524 = vmatmul.mubr.bf16.gmra.mrb[0].mxu0 %v247
  %v525 = vpop.f32.mrb[0].mxu0
  %v526 = vadd.f32 %v121, %v525
  %v527 = vpop.f32.mrb[0].mxu0
  %v528 = vpop.f32.mrb[0].mxu0
  %v529 = vadd.f32 %v121, %v528
  %v530 = vpop.f32.mrb[0].mxu0
  %531 = vmatprep.mubr.bf16.mxu0 %v250
  %532 = vmatmul.mubr.bf16.gmra.mrb[0].mxu0 %v249
  %v533 = vpop.f32.mrb[0].mxu0
  %v534 = vadd.f32 %v121, %v533
  %v535 = vpop.f32.mrb[0].mxu0
  %v536 = vpop.f32.mrb[0].mxu0
  %v537 = vadd.f32 %v121, %v536
  %v538 = vpop.f32.mrb[0].mxu0
  %539 = vdwg.mxu0
  %v540 = vmax.f32 %v414, 0.0
  %v541 = vmax.f32 %v417, 0.0
  %v542 = vmax.f32 %v422, 0.0
  %v543 = vmax.f32 %v425, 0.0
  %v544 = vmax.f32 %v430, 0.0
  %v545 = vmax.f32 %v433, 0.0
  %v546 = vmax.f32 %v438, 0.0
  %v547 = vmax.f32 %v441, 0.0
  %v548 = vmax.f32 %v446, 0.0
  %v549 = vmax.f32 %v449, 0.0
  %v550 = vmax.f32 %v454, 0.0
  %v551 = vmax.f32 %v457, 0.0
  %v552 = vmax.f32 %v462, 0.0
  %v553 = vmax.f32 %v465, 0.0
  %v554 = vmax.f32 %v470, 0.0
  %v555 = vmax.f32 %v473, 0.0
  %v556 = vmax.f32 %v478, 0.0
  %v557 = vmax.f32 %v481, 0.0
  %v558 = vmax.f32 %v486, 0.0
  %v559 = vmax.f32 %v489, 0.0
  %v560 = vmax.f32 %v494, 0.0
  %v561 = vmax.f32 %v497, 0.0
  %v562 = vmax.f32 %v502, 0.0
  %v563 = vmax.f32 %v505, 0.0
  %v564 = vmax.f32 %v510, 0.0
  %v565 = vmax.f32 %v513, 0.0
  %v566 = vmax.f32 %v518, 0.0
  %v567 = vmax.f32 %v521, 0.0
  %v568 = vmax.f32 %v526, 0.0
  %v569 = vmax.f32 %v529, 0.0
  %v570 = vmax.f32 %v534, 0.0
  %v571 = vmax.f32 %v537, 0.0
  %v572 = vpack.c.bf16 %v541, %v540
  %v573 = vpack.c.bf16 %v543, %v542
  %v574 = vpack.c.bf16 %v545, %v544
  %v575 = vpack.c.bf16 %v547, %v546
  %v576 = vpack.c.bf16 %v549, %v548
  %v577 = vpack.c.bf16 %v551, %v550
  %v578 = vpack.c.bf16 %v553, %v552
  %v579 = vpack.c.bf16 %v555, %v554
  %v580 = vpack.c.bf16 %v557, %v556
  %v581 = vpack.c.bf16 %v559, %v558
  %v582 = vpack.c.bf16 %v561, %v560
  %v583 = vpack.c.bf16 %v563, %v562
  %v584 = vpack.c.bf16 %v565, %v564
  %v585 = vpack.c.bf16 %v567, %v566
  %v586 = vpack.c.bf16 %v569, %v568
  %v587 = vpack.c.bf16 %v571, %v570
  %v588 = vld [vmem:[%s2 + $0x100] sm:$0xff]
  %v589 = vld [vmem:[%s2 + $0x108] sm:$0xff]
  %v590 = vld [vmem:[%s2 + $0x110] sm:$0xff]
  %v591 = vld [vmem:[%s2 + $0x118] sm:$0xff]
  %v592 = vld [vmem:[%s2 + $0x120] sm:$0xff]
  %v593 = vld [vmem:[%s2 + $0x128] sm:$0xff]
  %v594 = vld [vmem:[%s2 + $0x130] sm:$0xff]
  %v595 = vld [vmem:[%s2 + $0x138] sm:$0xff]
  %v596 = vld [vmem:[%s2 + $0x140] sm:$0xff]
  %v597 = vld [vmem:[%s2 + $0x148] sm:$0xff]
  %v598 = vld [vmem:[%s2 + $0x150] sm:$0xff]
  %v599 = vld [vmem:[%s2 + $0x158] sm:$0xff]
  %v600 = vld [vmem:[%s2 + $0x160] sm:$0xff]
  %v601 = vld [vmem:[%s2 + $0x168] sm:$0xff]
  %v602 = vld [vmem:[%s2 + $0x170] sm:$0xff]
  %v603 = vld [vmem:[%s2 + $0x178] sm:$0xff]
  %v604 = vld [vmem:[%s3 + $0x1] sm:$0x3]
  %v606 = vlaneseq
  %v607 = vshrl.u32 %v606, 7
  %v608 = vsub.s32 0, %v607
  %v609 = vrot.slane %v604, %v608
  %v610 = vlaneseq
  %v611 = vshrl.u32 %v610, 7
  %v612 = vsub.s32 1, %v611
  %v613 = vrot.slane %v604, %v612
  %v632 = vunpack.c.l.b16 %v588
  %v633 = vunpack.c.h.b16 %v588
  %v634 = vunpack.c.l.b16 %v589
  %v635 = vunpack.c.h.b16 %v589
  %v636 = vunpack.c.l.b16 %v590
  %v637 = vunpack.c.h.b16 %v590
  %v638 = vunpack.c.l.b16 %v591
  %v639 = vunpack.c.h.b16 %v591
  %v640 = vunpack.c.l.b16 %v592
  %v641 = vunpack.c.h.b16 %v592
  %v642 = vunpack.c.l.b16 %v593
  %v643 = vunpack.c.h.b16 %v593
  %v644 = vunpack.c.l.b16 %v594
  %v645 = vunpack.c.h.b16 %v594
  %v646 = vunpack.c.l.b16 %v595
  %v647 = vunpack.c.h.b16 %v595
  %v648 = vunpack.c.l.b16 %v596
  %v649 = vunpack.c.h.b16 %v596
  %v650 = vunpack.c.l.b16 %v597
  %v651 = vunpack.c.h.b16 %v597
  %v652 = vunpack.c.l.b16 %v598
  %v653 = vunpack.c.h.b16 %v598
  %v654 = vunpack.c.l.b16 %v599
  %v655 = vunpack.c.h.b16 %v599
  %v656 = vunpack.c.l.b16 %v600
  %v657 = vunpack.c.h.b16 %v600
  %v658 = vunpack.c.l.b16 %v601
  %v659 = vunpack.c.h.b16 %v601
  %v660 = vunpack.c.l.b16 %v602
  %v661 = vunpack.c.h.b16 %v602
  %v662 = vunpack.c.l.b16 %v603
  %v663 = vunpack.c.h.b16 %v603
  %v664 = vpack.c.b16 %v634, %v632
  %v665 = vpack.c.b16 %v635, %v633
  %v666 = vpack.c.b16 %v638, %v636
  %v667 = vpack.c.b16 %v639, %v637
  %v668 = vpack.c.b16 %v642, %v640
  %v669 = vpack.c.b16 %v643, %v641
  %v670 = vpack.c.b16 %v646, %v644
  %v671 = vpack.c.b16 %v647, %v645
  %v672 = vpack.c.b16 %v650, %v648
  %v673 = vpack.c.b16 %v651, %v649
  %v674 = vpack.c.b16 %v654, %v652
  %v675 = vpack.c.b16 %v655, %v653
  %v676 = vpack.c.b16 %v658, %v656
  %v677 = vpack.c.b16 %v659, %v657
  %v678 = vpack.c.b16 %v662, %v660
  %v679 = vpack.c.b16 %v663, %v661
  %696 = vmatprep.subr.bf16.mxu0 %v665
  %697 = vmatpush1.bf16.msra.mxu0 %v664
  %698 = vmatprep.subr.bf16.mxu0 %v667
  %699 = vmatpush1.bf16.msra.mxu0 %v666
  %700 = vmatprep.subr.bf16.mxu0 %v669
  %701 = vmatpush1.bf16.msra.mxu0 %v668
  %702 = vmatprep.subr.bf16.mxu0 %v671
  %703 = vmatpush1.bf16.msra.mxu0 %v670
  %704 = vmatprep.subr.bf16.mxu0 %v673
  %705 = vmatpush1.bf16.msra.mxu0 %v672
  %706 = vmatprep.subr.bf16.mxu0 %v675
  %707 = vmatpush1.bf16.msra.mxu0 %v674
  %708 = vmatprep.subr.bf16.mxu0 %v677
  %709 = vmatpush1.bf16.msra.mxu0 %v676
  %710 = vmatprep.subr.bf16.mxu0 %v679
  %711 = vmatpush1.bf16.msra.mxu0 %v678
  %712 = vmatprep.subr.bf16.mxu0 0
  %713 = vmatpush1.bf16.msra.mxu0 0
  %714 = vmatprep.subr.bf16.mxu0 0
  %715 = vmatpush1.bf16.msra.mxu0 0
  %716 = vmatprep.subr.bf16.mxu0 0
  %717 = vmatpush1.bf16.msra.mxu0 0
  %718 = vmatprep.subr.bf16.mxu0 0
  %719 = vmatpush1.bf16.msra.mxu0 0
  %720 = vmatprep.subr.bf16.mxu0 0
  %721 = vmatpush1.bf16.msra.mxu0 0
  %722 = vmatprep.subr.bf16.mxu0 0
  %723 = vmatpush1.bf16.msra.mxu0 0
  %724 = vmatprep.subr.bf16.mxu0 0
  %725 = vmatpush1.bf16.msra.mxu0 0
  %726 = vmatprep.subr.bf16.mxu0 0
  %727 = vmatpush1.bf16.msra.mxu0 0
  %728 = vmatprep.mubr.bf16.mxu0 0
  %729 = vmatmul.mubr.bf16.gmra.mrb[0].mxu0 %v572
  %v730 = vpop.f32.mrb[0].mxu0
  %v731 = vadd.f32 %v609, %v730
  %v732 = vpop.f32.mrb[0].mxu0
  %v733 = vadd.f32 %v613, %v732
  %v734 = vpop.f32.mrb[0].mxu0
  %v735 = vadd.f32 %v609, %v734
  %v736 = vpop.f32.mrb[0].mxu0
  %v737 = vadd.f32 %v613, %v736
  %738 = vmatprep.mubr.bf16.mxu0 0
  %739 = vmatmul.mubr.bf16.gmra.mrb[0].mxu0 %v573
  %v740 = vpop.f32.mrb[0].mxu0
  %v741 = vadd.f32 %v609, %v740
  %v742 = vpop.f32.mrb[0].mxu0
  %v743 = vadd.f32 %v613, %v742
  %v744 = vpop.f32.mrb[0].mxu0
  %v745 = vadd.f32 %v609, %v744
  %v746 = vpop.f32.mrb[0].mxu0
  %v747 = vadd.f32 %v613, %v746
  %748 = vmatprep.mubr.bf16.mxu0 0
  %749 = vmatmul.mubr.bf16.gmra.mrb[0].mxu0 %v574
  %v750 = vpop.f32.mrb[0].mxu0
  %v751 = vadd.f32 %v609, %v750
  %v752 = vpop.f32.mrb[0].mxu0
  %v753 = vadd.f32 %v613, %v752
  %v754 = vpop.f32.mrb[0].mxu0
  %v755 = vadd.f32 %v609, %v754
  %v756 = vpop.f32.mrb[0].mxu0
  %v757 = vadd.f32 %v613, %v756
  %758 = vmatprep.mubr.bf16.mxu0 0
  %759 = vmatmul.mubr.bf16.gmra.mrb[0].mxu0 %v575
  %v760 = vpop.f32.mrb[0].mxu0
  %v761 = vadd.f32 %v609, %v760
  %v762 = vpop.f32.mrb[0].mxu0
  %v763 = vadd.f32 %v613, %v762
  %v764 = vpop.f32.mrb[0].mxu0
  %v765 = vadd.f32 %v609, %v764
  %v766 = vpop.f32.mrb[0].mxu0
  %v767 = vadd.f32 %v613, %v766
  %768 = vmatprep.mubr.bf16.mxu0 0
  %769 = vmatmul.mubr.bf16.gmra.mrb[0].mxu0 %v576
  %v770 = vpop.f32.mrb[0].mxu0
  %v771 = vadd.f32 %v609, %v770
  %v772 = vpop.f32.mrb[0].mxu0
  %v773 = vadd.f32 %v613, %v772
  %v774 = vpop.f32.mrb[0].mxu0
  %v775 = vadd.f32 %v609, %v774
  %v776 = vpop.f32.mrb[0].mxu0
  %v777 = vadd.f32 %v613, %v776
  %778 = vmatprep.mubr.bf16.mxu0 0
  %779 = vmatmul.mubr.bf16.gmra.mrb[0].mxu0 %v577
  %v780 = vpop.f32.mrb[0].mxu0
  %v781 = vadd.f32 %v609, %v780
  %v782 = vpop.f32.mrb[0].mxu0
  %v783 = vadd.f32 %v613, %v782
  %v784 = vpop.f32.mrb[0].mxu0
  %v785 = vadd.f32 %v609, %v784
  %v786 = vpop.f32.mrb[0].mxu0
  %v787 = vadd.f32 %v613, %v786
  %788 = vmatprep.mubr.bf16.mxu0 0
  %789 = vmatmul.mubr.bf16.gmra.mrb[0].mxu0 %v578
  %v790 = vpop.f32.mrb[0].mxu0
  %v791 = vadd.f32 %v609, %v790
  %v792 = vpop.f32.mrb[0].mxu0
  %v793 = vadd.f32 %v613, %v792
  %v794 = vpop.f32.mrb[0].mxu0
  %v795 = vadd.f32 %v609, %v794
  %v796 = vpop.f32.mrb[0].mxu0
  %v797 = vadd.f32 %v613, %v796
  %798 = vmatprep.mubr.bf16.mxu0 0
  %799 = vmatmul.mubr.bf16.gmra.mrb[0].mxu0 %v579
  %v800 = vpop.f32.mrb[0].mxu0
  %v801 = vadd.f32 %v609, %v800
  %v802 = vpop.f32.mrb[0].mxu0
  %v803 = vadd.f32 %v613, %v802
  %v804 = vpop.f32.mrb[0].mxu0
  %v805 = vadd.f32 %v609, %v804
  %v806 = vpop.f32.mrb[0].mxu0
  %v807 = vadd.f32 %v613, %v806
  %808 = vmatprep.mubr.bf16.mxu0 0
  %809 = vmatmul.mubr.bf16.gmra.mrb[0].mxu0 %v580
  %v810 = vpop.f32.mrb[0].mxu0
  %v811 = vadd.f32 %v609, %v810
  %v812 = vpop.f32.mrb[0].mxu0
  %v813 = vadd.f32 %v613, %v812
  %v814 = vpop.f32.mrb[0].mxu0
  %v815 = vadd.f32 %v609, %v814
  %v816 = vpop.f32.mrb[0].mxu0
  %v817 = vadd.f32 %v613, %v816
  %818 = vmatprep.mubr.bf16.mxu0 0
  %819 = vmatmul.mubr.bf16.gmra.mrb[0].mxu0 %v581
  %v820 = vpop.f32.mrb[0].mxu0
  %v821 = vadd.f32 %v609, %v820
  %v822 = vpop.f32.mrb[0].mxu0
  %v823 = vadd.f32 %v613, %v822
  %v824 = vpop.f32.mrb[0].mxu0
  %v825 = vadd.f32 %v609, %v824
  %v826 = vpop.f32.mrb[0].mxu0
  %v827 = vadd.f32 %v613, %v826
  %828 = vmatprep.mubr.bf16.mxu0 0
  %829 = vmatmul.mubr.bf16.gmra.mrb[0].mxu0 %v582
  %v830 = vpop.f32.mrb[0].mxu0
  %v831 = vadd.f32 %v609, %v830
  %v832 = vpop.f32.mrb[0].mxu0
  %v833 = vadd.f32 %v613, %v832
  %v834 = vpop.f32.mrb[0].mxu0
  %v835 = vadd.f32 %v609, %v834
  %v836 = vpop.f32.mrb[0].mxu0
  %v837 = vadd.f32 %v613, %v836
  %838 = vmatprep.mubr.bf16.mxu0 0
  %839 = vmatmul.mubr.bf16.gmra.mrb[0].mxu0 %v583
  %v840 = vpop.f32.mrb[0].mxu0
  %v841 = vadd.f32 %v609, %v840
  %v842 = vpop.f32.mrb[0].mxu0
  %v843 = vadd.f32 %v613, %v842
  %v844 = vpop.f32.mrb[0].mxu0
  %v845 = vadd.f32 %v609, %v844
  %v846 = vpop.f32.mrb[0].mxu0
  %v847 = vadd.f32 %v613, %v846
  %848 = vmatprep.mubr.bf16.mxu0 0
  %849 = vmatmul.mubr.bf16.gmra.mrb[0].mxu0 %v584
  %v850 = vpop.f32.mrb[0].mxu0
  %v851 = vadd.f32 %v609, %v850
  %v852 = vpop.f32.mrb[0].mxu0
  %v853 = vadd.f32 %v613, %v852
  %v854 = vpop.f32.mrb[0].mxu0
  %v855 = vadd.f32 %v609, %v854
  %v856 = vpop.f32.mrb[0].mxu0
  %v857 = vadd.f32 %v613, %v856
  %858 = vmatprep.mubr.bf16.mxu0 0
  %859 = vmatmul.mubr.bf16.gmra.mrb[0].mxu0 %v585
  %v860 = vpop.f32.mrb[0].mxu0
  %v861 = vadd.f32 %v609, %v860
  %v862 = vpop.f32.mrb[0].mxu0
  %v863 = vadd.f32 %v613, %v862
  %v864 = vpop.f32.mrb[0].mxu0
  %v865 = vadd.f32 %v609, %v864
  %v866 = vpop.f32.mrb[0].mxu0
  %v867 = vadd.f32 %v613, %v866
  %868 = vmatprep.mubr.bf16.mxu0 0
  %869 = vmatmul.mubr.bf16.gmra.mrb[0].mxu0 %v586
  %v870 = vpop.f32.mrb[0].mxu0
  %v871 = vadd.f32 %v609, %v870
  %v872 = vpop.f32.mrb[0].mxu0
  %v873 = vadd.f32 %v613, %v872
  %v874 = vpop.f32.mrb[0].mxu0
  %v875 = vadd.f32 %v609, %v874
  %v876 = vpop.f32.mrb[0].mxu0
  %v877 = vadd.f32 %v613, %v876
  %878 = vmatprep.mubr.bf16.mxu0 0
  %879 = vmatmul.mubr.bf16.gmra.mrb[0].mxu0 %v587
  %v880 = vpop.f32.mrb[0].mxu0
  %v881 = vadd.f32 %v609, %v880
  %v882 = vpop.f32.mrb[0].mxu0
  %v883 = vadd.f32 %v613, %v882
  %v884 = vpop.f32.mrb[0].mxu0
  %v885 = vadd.f32 %v609, %v884
  %v886 = vpop.f32.mrb[0].mxu0
  %v887 = vadd.f32 %v613, %v886
  %888 = vdwg.mxu0
  %v889 = vmul.f32 %v733, 1.442695
  %v890 = vpow.pop %v889
  %v891 = vmul.f32 %v737, 1.442695
  %v892 = vpow.pop %v891
  %v893 = vmul.f32 %v743, 1.442695
  %v894 = vpow.pop %v893
  %v895 = vmul.f32 %v747, 1.442695
  %v896 = vpow.pop %v895
  %v897 = vmul.f32 %v753, 1.442695
  %v898 = vpow.pop %v897
  %v899 = vmul.f32 %v757, 1.442695
  %v900 = vpow.pop %v899
  %v901 = vmul.f32 %v763, 1.442695
  %v902 = vpow.pop %v901
  %v903 = vmul.f32 %v767, 1.442695
  %v904 = vpow.pop %v903
  %v905 = vmul.f32 %v773, 1.442695
  %v906 = vpow.pop %v905
  %v907 = vmul.f32 %v777, 1.442695
  %v908 = vpow.pop %v907
  %v909 = vmul.f32 %v783, 1.442695
  %v910 = vpow.pop %v909
  %v911 = vmul.f32 %v787, 1.442695
  %v912 = vpow.pop %v911
  %v913 = vmul.f32 %v793, 1.442695
  %v914 = vpow.pop %v913
  %v915 = vmul.f32 %v797, 1.442695
  %v916 = vpow.pop %v915
  %v917 = vmul.f32 %v803, 1.442695
  %v918 = vpow.pop %v917
  %v919 = vmul.f32 %v807, 1.442695
  %v920 = vpow.pop %v919
  %v921 = vmul.f32 %v813, 1.442695
  %v922 = vpow.pop %v921
  %v923 = vmul.f32 %v817, 1.442695
  %v924 = vpow.pop %v923
  %v925 = vmul.f32 %v823, 1.442695
  %v926 = vpow.pop %v925
  %v927 = vmul.f32 %v827, 1.442695
  %v928 = vpow.pop %v927
  %v929 = vmul.f32 %v833, 1.442695
  %v930 = vpow.pop %v929
  %v931 = vmul.f32 %v837, 1.442695
  %v932 = vpow.pop %v931
  %v933 = vmul.f32 %v843, 1.442695
  %v934 = vpow.pop %v933
  %v935 = vmul.f32 %v847, 1.442695
  %v936 = vpow.pop %v935
  %v937 = vmul.f32 %v853, 1.442695
  %v938 = vpow.pop %v937
  %v939 = vmul.f32 %v857, 1.442695
  %v940 = vpow.pop %v939
  %v941 = vmul.f32 %v863, 1.442695
  %v942 = vpow.pop %v941
  %v943 = vmul.f32 %v867, 1.442695
  %v944 = vpow.pop %v943
  %v945 = vmul.f32 %v873, 1.442695
  %v946 = vpow.pop %v945
  %v947 = vmul.f32 %v877, 1.442695
  %v948 = vpow.pop %v947
  %v949 = vmul.f32 %v883, 1.442695
  %v950 = vpow.pop %v949
  %v951 = vmul.f32 %v887, 1.442695
  %v952 = vpow.pop %v951
  %v953 = vmul.f32 %v890, %v52
  %v954 = vmul.f32 %v892, %v53
  %v955 = vmul.f32 %v894, %v54
  %v956 = vmul.f32 %v896, %v55
  %v957 = vmul.f32 %v898, %v56
  %v958 = vmul.f32 %v900, %v57
  %v959 = vmul.f32 %v902, %v58
  %v960 = vmul.f32 %v904, %v59
  %v961 = vmul.f32 %v906, %v60
  %v962 = vmul.f32 %v908, %v61
  %v963 = vmul.f32 %v910, %v62
  %v964 = vmul.f32 %v912, %v63
  %v965 = vmul.f32 %v914, %v64
  %v966 = vmul.f32 %v916, %v65
  %v967 = vmul.f32 %v918, %v66
  %v968 = vmul.f32 %v920, %v67
  %v969 = vmul.f32 %v922, %v68
  %v970 = vmul.f32 %v924, %v69
  %v971 = vmul.f32 %v926, %v70
  %v972 = vmul.f32 %v928, %v71
  %v973 = vmul.f32 %v930, %v72
  %v974 = vmul.f32 %v932, %v73
  %v975 = vmul.f32 %v934, %v74
  %v976 = vmul.f32 %v936, %v75
  %v977 = vmul.f32 %v938, %v76
  %v978 = vmul.f32 %v940, %v77
  %v979 = vmul.f32 %v942, %v78
  %v980 = vmul.f32 %v944, %v79
  %v981 = vmul.f32 %v946, %v80
  %v982 = vmul.f32 %v948, %v81
  %v983 = vmul.f32 %v950, %v82
  %v984 = vmul.f32 %v952, %v83
  %v985 = vadd.f32 %v731, %v953
  %v986 = vadd.f32 %v735, %v954
  %v987 = vadd.f32 %v741, %v955
  %v988 = vadd.f32 %v745, %v956
  %v989 = vadd.f32 %v751, %v957
  %v990 = vadd.f32 %v755, %v958
  %v991 = vadd.f32 %v761, %v959
  %v992 = vadd.f32 %v765, %v960
  %v993 = vadd.f32 %v771, %v961
  %v994 = vadd.f32 %v775, %v962
  %v995 = vadd.f32 %v781, %v963
  %v996 = vadd.f32 %v785, %v964
  %v997 = vadd.f32 %v791, %v965
  %v998 = vadd.f32 %v795, %v966
  %v999 = vadd.f32 %v801, %v967
  %v1000 = vadd.f32 %v805, %v968
  %v1001 = vadd.f32 %v811, %v969
  %v1002 = vadd.f32 %v815, %v970
  %v1003 = vadd.f32 %v821, %v971
  %v1004 = vadd.f32 %v825, %v972
  %v1005 = vadd.f32 %v831, %v973
  %v1006 = vadd.f32 %v835, %v974
  %v1007 = vadd.f32 %v841, %v975
  %v1008 = vadd.f32 %v845, %v976
  %v1009 = vadd.f32 %v851, %v977
  %v1010 = vadd.f32 %v855, %v978
  %v1011 = vadd.f32 %v861, %v979
  %v1012 = vadd.f32 %v865, %v980
  %v1013 = vadd.f32 %v871, %v981
  %v1014 = vadd.f32 %v875, %v982
  %v1015 = vadd.f32 %v881, %v983
  %v1016 = vadd.f32 %v885, %v984
  %v1017 = vmul.f32 %v731, %v731
  %v1018 = vmul.f32 %v735, %v735
  %v1019 = vmul.f32 %v741, %v741
  %v1020 = vmul.f32 %v745, %v745
  %v1021 = vmul.f32 %v751, %v751
  %v1022 = vmul.f32 %v755, %v755
  %v1023 = vmul.f32 %v761, %v761
  %v1024 = vmul.f32 %v765, %v765
  %v1025 = vmul.f32 %v771, %v771
  %v1026 = vmul.f32 %v775, %v775
  %v1027 = vmul.f32 %v781, %v781
  %v1028 = vmul.f32 %v785, %v785
  %v1029 = vmul.f32 %v791, %v791
  %v1030 = vmul.f32 %v795, %v795
  %v1031 = vmul.f32 %v801, %v801
  %v1032 = vmul.f32 %v805, %v805
  %v1033 = vmul.f32 %v811, %v811
  %v1034 = vmul.f32 %v815, %v815
  %v1035 = vmul.f32 %v821, %v821
  %v1036 = vmul.f32 %v825, %v825
  %v1037 = vmul.f32 %v831, %v831
  %v1038 = vmul.f32 %v835, %v835
  %v1039 = vmul.f32 %v841, %v841
  %v1040 = vmul.f32 %v845, %v845
  %v1041 = vmul.f32 %v851, %v851
  %v1042 = vmul.f32 %v855, %v855
  %v1043 = vmul.f32 %v861, %v861
  %v1044 = vmul.f32 %v865, %v865
  %v1045 = vmul.f32 %v871, %v871
  %v1046 = vmul.f32 %v875, %v875
  %v1047 = vmul.f32 %v881, %v881
  %v1048 = vmul.f32 %v885, %v885
  %v1049 = vmul.f32 %v890, %v890
  %v1050 = vmul.f32 %v892, %v892
  %v1051 = vmul.f32 %v894, %v894
  %v1052 = vmul.f32 %v896, %v896
  %v1053 = vmul.f32 %v898, %v898
  %v1054 = vmul.f32 %v900, %v900
  %v1055 = vmul.f32 %v902, %v902
  %v1056 = vmul.f32 %v904, %v904
  %v1057 = vmul.f32 %v906, %v906
  %v1058 = vmul.f32 %v908, %v908
  %v1059 = vmul.f32 %v910, %v910
  %v1060 = vmul.f32 %v912, %v912
  %v1061 = vmul.f32 %v914, %v914
  %v1062 = vmul.f32 %v916, %v916
  %v1063 = vmul.f32 %v918, %v918
  %v1064 = vmul.f32 %v920, %v920
  %v1065 = vmul.f32 %v922, %v922
  %v1066 = vmul.f32 %v924, %v924
  %v1067 = vmul.f32 %v926, %v926
  %v1068 = vmul.f32 %v928, %v928
  %v1069 = vmul.f32 %v930, %v930
  %v1070 = vmul.f32 %v932, %v932
  %v1071 = vmul.f32 %v934, %v934
  %v1072 = vmul.f32 %v936, %v936
  %v1073 = vmul.f32 %v938, %v938
  %v1074 = vmul.f32 %v940, %v940
  %v1075 = vmul.f32 %v942, %v942
  %v1076 = vmul.f32 %v944, %v944
  %v1077 = vmul.f32 %v946, %v946
  %v1078 = vmul.f32 %v948, %v948
  %v1079 = vmul.f32 %v950, %v950
  %v1080 = vmul.f32 %v952, %v952
  %v1081 = vadd.f32 %v1017, %v1049
  %v1082 = vadd.f32 %v1018, %v1050
  %v1083 = vadd.f32 %v1019, %v1051
  %v1084 = vadd.f32 %v1020, %v1052
  %v1085 = vadd.f32 %v1021, %v1053
  %v1086 = vadd.f32 %v1022, %v1054
  %v1087 = vadd.f32 %v1023, %v1055
  %v1088 = vadd.f32 %v1024, %v1056
  %v1089 = vadd.f32 %v1025, %v1057
  %v1090 = vadd.f32 %v1026, %v1058
  %v1091 = vadd.f32 %v1027, %v1059
  %v1092 = vadd.f32 %v1028, %v1060
  %v1093 = vadd.f32 %v1029, %v1061
  %v1094 = vadd.f32 %v1030, %v1062
  %v1095 = vadd.f32 %v1031, %v1063
  %v1096 = vadd.f32 %v1032, %v1064
  %v1097 = vadd.f32 %v1033, %v1065
  %v1098 = vadd.f32 %v1034, %v1066
  %v1099 = vadd.f32 %v1035, %v1067
  %v1100 = vadd.f32 %v1036, %v1068
  %v1101 = vadd.f32 %v1037, %v1069
  %v1102 = vadd.f32 %v1038, %v1070
  %v1103 = vadd.f32 %v1039, %v1071
  %v1104 = vadd.f32 %v1040, %v1072
  %v1105 = vadd.f32 %v1041, %v1073
  %v1106 = vadd.f32 %v1042, %v1074
  %v1107 = vadd.f32 %v1043, %v1075
  %v1108 = vadd.f32 %v1044, %v1076
  %v1109 = vadd.f32 %v1045, %v1077
  %v1110 = vadd.f32 %v1046, %v1078
  %v1111 = vadd.f32 %v1047, %v1079
  %v1112 = vadd.f32 %v1048, %v1080
  %v1113 = vsub.f32 %v1081, 1.0
  %v1114 = vsub.f32 %v1082, 1.0
  %v1115 = vsub.f32 %v1083, 1.0
  %v1116 = vsub.f32 %v1084, 1.0
  %v1117 = vsub.f32 %v1085, 1.0
  %v1118 = vsub.f32 %v1086, 1.0
  %v1119 = vsub.f32 %v1087, 1.0
  %v1120 = vsub.f32 %v1088, 1.0
  %v1121 = vsub.f32 %v1089, 1.0
  %v1122 = vsub.f32 %v1090, 1.0
  %v1123 = vsub.f32 %v1091, 1.0
  %v1124 = vsub.f32 %v1092, 1.0
  %v1125 = vsub.f32 %v1093, 1.0
  %v1126 = vsub.f32 %v1094, 1.0
  %v1127 = vsub.f32 %v1095, 1.0
  %v1128 = vsub.f32 %v1096, 1.0
  %v1129 = vsub.f32 %v1097, 1.0
  %v1130 = vsub.f32 %v1098, 1.0
  %v1131 = vsub.f32 %v1099, 1.0
  %v1132 = vsub.f32 %v1100, 1.0
  %v1133 = vsub.f32 %v1101, 1.0
  %v1134 = vsub.f32 %v1102, 1.0
  %v1135 = vsub.f32 %v1103, 1.0
  %v1136 = vsub.f32 %v1104, 1.0
  %v1137 = vsub.f32 %v1105, 1.0
  %v1138 = vsub.f32 %v1106, 1.0
  %v1139 = vsub.f32 %v1107, 1.0
  %v1140 = vsub.f32 %v1108, 1.0
  %v1141 = vsub.f32 %v1109, 1.0
  %v1142 = vsub.f32 %v1110, 1.0
  %v1143 = vsub.f32 %v1111, 1.0
  %v1144 = vsub.f32 %v1112, 1.0
  %v1145 = vmul.f32 %v733, 2.0
  %v1146 = vmul.f32 %v737, 2.0
  %v1147 = vmul.f32 %v743, 2.0
  %v1148 = vmul.f32 %v747, 2.0
  %v1149 = vmul.f32 %v753, 2.0
  %v1150 = vmul.f32 %v757, 2.0
  %v1151 = vmul.f32 %v763, 2.0
  %v1152 = vmul.f32 %v767, 2.0
  %v1153 = vmul.f32 %v773, 2.0
  %v1154 = vmul.f32 %v777, 2.0
  %v1155 = vmul.f32 %v783, 2.0
  %v1156 = vmul.f32 %v787, 2.0
  %v1157 = vmul.f32 %v793, 2.0
  %v1158 = vmul.f32 %v797, 2.0
  %v1159 = vmul.f32 %v803, 2.0
  %v1160 = vmul.f32 %v807, 2.0
  %v1161 = vmul.f32 %v813, 2.0
  %v1162 = vmul.f32 %v817, 2.0
  %v1163 = vmul.f32 %v823, 2.0
  %v1164 = vmul.f32 %v827, 2.0
  %v1165 = vmul.f32 %v833, 2.0
  %v1166 = vmul.f32 %v837, 2.0
  %v1167 = vmul.f32 %v843, 2.0
  %v1168 = vmul.f32 %v847, 2.0
  %v1169 = vmul.f32 %v853, 2.0
  %v1170 = vmul.f32 %v857, 2.0
  %v1171 = vmul.f32 %v863, 2.0
  %v1172 = vmul.f32 %v867, 2.0
  %v1173 = vmul.f32 %v873, 2.0
  %v1174 = vmul.f32 %v877, 2.0
  %v1175 = vmul.f32 %v883, 2.0
  %v1176 = vmul.f32 %v887, 2.0
  %v1177 = vsub.f32 %v1113, %v1145
  %v1178 = vsub.f32 %v1114, %v1146
  %v1179 = vsub.f32 %v1115, %v1147
  %v1180 = vsub.f32 %v1116, %v1148
  %v1181 = vsub.f32 %v1117, %v1149
  %v1182 = vsub.f32 %v1118, %v1150
  %v1183 = vsub.f32 %v1119, %v1151
  %v1184 = vsub.f32 %v1120, %v1152
  %v1185 = vsub.f32 %v1121, %v1153
  %v1186 = vsub.f32 %v1122, %v1154
  %v1187 = vsub.f32 %v1123, %v1155
  %v1188 = vsub.f32 %v1124, %v1156
  %v1189 = vsub.f32 %v1125, %v1157
  %v1190 = vsub.f32 %v1126, %v1158
  %v1191 = vsub.f32 %v1127, %v1159
  %v1192 = vsub.f32 %v1128, %v1160
  %v1193 = vsub.f32 %v1129, %v1161
  %v1194 = vsub.f32 %v1130, %v1162
  %v1195 = vsub.f32 %v1131, %v1163
  %v1196 = vsub.f32 %v1132, %v1164
  %v1197 = vsub.f32 %v1133, %v1165
  %v1198 = vsub.f32 %v1134, %v1166
  %v1199 = vsub.f32 %v1135, %v1167
  %v1200 = vsub.f32 %v1136, %v1168
  %v1201 = vsub.f32 %v1137, %v1169
  %v1202 = vsub.f32 %v1138, %v1170
  %v1203 = vsub.f32 %v1139, %v1171
  %v1204 = vsub.f32 %v1140, %v1172
  %v1205 = vsub.f32 %v1141, %v1173
  %v1206 = vsub.f32 %v1142, %v1174
  %v1207 = vsub.f32 %v1143, %v1175
  %v1208 = vsub.f32 %v1144, %v1176
  %1209 = vadd.xlane.f32.xlu0 %v1177
  %v1210 = vpop.xlane.xlu0 %1209
  %1211 = vadd.xlane.f32.xlu0 %v1178
  %v1212 = vpop.xlane.xlu0 %1211
  %1213 = vadd.xlane.f32.xlu0 %v1179
  %v1214 = vpop.xlane.xlu0 %1213
  %1215 = vadd.xlane.f32.xlu0 %v1180
  %v1216 = vpop.xlane.xlu0 %1215
  %1217 = vadd.xlane.f32.xlu0 %v1181
  %v1218 = vpop.xlane.xlu0 %1217
  %1219 = vadd.xlane.f32.xlu0 %v1182
  %v1220 = vpop.xlane.xlu0 %1219
  %1221 = vadd.xlane.f32.xlu0 %v1183
  %v1222 = vpop.xlane.xlu0 %1221
  %1223 = vadd.xlane.f32.xlu0 %v1184
  %v1224 = vpop.xlane.xlu0 %1223
  %1225 = vadd.xlane.f32.xlu0 %v1185
  %v1226 = vpop.xlane.xlu0 %1225
  %1227 = vadd.xlane.f32.xlu0 %v1186
  %v1228 = vpop.xlane.xlu0 %1227
  %1229 = vadd.xlane.f32.xlu0 %v1187
  %v1230 = vpop.xlane.xlu0 %1229
  %1231 = vadd.xlane.f32.xlu0 %v1188
  %v1232 = vpop.xlane.xlu0 %1231
  %1233 = vadd.xlane.f32.xlu0 %v1189
  %v1234 = vpop.xlane.xlu0 %1233
  %1235 = vadd.xlane.f32.xlu0 %v1190
  %v1236 = vpop.xlane.xlu0 %1235
  %1237 = vadd.xlane.f32.xlu0 %v1191
  %v1238 = vpop.xlane.xlu0 %1237
  %1239 = vadd.xlane.f32.xlu0 %v1192
  %v1240 = vpop.xlane.xlu0 %1239
  %1241 = vadd.xlane.f32.xlu0 %v1193
  %v1242 = vpop.xlane.xlu0 %1241
  %1243 = vadd.xlane.f32.xlu0 %v1194
  %v1244 = vpop.xlane.xlu0 %1243
  %1245 = vadd.xlane.f32.xlu0 %v1195
  %v1246 = vpop.xlane.xlu0 %1245
  %1247 = vadd.xlane.f32.xlu0 %v1196
  %v1248 = vpop.xlane.xlu0 %1247
  %1249 = vadd.xlane.f32.xlu0 %v1197
  %v1250 = vpop.xlane.xlu0 %1249
  %1251 = vadd.xlane.f32.xlu0 %v1198
  %v1252 = vpop.xlane.xlu0 %1251
  %1253 = vadd.xlane.f32.xlu0 %v1199
  %v1254 = vpop.xlane.xlu0 %1253
  %1255 = vadd.xlane.f32.xlu0 %v1200
  %v1256 = vpop.xlane.xlu0 %1255
  %1257 = vadd.xlane.f32.xlu0 %v1201
  %v1258 = vpop.xlane.xlu0 %1257
  %1259 = vadd.xlane.f32.xlu0 %v1202
  %v1260 = vpop.xlane.xlu0 %1259
  %1261 = vadd.xlane.f32.xlu0 %v1203
  %v1262 = vpop.xlane.xlu0 %1261
  %1263 = vadd.xlane.f32.xlu0 %v1204
  %v1264 = vpop.xlane.xlu0 %1263
  %1265 = vadd.xlane.f32.xlu0 %v1205
  %v1266 = vpop.xlane.xlu0 %1265
  %1267 = vadd.xlane.f32.xlu0 %v1206
  %v1268 = vpop.xlane.xlu0 %1267
  %1269 = vadd.xlane.f32.xlu0 %v1207
  %v1270 = vpop.xlane.xlu0 %1269
  %1271 = vadd.xlane.f32.xlu0 %v1208
  %v1272 = vpop.xlane.xlu0 %1271
  %v1273 = vmul.f32 %v1210, 0.5
  %v1274 = vmul.f32 %v1212, 0.5
  %v1275 = vmul.f32 %v1214, 0.5
  %v1276 = vmul.f32 %v1216, 0.5
  %v1277 = vmul.f32 %v1218, 0.5
  %v1278 = vmul.f32 %v1220, 0.5
  %v1279 = vmul.f32 %v1222, 0.5
  %v1280 = vmul.f32 %v1224, 0.5
  %v1281 = vmul.f32 %v1226, 0.5
  %v1282 = vmul.f32 %v1228, 0.5
  %v1283 = vmul.f32 %v1230, 0.5
  %v1284 = vmul.f32 %v1232, 0.5
  %v1285 = vmul.f32 %v1234, 0.5
  %v1286 = vmul.f32 %v1236, 0.5
  %v1287 = vmul.f32 %v1238, 0.5
  %v1288 = vmul.f32 %v1240, 0.5
  %v1289 = vmul.f32 %v1242, 0.5
  %v1290 = vmul.f32 %v1244, 0.5
  %v1291 = vmul.f32 %v1246, 0.5
  %v1292 = vmul.f32 %v1248, 0.5
  %v1293 = vmul.f32 %v1250, 0.5
  %v1294 = vmul.f32 %v1252, 0.5
  %v1295 = vmul.f32 %v1254, 0.5
  %v1296 = vmul.f32 %v1256, 0.5
  %v1297 = vmul.f32 %v1258, 0.5
  %v1298 = vmul.f32 %v1260, 0.5
  %v1299 = vmul.f32 %v1262, 0.5
  %v1300 = vmul.f32 %v1264, 0.5
  %v1301 = vmul.f32 %v1266, 0.5
  %v1302 = vmul.f32 %v1268, 0.5
  %v1303 = vmul.f32 %v1270, 0.5
  %v1304 = vmul.f32 %v1272, 0.5
  %v1305 = vpack.c.bf16 %v986, %v985
  %v1306 = vpack.c.bf16 %v988, %v987
  %v1307 = vpack.c.bf16 %v990, %v989
  %v1308 = vpack.c.bf16 %v992, %v991
  %v1309 = vpack.c.bf16 %v994, %v993
  %v1310 = vpack.c.bf16 %v996, %v995
  %v1311 = vpack.c.bf16 %v998, %v997
  %v1312 = vpack.c.bf16 %v1000, %v999
  %v1313 = vpack.c.bf16 %v1002, %v1001
  %v1314 = vpack.c.bf16 %v1004, %v1003
  %v1315 = vpack.c.bf16 %v1006, %v1005
  %v1316 = vpack.c.bf16 %v1008, %v1007
  %v1317 = vpack.c.bf16 %v1010, %v1009
  %v1318 = vpack.c.bf16 %v1012, %v1011
  %v1319 = vpack.c.bf16 %v1014, %v1013
  %v1320 = vpack.c.bf16 %v1016, %v1015
  %v1321 = vld [vmem:[%s2 + $0x180] sm:$0xf]
  %v1322 = vld [vmem:[%s2 + $0x188] sm:$0xf]
  %v1323 = vld [vmem:[%s2 + $0x190] sm:$0xf]
  %v1324 = vld [vmem:[%s2 + $0x198] sm:$0xf]
  %v1325 = vld [vmem:[%s2 + $0x1a0] sm:$0xf]
  %v1326 = vld [vmem:[%s2 + $0x1a8] sm:$0xf]
  %v1327 = vld [vmem:[%s2 + $0x1b0] sm:$0xf]
  %v1328 = vld [vmem:[%s2 + $0x1b8] sm:$0xf]
  %v1329 = vld [vmem:[%s2 + $0x1c0] sm:$0xf]
  %v1330 = vld [vmem:[%s2 + $0x1c8] sm:$0xf]
  %v1331 = vld [vmem:[%s2 + $0x1d0] sm:$0xf]
  %v1332 = vld [vmem:[%s2 + $0x1d8] sm:$0xf]
  %v1333 = vld [vmem:[%s2 + $0x1e0] sm:$0xf]
  %v1334 = vld [vmem:[%s2 + $0x1e8] sm:$0xf]
  %v1335 = vld [vmem:[%s2 + $0x1f0] sm:$0xf]
  %v1336 = vld [vmem:[%s2 + $0x1f8] sm:$0xf]
  %v1337 = vld [vmem:[%s3 + $0x3] sm:$0x1]
  %v1339 = vlaneseq
  %v1340 = vshrl.u32 %v1339, 7
  %v1341 = vsub.s32 0, %v1340
  %v1342 = vrot.slane %v1337, %v1341
  %v1360 = vunpack.c.l.b16 %v1321
  %v1361 = vunpack.c.l.b16 %v1322
  %v1362 = vunpack.c.l.b16 %v1323
  %v1363 = vunpack.c.l.b16 %v1324
  %v1364 = vunpack.c.l.b16 %v1325
  %v1365 = vunpack.c.l.b16 %v1326
  %v1366 = vunpack.c.l.b16 %v1327
  %v1367 = vunpack.c.l.b16 %v1328
  %v1368 = vunpack.c.l.b16 %v1329
  %v1369 = vunpack.c.l.b16 %v1330
  %v1370 = vunpack.c.l.b16 %v1331
  %v1371 = vunpack.c.l.b16 %v1332
  %v1372 = vunpack.c.l.b16 %v1333
  %v1373 = vunpack.c.l.b16 %v1334
  %v1374 = vunpack.c.l.b16 %v1335
  %v1375 = vunpack.c.l.b16 %v1336
  %v1376 = vpack.c.b16 %v1361, %v1360
  %v1377 = vpack.c.b16 %v1363, %v1362
  %v1378 = vpack.c.b16 %v1365, %v1364
  %v1379 = vpack.c.b16 %v1367, %v1366
  %v1380 = vpack.c.b16 %v1369, %v1368
  %v1381 = vpack.c.b16 %v1371, %v1370
  %v1382 = vpack.c.b16 %v1373, %v1372
  %v1383 = vpack.c.b16 %v1375, %v1374
  %1392 = vmatprep.subr.bf16.mxu0 0
  %1393 = vmatpush1.bf16.msra.mxu0 %v1376
  %1394 = vmatprep.subr.bf16.mxu0 0
  %1395 = vmatpush1.bf16.msra.mxu0 %v1377
  %1396 = vmatprep.subr.bf16.mxu0 0
  %1397 = vmatpush1.bf16.msra.mxu0 %v1378
  %1398 = vmatprep.subr.bf16.mxu0 0
  %1399 = vmatpush1.bf16.msra.mxu0 %v1379
  %1400 = vmatprep.subr.bf16.mxu0 0
  %1401 = vmatpush1.bf16.msra.mxu0 %v1380
  %1402 = vmatprep.subr.bf16.mxu0 0
  %1403 = vmatpush1.bf16.msra.mxu0 %v1381
  %1404 = vmatprep.subr.bf16.mxu0 0
  %1405 = vmatpush1.bf16.msra.mxu0 %v1382
  %1406 = vmatprep.subr.bf16.mxu0 0
  %1407 = vmatpush1.bf16.msra.mxu0 %v1383
  %1408 = vmatprep.subr.bf16.mxu0 0
  %1409 = vmatpush1.bf16.msra.mxu0 0
  %1410 = vmatprep.subr.bf16.mxu0 0
  %1411 = vmatpush1.bf16.msra.mxu0 0
  %1412 = vmatprep.subr.bf16.mxu0 0
  %1413 = vmatpush1.bf16.msra.mxu0 0
  %1414 = vmatprep.subr.bf16.mxu0 0
  %1415 = vmatpush1.bf16.msra.mxu0 0
  %1416 = vmatprep.subr.bf16.mxu0 0
  %1417 = vmatpush1.bf16.msra.mxu0 0
  %1418 = vmatprep.subr.bf16.mxu0 0
  %1419 = vmatpush1.bf16.msra.mxu0 0
  %1420 = vmatprep.subr.bf16.mxu0 0
  %1421 = vmatpush1.bf16.msra.mxu0 0
  %1422 = vmatprep.subr.bf16.mxu0 0
  %1423 = vmatpush1.bf16.msra.mxu0 0
  %1424 = vmatprep.mubr.bf16.mxu0 0
  %1425 = vmatmul.mubr.bf16.gmra.mrb[0].mxu0 %v1305
  %v1426 = vpop.f32.mrb[0].mxu0
  %v1427 = vadd.f32 %v1342, %v1426
  %v1428 = vpop.f32.mrb[0].mxu0
  %v1429 = vpop.f32.mrb[0].mxu0
  %v1430 = vadd.f32 %v1342, %v1429
  %v1431 = vpop.f32.mrb[0].mxu0
  %1432 = vmatprep.mubr.bf16.mxu0 0
  %1433 = vmatmul.mubr.bf16.gmra.mrb[0].mxu0 %v1306
  %v1434 = vpop.f32.mrb[0].mxu0
  %v1435 = vadd.f32 %v1342, %v1434
  %v1436 = vpop.f32.mrb[0].mxu0
  %v1437 = vpop.f32.mrb[0].mxu0
  %v1438 = vadd.f32 %v1342, %v1437
  %v1439 = vpop.f32.mrb[0].mxu0
  %1440 = vmatprep.mubr.bf16.mxu0 0
  %1441 = vmatmul.mubr.bf16.gmra.mrb[0].mxu0 %v1307
  %v1442 = vpop.f32.mrb[0].mxu0
  %v1443 = vadd.f32 %v1342, %v1442
  %v1444 = vpop.f32.mrb[0].mxu0
  %v1445 = vpop.f32.mrb[0].mxu0
  %v1446 = vadd.f32 %v1342, %v1445
  %v1447 = vpop.f32.mrb[0].mxu0
  %1448 = vmatprep.mubr.bf16.mxu0 0
  %1449 = vmatmul.mubr.bf16.gmra.mrb[0].mxu0 %v1308
  %v1450 = vpop.f32.mrb[0].mxu0
  %v1451 = vadd.f32 %v1342, %v1450
  %v1452 = vpop.f32.mrb[0].mxu0
  %v1453 = vpop.f32.mrb[0].mxu0
  %v1454 = vadd.f32 %v1342, %v1453
  %v1455 = vpop.f32.mrb[0].mxu0
  %1456 = vmatprep.mubr.bf16.mxu0 0
  %1457 = vmatmul.mubr.bf16.gmra.mrb[0].mxu0 %v1309
  %v1458 = vpop.f32.mrb[0].mxu0
  %v1459 = vadd.f32 %v1342, %v1458
  %v1460 = vpop.f32.mrb[0].mxu0
  %v1461 = vpop.f32.mrb[0].mxu0
  %v1462 = vadd.f32 %v1342, %v1461
  %v1463 = vpop.f32.mrb[0].mxu0
  %1464 = vmatprep.mubr.bf16.mxu0 0
  %1465 = vmatmul.mubr.bf16.gmra.mrb[0].mxu0 %v1310
  %v1466 = vpop.f32.mrb[0].mxu0
  %v1467 = vadd.f32 %v1342, %v1466
  %v1468 = vpop.f32.mrb[0].mxu0
  %v1469 = vpop.f32.mrb[0].mxu0
  %v1470 = vadd.f32 %v1342, %v1469
  %v1471 = vpop.f32.mrb[0].mxu0
  %1472 = vmatprep.mubr.bf16.mxu0 0
  %1473 = vmatmul.mubr.bf16.gmra.mrb[0].mxu0 %v1311
  %v1474 = vpop.f32.mrb[0].mxu0
  %v1475 = vadd.f32 %v1342, %v1474
  %v1476 = vpop.f32.mrb[0].mxu0
  %v1477 = vpop.f32.mrb[0].mxu0
  %v1478 = vadd.f32 %v1342, %v1477
  %v1479 = vpop.f32.mrb[0].mxu0
  %1480 = vmatprep.mubr.bf16.mxu0 0
  %1481 = vmatmul.mubr.bf16.gmra.mrb[0].mxu0 %v1312
  %v1482 = vpop.f32.mrb[0].mxu0
  %v1483 = vadd.f32 %v1342, %v1482
  %v1484 = vpop.f32.mrb[0].mxu0
  %v1485 = vpop.f32.mrb[0].mxu0
  %v1486 = vadd.f32 %v1342, %v1485
  %v1487 = vpop.f32.mrb[0].mxu0
  %1488 = vmatprep.mubr.bf16.mxu0 0
  %1489 = vmatmul.mubr.bf16.gmra.mrb[0].mxu0 %v1313
  %v1490 = vpop.f32.mrb[0].mxu0
  %v1491 = vadd.f32 %v1342, %v1490
  %v1492 = vpop.f32.mrb[0].mxu0
  %v1493 = vpop.f32.mrb[0].mxu0
  %v1494 = vadd.f32 %v1342, %v1493
  %v1495 = vpop.f32.mrb[0].mxu0
  %1496 = vmatprep.mubr.bf16.mxu0 0
  %1497 = vmatmul.mubr.bf16.gmra.mrb[0].mxu0 %v1314
  %v1498 = vpop.f32.mrb[0].mxu0
  %v1499 = vadd.f32 %v1342, %v1498
  %v1500 = vpop.f32.mrb[0].mxu0
  %v1501 = vpop.f32.mrb[0].mxu0
  %v1502 = vadd.f32 %v1342, %v1501
  %v1503 = vpop.f32.mrb[0].mxu0
  %1504 = vmatprep.mubr.bf16.mxu0 0
  %1505 = vmatmul.mubr.bf16.gmra.mrb[0].mxu0 %v1315
  %v1506 = vpop.f32.mrb[0].mxu0
  %v1507 = vadd.f32 %v1342, %v1506
  %v1508 = vpop.f32.mrb[0].mxu0
  %v1509 = vpop.f32.mrb[0].mxu0
  %v1510 = vadd.f32 %v1342, %v1509
  %v1511 = vpop.f32.mrb[0].mxu0
  %1512 = vmatprep.mubr.bf16.mxu0 0
  %1513 = vmatmul.mubr.bf16.gmra.mrb[0].mxu0 %v1316
  %v1514 = vpop.f32.mrb[0].mxu0
  %v1515 = vadd.f32 %v1342, %v1514
  %v1516 = vpop.f32.mrb[0].mxu0
  %v1517 = vpop.f32.mrb[0].mxu0
  %v1518 = vadd.f32 %v1342, %v1517
  %v1519 = vpop.f32.mrb[0].mxu0
  %1520 = vmatprep.mubr.bf16.mxu0 0
  %1521 = vmatmul.mubr.bf16.gmra.mrb[0].mxu0 %v1317
  %v1522 = vpop.f32.mrb[0].mxu0
  %v1523 = vadd.f32 %v1342, %v1522
  %v1524 = vpop.f32.mrb[0].mxu0
  %v1525 = vpop.f32.mrb[0].mxu0
  %v1526 = vadd.f32 %v1342, %v1525
  %v1527 = vpop.f32.mrb[0].mxu0
  %1528 = vmatprep.mubr.bf16.mxu0 0
  %1529 = vmatmul.mubr.bf16.gmra.mrb[0].mxu0 %v1318
  %v1530 = vpop.f32.mrb[0].mxu0
  %v1531 = vadd.f32 %v1342, %v1530
  %v1532 = vpop.f32.mrb[0].mxu0
  %v1533 = vpop.f32.mrb[0].mxu0
  %v1534 = vadd.f32 %v1342, %v1533
  %v1535 = vpop.f32.mrb[0].mxu0
  %1536 = vmatprep.mubr.bf16.mxu0 0
  %1537 = vmatmul.mubr.bf16.gmra.mrb[0].mxu0 %v1319
  %v1538 = vpop.f32.mrb[0].mxu0
  %v1539 = vadd.f32 %v1342, %v1538
  %v1540 = vpop.f32.mrb[0].mxu0
  %v1541 = vpop.f32.mrb[0].mxu0
  %v1542 = vadd.f32 %v1342, %v1541
  %v1543 = vpop.f32.mrb[0].mxu0
  %1544 = vmatprep.mubr.bf16.mxu0 0
  %1545 = vmatmul.mubr.bf16.gmra.mrb[0].mxu0 %v1320
  %v1546 = vpop.f32.mrb[0].mxu0
  %v1547 = vadd.f32 %v1342, %v1546
  %v1548 = vpop.f32.mrb[0].mxu0
  %v1549 = vpop.f32.mrb[0].mxu0
  %v1550 = vadd.f32 %v1342, %v1549
  %v1551 = vpop.f32.mrb[0].mxu0
  %1552 = vdwg.mxu0
  %v1553 = vmax.f32 %v1427, 0.0
  %v1554 = vmax.f32 %v1430, 0.0
  %v1555 = vmax.f32 %v1435, 0.0
  %v1556 = vmax.f32 %v1438, 0.0
  %v1557 = vmax.f32 %v1443, 0.0
  %v1558 = vmax.f32 %v1446, 0.0
  %v1559 = vmax.f32 %v1451, 0.0
  %v1560 = vmax.f32 %v1454, 0.0
  %v1561 = vmax.f32 %v1459, 0.0
  %v1562 = vmax.f32 %v1462, 0.0
  %v1563 = vmax.f32 %v1467, 0.0
  %v1564 = vmax.f32 %v1470, 0.0
  %v1565 = vmax.f32 %v1475, 0.0
  %v1566 = vmax.f32 %v1478, 0.0
  %v1567 = vmax.f32 %v1483, 0.0
  %v1568 = vmax.f32 %v1486, 0.0
  %v1569 = vmax.f32 %v1491, 0.0
  %v1570 = vmax.f32 %v1494, 0.0
  %v1571 = vmax.f32 %v1499, 0.0
  %v1572 = vmax.f32 %v1502, 0.0
  %v1573 = vmax.f32 %v1507, 0.0
  %v1574 = vmax.f32 %v1510, 0.0
  %v1575 = vmax.f32 %v1515, 0.0
  %v1576 = vmax.f32 %v1518, 0.0
  %v1577 = vmax.f32 %v1523, 0.0
  %v1578 = vmax.f32 %v1526, 0.0
  %v1579 = vmax.f32 %v1531, 0.0
  %v1580 = vmax.f32 %v1534, 0.0
  %v1581 = vmax.f32 %v1539, 0.0
  %v1582 = vmax.f32 %v1542, 0.0
  %v1583 = vmax.f32 %v1547, 0.0
  %v1584 = vmax.f32 %v1550, 0.0
  %v1585 = vpack.c.bf16 %v1554, %v1553
  %v1586 = vpack.c.bf16 %v1556, %v1555
  %v1587 = vpack.c.bf16 %v1558, %v1557
  %v1588 = vpack.c.bf16 %v1560, %v1559
  %v1589 = vpack.c.bf16 %v1562, %v1561
  %v1590 = vpack.c.bf16 %v1564, %v1563
  %v1591 = vpack.c.bf16 %v1566, %v1565
  %v1592 = vpack.c.bf16 %v1568, %v1567
  %v1593 = vpack.c.bf16 %v1570, %v1569
  %v1594 = vpack.c.bf16 %v1572, %v1571
  %v1595 = vpack.c.bf16 %v1574, %v1573
  %v1596 = vpack.c.bf16 %v1576, %v1575
  %v1597 = vpack.c.bf16 %v1578, %v1577
  %v1598 = vpack.c.bf16 %v1580, %v1579
  %v1599 = vpack.c.bf16 %v1582, %v1581
  %v1600 = vpack.c.bf16 %v1584, %v1583
  %v1601 = vld [vmem:[%s2 + $0x200] sm:$0xff]
  %v1602 = vld [vmem:[%s2 + $0x208] sm:$0xff]
  %v1603 = vld [vmem:[%s2 + $0x210] sm:$0xff]
  %v1604 = vld [vmem:[%s2 + $0x218] sm:$0xff]
  %v1605 = vld [vmem:[%s2 + $0x220] sm:$0xff]
  %v1606 = vld [vmem:[%s2 + $0x228] sm:$0xff]
  %v1607 = vld [vmem:[%s2 + $0x230] sm:$0xff]
  %v1608 = vld [vmem:[%s2 + $0x238] sm:$0xff]
  %v1609 = vld [vmem:[%s2 + $0x240] sm:$0xff]
  %v1610 = vld [vmem:[%s2 + $0x248] sm:$0xff]
  %v1611 = vld [vmem:[%s2 + $0x250] sm:$0xff]
  %v1612 = vld [vmem:[%s2 + $0x258] sm:$0xff]
  %v1613 = vld [vmem:[%s2 + $0x260] sm:$0xff]
  %v1614 = vld [vmem:[%s2 + $0x268] sm:$0xff]
  %v1615 = vld [vmem:[%s2 + $0x270] sm:$0xff]
  %v1616 = vld [vmem:[%s2 + $0x278] sm:$0xff]
  %v1617 = vld [vmem:[%s3 + $0x4] sm:$0x3]
  %v1619 = vlaneseq
  %v1620 = vshrl.u32 %v1619, 7
  %v1621 = vsub.s32 0, %v1620
  %v1622 = vrot.slane %v1617, %v1621
  %v1623 = vlaneseq
  %v1624 = vshrl.u32 %v1623, 7
  %v1625 = vsub.s32 1, %v1624
  %v1626 = vrot.slane %v1617, %v1625
  %v1645 = vunpack.c.l.b16 %v1601
  %v1646 = vunpack.c.h.b16 %v1601
  %v1647 = vunpack.c.l.b16 %v1602
  %v1648 = vunpack.c.h.b16 %v1602
  %v1649 = vunpack.c.l.b16 %v1603
  %v1650 = vunpack.c.h.b16 %v1603
  %v1651 = vunpack.c.l.b16 %v1604
  %v1652 = vunpack.c.h.b16 %v1604
  %v1653 = vunpack.c.l.b16 %v1605
  %v1654 = vunpack.c.h.b16 %v1605
  %v1655 = vunpack.c.l.b16 %v1606
  %v1656 = vunpack.c.h.b16 %v1606
  %v1657 = vunpack.c.l.b16 %v1607
  %v1658 = vunpack.c.h.b16 %v1607
  %v1659 = vunpack.c.l.b16 %v1608
  %v1660 = vunpack.c.h.b16 %v1608
  %v1661 = vunpack.c.l.b16 %v1609
  %v1662 = vunpack.c.h.b16 %v1609
  %v1663 = vunpack.c.l.b16 %v1610
  %v1664 = vunpack.c.h.b16 %v1610
  %v1665 = vunpack.c.l.b16 %v1611
  %v1666 = vunpack.c.h.b16 %v1611
  %v1667 = vunpack.c.l.b16 %v1612
  %v1668 = vunpack.c.h.b16 %v1612
  %v1669 = vunpack.c.l.b16 %v1613
  %v1670 = vunpack.c.h.b16 %v1613
  %v1671 = vunpack.c.l.b16 %v1614
  %v1672 = vunpack.c.h.b16 %v1614
  %v1673 = vunpack.c.l.b16 %v1615
  %v1674 = vunpack.c.h.b16 %v1615
  %v1675 = vunpack.c.l.b16 %v1616
  %v1676 = vunpack.c.h.b16 %v1616
  %v1677 = vpack.c.b16 %v1647, %v1645
  %v1678 = vpack.c.b16 %v1648, %v1646
  %v1679 = vpack.c.b16 %v1651, %v1649
  %v1680 = vpack.c.b16 %v1652, %v1650
  %v1681 = vpack.c.b16 %v1655, %v1653
  %v1682 = vpack.c.b16 %v1656, %v1654
  %v1683 = vpack.c.b16 %v1659, %v1657
  %v1684 = vpack.c.b16 %v1660, %v1658
  %v1685 = vpack.c.b16 %v1663, %v1661
  %v1686 = vpack.c.b16 %v1664, %v1662
  %v1687 = vpack.c.b16 %v1667, %v1665
  %v1688 = vpack.c.b16 %v1668, %v1666
  %v1689 = vpack.c.b16 %v1671, %v1669
  %v1690 = vpack.c.b16 %v1672, %v1670
  %v1691 = vpack.c.b16 %v1675, %v1673
  %v1692 = vpack.c.b16 %v1676, %v1674
  %1709 = vmatprep.subr.bf16.mxu0 %v1678
  %1710 = vmatpush1.bf16.msra.mxu0 %v1677
  %1711 = vmatprep.subr.bf16.mxu0 %v1680
  %1712 = vmatpush1.bf16.msra.mxu0 %v1679
  %1713 = vmatprep.subr.bf16.mxu0 %v1682
  %1714 = vmatpush1.bf16.msra.mxu0 %v1681
  %1715 = vmatprep.subr.bf16.mxu0 %v1684
  %1716 = vmatpush1.bf16.msra.mxu0 %v1683
  %1717 = vmatprep.subr.bf16.mxu0 %v1686
  %1718 = vmatpush1.bf16.msra.mxu0 %v1685
  %1719 = vmatprep.subr.bf16.mxu0 %v1688
  %1720 = vmatpush1.bf16.msra.mxu0 %v1687
  %1721 = vmatprep.subr.bf16.mxu0 %v1690
  %1722 = vmatpush1.bf16.msra.mxu0 %v1689
  %1723 = vmatprep.subr.bf16.mxu0 %v1692
  %1724 = vmatpush1.bf16.msra.mxu0 %v1691
  %1725 = vmatprep.subr.bf16.mxu0 0
  %1726 = vmatpush1.bf16.msra.mxu0 0
  %1727 = vmatprep.subr.bf16.mxu0 0
  %1728 = vmatpush1.bf16.msra.mxu0 0
  %1729 = vmatprep.subr.bf16.mxu0 0
  %1730 = vmatpush1.bf16.msra.mxu0 0
  %1731 = vmatprep.subr.bf16.mxu0 0
  %1732 = vmatpush1.bf16.msra.mxu0 0
  %1733 = vmatprep.subr.bf16.mxu0 0
  %1734 = vmatpush1.bf16.msra.mxu0 0
  %1735 = vmatprep.subr.bf16.mxu0 0
  %1736 = vmatpush1.bf16.msra.mxu0 0
  %1737 = vmatprep.subr.bf16.mxu0 0
  %1738 = vmatpush1.bf16.msra.mxu0 0
  %1739 = vmatprep.subr.bf16.mxu0 0
  %1740 = vmatpush1.bf16.msra.mxu0 0
  %1741 = vmatprep.mubr.bf16.mxu0 0
  %1742 = vmatmul.mubr.bf16.gmra.mrb[0].mxu0 %v1585
  %v1743 = vpop.f32.mrb[0].mxu0
  %v1744 = vadd.f32 %v1622, %v1743
  %v1745 = vpop.f32.mrb[0].mxu0
  %v1746 = vadd.f32 %v1626, %v1745
  %v1747 = vpop.f32.mrb[0].mxu0
  %v1748 = vadd.f32 %v1622, %v1747
  %v1749 = vpop.f32.mrb[0].mxu0
  %v1750 = vadd.f32 %v1626, %v1749
  %1751 = vmatprep.mubr.bf16.mxu0 0
  %1752 = vmatmul.mubr.bf16.gmra.mrb[0].mxu0 %v1586
  %v1753 = vpop.f32.mrb[0].mxu0
  %v1754 = vadd.f32 %v1622, %v1753
  %v1755 = vpop.f32.mrb[0].mxu0
  %v1756 = vadd.f32 %v1626, %v1755
  %v1757 = vpop.f32.mrb[0].mxu0
  %v1758 = vadd.f32 %v1622, %v1757
  %v1759 = vpop.f32.mrb[0].mxu0
  %v1760 = vadd.f32 %v1626, %v1759
  %1761 = vmatprep.mubr.bf16.mxu0 0
  %1762 = vmatmul.mubr.bf16.gmra.mrb[0].mxu0 %v1587
  %v1763 = vpop.f32.mrb[0].mxu0
  %v1764 = vadd.f32 %v1622, %v1763
  %v1765 = vpop.f32.mrb[0].mxu0
  %v1766 = vadd.f32 %v1626, %v1765
  %v1767 = vpop.f32.mrb[0].mxu0
  %v1768 = vadd.f32 %v1622, %v1767
  %v1769 = vpop.f32.mrb[0].mxu0
  %v1770 = vadd.f32 %v1626, %v1769
  %1771 = vmatprep.mubr.bf16.mxu0 0
  %1772 = vmatmul.mubr.bf16.gmra.mrb[0].mxu0 %v1588
  %v1773 = vpop.f32.mrb[0].mxu0
  %v1774 = vadd.f32 %v1622, %v1773
  %v1775 = vpop.f32.mrb[0].mxu0
  %v1776 = vadd.f32 %v1626, %v1775
  %v1777 = vpop.f32.mrb[0].mxu0
  %v1778 = vadd.f32 %v1622, %v1777
  %v1779 = vpop.f32.mrb[0].mxu0
  %v1780 = vadd.f32 %v1626, %v1779
  %1781 = vmatprep.mubr.bf16.mxu0 0
  %1782 = vmatmul.mubr.bf16.gmra.mrb[0].mxu0 %v1589
  %v1783 = vpop.f32.mrb[0].mxu0
  %v1784 = vadd.f32 %v1622, %v1783
  %v1785 = vpop.f32.mrb[0].mxu0
  %v1786 = vadd.f32 %v1626, %v1785
  %v1787 = vpop.f32.mrb[0].mxu0
  %v1788 = vadd.f32 %v1622, %v1787
  %v1789 = vpop.f32.mrb[0].mxu0
  %v1790 = vadd.f32 %v1626, %v1789
  %1791 = vmatprep.mubr.bf16.mxu0 0
  %1792 = vmatmul.mubr.bf16.gmra.mrb[0].mxu0 %v1590
  %v1793 = vpop.f32.mrb[0].mxu0
  %v1794 = vadd.f32 %v1622, %v1793
  %v1795 = vpop.f32.mrb[0].mxu0
  %v1796 = vadd.f32 %v1626, %v1795
  %v1797 = vpop.f32.mrb[0].mxu0
  %v1798 = vadd.f32 %v1622, %v1797
  %v1799 = vpop.f32.mrb[0].mxu0
  %v1800 = vadd.f32 %v1626, %v1799
  %1801 = vmatprep.mubr.bf16.mxu0 0
  %1802 = vmatmul.mubr.bf16.gmra.mrb[0].mxu0 %v1591
  %v1803 = vpop.f32.mrb[0].mxu0
  %v1804 = vadd.f32 %v1622, %v1803
  %v1805 = vpop.f32.mrb[0].mxu0
  %v1806 = vadd.f32 %v1626, %v1805
  %v1807 = vpop.f32.mrb[0].mxu0
  %v1808 = vadd.f32 %v1622, %v1807
  %v1809 = vpop.f32.mrb[0].mxu0
  %v1810 = vadd.f32 %v1626, %v1809
  %1811 = vmatprep.mubr.bf16.mxu0 0
  %1812 = vmatmul.mubr.bf16.gmra.mrb[0].mxu0 %v1592
  %v1813 = vpop.f32.mrb[0].mxu0
  %v1814 = vadd.f32 %v1622, %v1813
  %v1815 = vpop.f32.mrb[0].mxu0
  %v1816 = vadd.f32 %v1626, %v1815
  %v1817 = vpop.f32.mrb[0].mxu0
  %v1818 = vadd.f32 %v1622, %v1817
  %v1819 = vpop.f32.mrb[0].mxu0
  %v1820 = vadd.f32 %v1626, %v1819
  %1821 = vmatprep.mubr.bf16.mxu0 0
  %1822 = vmatmul.mubr.bf16.gmra.mrb[0].mxu0 %v1593
  %v1823 = vpop.f32.mrb[0].mxu0
  %v1824 = vadd.f32 %v1622, %v1823
  %v1825 = vpop.f32.mrb[0].mxu0
  %v1826 = vadd.f32 %v1626, %v1825
  %v1827 = vpop.f32.mrb[0].mxu0
  %v1828 = vadd.f32 %v1622, %v1827
  %v1829 = vpop.f32.mrb[0].mxu0
  %v1830 = vadd.f32 %v1626, %v1829
  %1831 = vmatprep.mubr.bf16.mxu0 0
  %1832 = vmatmul.mubr.bf16.gmra.mrb[0].mxu0 %v1594
  %v1833 = vpop.f32.mrb[0].mxu0
  %v1834 = vadd.f32 %v1622, %v1833
  %v1835 = vpop.f32.mrb[0].mxu0
  %v1836 = vadd.f32 %v1626, %v1835
  %v1837 = vpop.f32.mrb[0].mxu0
  %v1838 = vadd.f32 %v1622, %v1837
  %v1839 = vpop.f32.mrb[0].mxu0
  %v1840 = vadd.f32 %v1626, %v1839
  %1841 = vmatprep.mubr.bf16.mxu0 0
  %1842 = vmatmul.mubr.bf16.gmra.mrb[0].mxu0 %v1595
  %v1843 = vpop.f32.mrb[0].mxu0
  %v1844 = vadd.f32 %v1622, %v1843
  %v1845 = vpop.f32.mrb[0].mxu0
  %v1846 = vadd.f32 %v1626, %v1845
  %v1847 = vpop.f32.mrb[0].mxu0
  %v1848 = vadd.f32 %v1622, %v1847
  %v1849 = vpop.f32.mrb[0].mxu0
  %v1850 = vadd.f32 %v1626, %v1849
  %1851 = vmatprep.mubr.bf16.mxu0 0
  %1852 = vmatmul.mubr.bf16.gmra.mrb[0].mxu0 %v1596
  %v1853 = vpop.f32.mrb[0].mxu0
  %v1854 = vadd.f32 %v1622, %v1853
  %v1855 = vpop.f32.mrb[0].mxu0
  %v1856 = vadd.f32 %v1626, %v1855
  %v1857 = vpop.f32.mrb[0].mxu0
  %v1858 = vadd.f32 %v1622, %v1857
  %v1859 = vpop.f32.mrb[0].mxu0
  %v1860 = vadd.f32 %v1626, %v1859
  %1861 = vmatprep.mubr.bf16.mxu0 0
  %1862 = vmatmul.mubr.bf16.gmra.mrb[0].mxu0 %v1597
  %v1863 = vpop.f32.mrb[0].mxu0
  %v1864 = vadd.f32 %v1622, %v1863
  %v1865 = vpop.f32.mrb[0].mxu0
  %v1866 = vadd.f32 %v1626, %v1865
  %v1867 = vpop.f32.mrb[0].mxu0
  %v1868 = vadd.f32 %v1622, %v1867
  %v1869 = vpop.f32.mrb[0].mxu0
  %v1870 = vadd.f32 %v1626, %v1869
  %1871 = vmatprep.mubr.bf16.mxu0 0
  %1872 = vmatmul.mubr.bf16.gmra.mrb[0].mxu0 %v1598
  %v1873 = vpop.f32.mrb[0].mxu0
  %v1874 = vadd.f32 %v1622, %v1873
  %v1875 = vpop.f32.mrb[0].mxu0
  %v1876 = vadd.f32 %v1626, %v1875
  %v1877 = vpop.f32.mrb[0].mxu0
  %v1878 = vadd.f32 %v1622, %v1877
  %v1879 = vpop.f32.mrb[0].mxu0
  %v1880 = vadd.f32 %v1626, %v1879
  %1881 = vmatprep.mubr.bf16.mxu0 0
  %1882 = vmatmul.mubr.bf16.gmra.mrb[0].mxu0 %v1599
  %v1883 = vpop.f32.mrb[0].mxu0
  %v1884 = vadd.f32 %v1622, %v1883
  %v1885 = vpop.f32.mrb[0].mxu0
  %v1886 = vadd.f32 %v1626, %v1885
  %v1887 = vpop.f32.mrb[0].mxu0
  %v1888 = vadd.f32 %v1622, %v1887
  %v1889 = vpop.f32.mrb[0].mxu0
  %v1890 = vadd.f32 %v1626, %v1889
  %1891 = vmatprep.mubr.bf16.mxu0 0
  %1892 = vmatmul.mubr.bf16.gmra.mrb[0].mxu0 %v1600
  %v1893 = vpop.f32.mrb[0].mxu0
  %v1894 = vadd.f32 %v1622, %v1893
  %v1895 = vpop.f32.mrb[0].mxu0
  %v1896 = vadd.f32 %v1626, %v1895
  %v1897 = vpop.f32.mrb[0].mxu0
  %v1898 = vadd.f32 %v1622, %v1897
  %v1899 = vpop.f32.mrb[0].mxu0
  %v1900 = vadd.f32 %v1626, %v1899
  %1901 = vdwg.mxu0
  %vm1902 = vcmp.gt.bf16.partialorder %v20, 0
  %vm1903 = vcmp.gt.bf16.partialorder %v21, 0
  %vm1904 = vcmp.gt.bf16.partialorder %v22, 0
  %vm1905 = vcmp.gt.bf16.partialorder %v23, 0
  %vm1906 = vcmp.gt.bf16.partialorder %v24, 0
  %vm1907 = vcmp.gt.bf16.partialorder %v25, 0
  %vm1908 = vcmp.gt.bf16.partialorder %v26, 0
  %vm1909 = vcmp.gt.bf16.partialorder %v27, 0
  %vm1910 = vcmp.gt.bf16.partialorder %v28, 0
  %vm1911 = vcmp.gt.bf16.partialorder %v29, 0
  %vm1912 = vcmp.gt.bf16.partialorder %v30, 0
  %vm1913 = vcmp.gt.bf16.partialorder %v31, 0
  %vm1914 = vcmp.gt.bf16.partialorder %v32, 0
  %vm1915 = vcmp.gt.bf16.partialorder %v33, 0
  %vm1916 = vcmp.gt.bf16.partialorder %v34, 0
  %vm1917 = vcmp.gt.bf16.partialorder %v35, 0
  %vm1918 = vcmp.gt.bf16.partialorder %v36, 0
  %vm1919 = vcmp.gt.bf16.partialorder %v37, 0
  %vm1920 = vcmp.gt.bf16.partialorder %v38, 0
  %vm1921 = vcmp.gt.bf16.partialorder %v39, 0
  %vm1922 = vcmp.gt.bf16.partialorder %v40, 0
  %vm1923 = vcmp.gt.bf16.partialorder %v41, 0
  %vm1924 = vcmp.gt.bf16.partialorder %v42, 0
  %vm1925 = vcmp.gt.bf16.partialorder %v43, 0
  %vm1926 = vcmp.gt.bf16.partialorder %v44, 0
  %vm1927 = vcmp.gt.bf16.partialorder %v45, 0
  %vm1928 = vcmp.gt.bf16.partialorder %v46, 0
  %vm1929 = vcmp.gt.bf16.partialorder %v47, 0
  %vm1930 = vcmp.gt.bf16.partialorder %v48, 0
  %vm1931 = vcmp.gt.bf16.partialorder %v49, 0
  %vm1932 = vcmp.gt.bf16.partialorder %v50, 0
  %vm1933 = vcmp.gt.bf16.partialorder %v51, 0
  %v1934 = vsub.f32 0.0, %v1744
  %v1935 = vsub.f32 0.0, %v1746
  %v1936 = vsub.f32 0.0, %v1748
  %v1937 = vsub.f32 0.0, %v1750
  %v1938 = vsub.f32 0.0, %v1754
  %v1939 = vsub.f32 0.0, %v1756
  %v1940 = vsub.f32 0.0, %v1758
  %v1941 = vsub.f32 0.0, %v1760
  %v1942 = vsub.f32 0.0, %v1764
  %v1943 = vsub.f32 0.0, %v1766
  %v1944 = vsub.f32 0.0, %v1768
  %v1945 = vsub.f32 0.0, %v1770
  %v1946 = vsub.f32 0.0, %v1774
  %v1947 = vsub.f32 0.0, %v1776
  %v1948 = vsub.f32 0.0, %v1778
  %v1949 = vsub.f32 0.0, %v1780
  %v1950 = vsub.f32 0.0, %v1784
  %v1951 = vsub.f32 0.0, %v1786
  %v1952 = vsub.f32 0.0, %v1788
  %v1953 = vsub.f32 0.0, %v1790
  %v1954 = vsub.f32 0.0, %v1794
  %v1955 = vsub.f32 0.0, %v1796
  %v1956 = vsub.f32 0.0, %v1798
  %v1957 = vsub.f32 0.0, %v1800
  %v1958 = vsub.f32 0.0, %v1804
  %v1959 = vsub.f32 0.0, %v1806
  %v1960 = vsub.f32 0.0, %v1808
  %v1961 = vsub.f32 0.0, %v1810
  %v1962 = vsub.f32 0.0, %v1814
  %v1963 = vsub.f32 0.0, %v1816
  %v1964 = vsub.f32 0.0, %v1818
  %v1965 = vsub.f32 0.0, %v1820
  %v1966 = vsub.f32 0.0, %v1824
  %v1967 = vsub.f32 0.0, %v1826
  %v1968 = vsub.f32 0.0, %v1828
  %v1969 = vsub.f32 0.0, %v1830
  %v1970 = vsub.f32 0.0, %v1834
  %v1971 = vsub.f32 0.0, %v1836
  %v1972 = vsub.f32 0.0, %v1838
  %v1973 = vsub.f32 0.0, %v1840
  %v1974 = vsub.f32 0.0, %v1844
  %v1975 = vsub.f32 0.0, %v1846
  %v1976 = vsub.f32 0.0, %v1848
  %v1977 = vsub.f32 0.0, %v1850
  %v1978 = vsub.f32 0.0, %v1854
  %v1979 = vsub.f32 0.0, %v1856
  %v1980 = vsub.f32 0.0, %v1858
  %v1981 = vsub.f32 0.0, %v1860
  %v1982 = vsub.f32 0.0, %v1864
  %v1983 = vsub.f32 0.0, %v1866
  %v1984 = vsub.f32 0.0, %v1868
  %v1985 = vsub.f32 0.0, %v1870
  %v1986 = vsub.f32 0.0, %v1874
  %v1987 = vsub.f32 0.0, %v1876
  %v1988 = vsub.f32 0.0, %v1878
  %v1989 = vsub.f32 0.0, %v1880
  %v1990 = vsub.f32 0.0, %v1884
  %v1991 = vsub.f32 0.0, %v1886
  %v1992 = vsub.f32 0.0, %v1888
  %v1993 = vsub.f32 0.0, %v1890
  %v1994 = vsub.f32 0.0, %v1894
  %v1995 = vsub.f32 0.0, %v1896
  %v1996 = vsub.f32 0.0, %v1898
  %v1997 = vsub.f32 0.0, %v1900
  %v1998 = vsel %vm1902, 65537, 0
  %v1999 = vsel %vm1903, 65537, 0
  %v2000 = vsel %vm1904, 65537, 0
  %v2001 = vsel %vm1905, 65537, 0
  %v2002 = vsel %vm1906, 65537, 0
  %v2003 = vsel %vm1907, 65537, 0
  %v2004 = vsel %vm1908, 65537, 0
  %v2005 = vsel %vm1909, 65537, 0
  %v2006 = vsel %vm1910, 65537, 0
  %v2007 = vsel %vm1911, 65537, 0
  %v2008 = vsel %vm1912, 65537, 0
  %v2009 = vsel %vm1913, 65537, 0
  %v2010 = vsel %vm1914, 65537, 0
  %v2011 = vsel %vm1915, 65537, 0
  %v2012 = vsel %vm1916, 65537, 0
  %v2013 = vsel %vm1917, 65537, 0
  %v2014 = vsel %vm1918, 65537, 0
  %v2015 = vsel %vm1919, 65537, 0
  %v2016 = vsel %vm1920, 65537, 0
  %v2017 = vsel %vm1921, 65537, 0
  %v2018 = vsel %vm1922, 65537, 0
  %v2019 = vsel %vm1923, 65537, 0
  %v2020 = vsel %vm1924, 65537, 0
  %v2021 = vsel %vm1925, 65537, 0
  %v2022 = vsel %vm1926, 65537, 0
  %v2023 = vsel %vm1927, 65537, 0
  %v2024 = vsel %vm1928, 65537, 0
  %v2025 = vsel %vm1929, 65537, 0
  %v2026 = vsel %vm1930, 65537, 0
  %v2027 = vsel %vm1931, 65537, 0
  %v2028 = vsel %vm1932, 65537, 0
  %v2029 = vsel %vm1933, 65537, 0
  %v2030 = vunpack.c.l.b16 %v1998
  %v2031 = vunpack.c.h.b16 %v1998
  %v2032 = vunpack.c.l.b16 %v1999
  %v2033 = vunpack.c.h.b16 %v1999
  %v2034 = vunpack.c.l.b16 %v2000
  %v2035 = vunpack.c.h.b16 %v2000
  %v2036 = vunpack.c.l.b16 %v2001
  %v2037 = vunpack.c.h.b16 %v2001
  %v2038 = vunpack.c.l.b16 %v2002
  %v2039 = vunpack.c.h.b16 %v2002
  %v2040 = vunpack.c.l.b16 %v2003
  %v2041 = vunpack.c.h.b16 %v2003
  %v2042 = vunpack.c.l.b16 %v2004
  %v2043 = vunpack.c.h.b16 %v2004
  %v2044 = vunpack.c.l.b16 %v2005
  %v2045 = vunpack.c.h.b16 %v2005
  %v2046 = vunpack.c.l.b16 %v2006
  %v2047 = vunpack.c.h.b16 %v2006
  %v2048 = vunpack.c.l.b16 %v2007
  %v2049 = vunpack.c.h.b16 %v2007
  %v2050 = vunpack.c.l.b16 %v2008
  %v2051 = vunpack.c.h.b16 %v2008
  %v2052 = vunpack.c.l.b16 %v2009
  %v2053 = vunpack.c.h.b16 %v2009
  %v2054 = vunpack.c.l.b16 %v2010
  %v2055 = vunpack.c.h.b16 %v2010
  %v2056 = vunpack.c.l.b16 %v2011
  %v2057 = vunpack.c.h.b16 %v2011
  %v2058 = vunpack.c.l.b16 %v2012
  %v2059 = vunpack.c.h.b16 %v2012
  %v2060 = vunpack.c.l.b16 %v2013
  %v2061 = vunpack.c.h.b16 %v2013
  %v2062 = vunpack.c.l.b16 %v2014
  %v2063 = vunpack.c.h.b16 %v2014
  %v2064 = vunpack.c.l.b16 %v2015
  %v2065 = vunpack.c.h.b16 %v2015
  %v2066 = vunpack.c.l.b16 %v2016
  %v2067 = vunpack.c.h.b16 %v2016
  %v2068 = vunpack.c.l.b16 %v2017
  %v2069 = vunpack.c.h.b16 %v2017
  %v2070 = vunpack.c.l.b16 %v2018
  %v2071 = vunpack.c.h.b16 %v2018
  %v2072 = vunpack.c.l.b16 %v2019
  %v2073 = vunpack.c.h.b16 %v2019
  %v2074 = vunpack.c.l.b16 %v2020
  %v2075 = vunpack.c.h.b16 %v2020
  %v2076 = vunpack.c.l.b16 %v2021
  %v2077 = vunpack.c.h.b16 %v2021
  %v2078 = vunpack.c.l.b16 %v2022
  %v2079 = vunpack.c.h.b16 %v2022
  %v2080 = vunpack.c.l.b16 %v2023
  %v2081 = vunpack.c.h.b16 %v2023
  %v2082 = vunpack.c.l.b16 %v2024
  %v2083 = vunpack.c.h.b16 %v2024
  %v2084 = vunpack.c.l.b16 %v2025
  %v2085 = vunpack.c.h.b16 %v2025
  %v2086 = vunpack.c.l.b16 %v2026
  %v2087 = vunpack.c.h.b16 %v2026
  %v2088 = vunpack.c.l.b16 %v2027
  %v2089 = vunpack.c.h.b16 %v2027
  %v2090 = vunpack.c.l.b16 %v2028
  %v2091 = vunpack.c.h.b16 %v2028
  %v2092 = vunpack.c.l.b16 %v2029
  %v2093 = vunpack.c.h.b16 %v2029
  %vm2094 = vcmp.ne.s32.totalorder %v2030, 0
  %vm2095 = vcmp.ne.s32.totalorder %v2031, 0
  %vm2096 = vcmp.ne.s32.totalorder %v2032, 0
  %vm2097 = vcmp.ne.s32.totalorder %v2033, 0
  %vm2098 = vcmp.ne.s32.totalorder %v2034, 0
  %vm2099 = vcmp.ne.s32.totalorder %v2035, 0
  %vm2100 = vcmp.ne.s32.totalorder %v2036, 0
  %vm2101 = vcmp.ne.s32.totalorder %v2037, 0
  %vm2102 = vcmp.ne.s32.totalorder %v2038, 0
  %vm2103 = vcmp.ne.s32.totalorder %v2039, 0
  %vm2104 = vcmp.ne.s32.totalorder %v2040, 0
  %vm2105 = vcmp.ne.s32.totalorder %v2041, 0
  %vm2106 = vcmp.ne.s32.totalorder %v2042, 0
  %vm2107 = vcmp.ne.s32.totalorder %v2043, 0
  %vm2108 = vcmp.ne.s32.totalorder %v2044, 0
  %vm2109 = vcmp.ne.s32.totalorder %v2045, 0
  %vm2110 = vcmp.ne.s32.totalorder %v2046, 0
  %vm2111 = vcmp.ne.s32.totalorder %v2047, 0
  %vm2112 = vcmp.ne.s32.totalorder %v2048, 0
  %vm2113 = vcmp.ne.s32.totalorder %v2049, 0
  %vm2114 = vcmp.ne.s32.totalorder %v2050, 0
  %vm2115 = vcmp.ne.s32.totalorder %v2051, 0
  %vm2116 = vcmp.ne.s32.totalorder %v2052, 0
  %vm2117 = vcmp.ne.s32.totalorder %v2053, 0
  %vm2118 = vcmp.ne.s32.totalorder %v2054, 0
  %vm2119 = vcmp.ne.s32.totalorder %v2055, 0
  %vm2120 = vcmp.ne.s32.totalorder %v2056, 0
  %vm2121 = vcmp.ne.s32.totalorder %v2057, 0
  %vm2122 = vcmp.ne.s32.totalorder %v2058, 0
  %vm2123 = vcmp.ne.s32.totalorder %v2059, 0
  %vm2124 = vcmp.ne.s32.totalorder %v2060, 0
  %vm2125 = vcmp.ne.s32.totalorder %v2061, 0
  %vm2126 = vcmp.ne.s32.totalorder %v2062, 0
  %vm2127 = vcmp.ne.s32.totalorder %v2063, 0
  %vm2128 = vcmp.ne.s32.totalorder %v2064, 0
  %vm2129 = vcmp.ne.s32.totalorder %v2065, 0
  %vm2130 = vcmp.ne.s32.totalorder %v2066, 0
  %vm2131 = vcmp.ne.s32.totalorder %v2067, 0
  %vm2132 = vcmp.ne.s32.totalorder %v2068, 0
  %vm2133 = vcmp.ne.s32.totalorder %v2069, 0
  %vm2134 = vcmp.ne.s32.totalorder %v2070, 0
  %vm2135 = vcmp.ne.s32.totalorder %v2071, 0
  %vm2136 = vcmp.ne.s32.totalorder %v2072, 0
  %vm2137 = vcmp.ne.s32.totalorder %v2073, 0
  %vm2138 = vcmp.ne.s32.totalorder %v2074, 0
  %vm2139 = vcmp.ne.s32.totalorder %v2075, 0
  %vm2140 = vcmp.ne.s32.totalorder %v2076, 0
  %vm2141 = vcmp.ne.s32.totalorder %v2077, 0
  %vm2142 = vcmp.ne.s32.totalorder %v2078, 0
  %vm2143 = vcmp.ne.s32.totalorder %v2079, 0
  %vm2144 = vcmp.ne.s32.totalorder %v2080, 0
  %vm2145 = vcmp.ne.s32.totalorder %v2081, 0
  %vm2146 = vcmp.ne.s32.totalorder %v2082, 0
  %vm2147 = vcmp.ne.s32.totalorder %v2083, 0
  %vm2148 = vcmp.ne.s32.totalorder %v2084, 0
  %vm2149 = vcmp.ne.s32.totalorder %v2085, 0
  %vm2150 = vcmp.ne.s32.totalorder %v2086, 0
  %vm2151 = vcmp.ne.s32.totalorder %v2087, 0
  %vm2152 = vcmp.ne.s32.totalorder %v2088, 0
  %vm2153 = vcmp.ne.s32.totalorder %v2089, 0
  %vm2154 = vcmp.ne.s32.totalorder %v2090, 0
  %vm2155 = vcmp.ne.s32.totalorder %v2091, 0
  %vm2156 = vcmp.ne.s32.totalorder %v2092, 0
  %vm2157 = vcmp.ne.s32.totalorder %v2093, 0
  %v2158 = vsel %vm2094, %v1934, %v1744
  %v2159 = vsel %vm2095, %v1935, %v1746
  %v2160 = vsel %vm2096, %v1936, %v1748
  %v2161 = vsel %vm2097, %v1937, %v1750
  %v2162 = vsel %vm2098, %v1938, %v1754
  %v2163 = vsel %vm2099, %v1939, %v1756
  %v2164 = vsel %vm2100, %v1940, %v1758
  %v2165 = vsel %vm2101, %v1941, %v1760
  %v2166 = vsel %vm2102, %v1942, %v1764
  %v2167 = vsel %vm2103, %v1943, %v1766
  %v2168 = vsel %vm2104, %v1944, %v1768
  %v2169 = vsel %vm2105, %v1945, %v1770
  %v2170 = vsel %vm2106, %v1946, %v1774
  %v2171 = vsel %vm2107, %v1947, %v1776
  %v2172 = vsel %vm2108, %v1948, %v1778
  %v2173 = vsel %vm2109, %v1949, %v1780
  %v2174 = vsel %vm2110, %v1950, %v1784
  %v2175 = vsel %vm2111, %v1951, %v1786
  %v2176 = vsel %vm2112, %v1952, %v1788
  %v2177 = vsel %vm2113, %v1953, %v1790
  %v2178 = vsel %vm2114, %v1954, %v1794
  %v2179 = vsel %vm2115, %v1955, %v1796
  %v2180 = vsel %vm2116, %v1956, %v1798
  %v2181 = vsel %vm2117, %v1957, %v1800
  %v2182 = vsel %vm2118, %v1958, %v1804
  %v2183 = vsel %vm2119, %v1959, %v1806
  %v2184 = vsel %vm2120, %v1960, %v1808
  %v2185 = vsel %vm2121, %v1961, %v1810
  %v2186 = vsel %vm2122, %v1962, %v1814
  %v2187 = vsel %vm2123, %v1963, %v1816
  %v2188 = vsel %vm2124, %v1964, %v1818
  %v2189 = vsel %vm2125, %v1965, %v1820
  %v2190 = vsel %vm2126, %v1966, %v1824
  %v2191 = vsel %vm2127, %v1967, %v1826
  %v2192 = vsel %vm2128, %v1968, %v1828
  %v2193 = vsel %vm2129, %v1969, %v1830
  %v2194 = vsel %vm2130, %v1970, %v1834
  %v2195 = vsel %vm2131, %v1971, %v1836
  %v2196 = vsel %vm2132, %v1972, %v1838
  %v2197 = vsel %vm2133, %v1973, %v1840
  %v2198 = vsel %vm2134, %v1974, %v1844
  %v2199 = vsel %vm2135, %v1975, %v1846
  %v2200 = vsel %vm2136, %v1976, %v1848
  %v2201 = vsel %vm2137, %v1977, %v1850
  %v2202 = vsel %vm2138, %v1978, %v1854
  %v2203 = vsel %vm2139, %v1979, %v1856
  %v2204 = vsel %vm2140, %v1980, %v1858
  %v2205 = vsel %vm2141, %v1981, %v1860
  %v2206 = vsel %vm2142, %v1982, %v1864
  %v2207 = vsel %vm2143, %v1983, %v1866
  %v2208 = vsel %vm2144, %v1984, %v1868
  %v2209 = vsel %vm2145, %v1985, %v1870
  %v2210 = vsel %vm2146, %v1986, %v1874
  %v2211 = vsel %vm2147, %v1987, %v1876
  %v2212 = vsel %vm2148, %v1988, %v1878
  %v2213 = vsel %vm2149, %v1989, %v1880
  %v2214 = vsel %vm2150, %v1990, %v1884
  %v2215 = vsel %vm2151, %v1991, %v1886
  %v2216 = vsel %vm2152, %v1992, %v1888
  %v2217 = vsel %vm2153, %v1993, %v1890
  %v2218 = vsel %vm2154, %v1994, %v1894
  %v2219 = vsel %vm2155, %v1995, %v1896
  %v2220 = vsel %vm2156, %v1996, %v1898
  %v2221 = vsel %vm2157, %v1997, %v1900
  %v2222 = vmax.f32 %v2158, 0.0
  %v2223 = vmax.f32 %v2159, 0.0
  %v2224 = vmax.f32 %v2160, 0.0
  %v2225 = vmax.f32 %v2161, 0.0
  %v2226 = vmax.f32 %v2162, 0.0
  %v2227 = vmax.f32 %v2163, 0.0
  %v2228 = vmax.f32 %v2164, 0.0
  %v2229 = vmax.f32 %v2165, 0.0
  %v2230 = vmax.f32 %v2166, 0.0
  %v2231 = vmax.f32 %v2167, 0.0
  %v2232 = vmax.f32 %v2168, 0.0
  %v2233 = vmax.f32 %v2169, 0.0
  %v2234 = vmax.f32 %v2170, 0.0
  %v2235 = vmax.f32 %v2171, 0.0
  %v2236 = vmax.f32 %v2172, 0.0
  %v2237 = vmax.f32 %v2173, 0.0
  %v2238 = vmax.f32 %v2174, 0.0
  %v2239 = vmax.f32 %v2175, 0.0
  %v2240 = vmax.f32 %v2176, 0.0
  %v2241 = vmax.f32 %v2177, 0.0
  %v2242 = vmax.f32 %v2178, 0.0
  %v2243 = vmax.f32 %v2179, 0.0
  %v2244 = vmax.f32 %v2180, 0.0
  %v2245 = vmax.f32 %v2181, 0.0
  %v2246 = vmax.f32 %v2182, 0.0
  %v2247 = vmax.f32 %v2183, 0.0
  %v2248 = vmax.f32 %v2184, 0.0
  %v2249 = vmax.f32 %v2185, 0.0
  %v2250 = vmax.f32 %v2186, 0.0
  %v2251 = vmax.f32 %v2187, 0.0
  %v2252 = vmax.f32 %v2188, 0.0
  %v2253 = vmax.f32 %v2189, 0.0
  %v2254 = vmax.f32 %v2190, 0.0
  %v2255 = vmax.f32 %v2191, 0.0
  %v2256 = vmax.f32 %v2192, 0.0
  %v2257 = vmax.f32 %v2193, 0.0
  %v2258 = vmax.f32 %v2194, 0.0
  %v2259 = vmax.f32 %v2195, 0.0
  %v2260 = vmax.f32 %v2196, 0.0
  %v2261 = vmax.f32 %v2197, 0.0
  %v2262 = vmax.f32 %v2198, 0.0
  %v2263 = vmax.f32 %v2199, 0.0
  %v2264 = vmax.f32 %v2200, 0.0
  %v2265 = vmax.f32 %v2201, 0.0
  %v2266 = vmax.f32 %v2202, 0.0
  %v2267 = vmax.f32 %v2203, 0.0
  %v2268 = vmax.f32 %v2204, 0.0
  %v2269 = vmax.f32 %v2205, 0.0
  %v2270 = vmax.f32 %v2206, 0.0
  %v2271 = vmax.f32 %v2207, 0.0
  %v2272 = vmax.f32 %v2208, 0.0
  %v2273 = vmax.f32 %v2209, 0.0
  %v2274 = vmax.f32 %v2210, 0.0
  %v2275 = vmax.f32 %v2211, 0.0
  %v2276 = vmax.f32 %v2212, 0.0
  %v2277 = vmax.f32 %v2213, 0.0
  %v2278 = vmax.f32 %v2214, 0.0
  %v2279 = vmax.f32 %v2215, 0.0
  %v2280 = vmax.f32 %v2216, 0.0
  %v2281 = vmax.f32 %v2217, 0.0
  %v2282 = vmax.f32 %v2218, 0.0
  %v2283 = vmax.f32 %v2219, 0.0
  %v2284 = vmax.f32 %v2220, 0.0
  %v2285 = vmax.f32 %v2221, 0.0
  %vm2286 = vcmp.ne.f32.partialorder %v2158, %v2158
  %vm2287 = vcmp.ne.f32.partialorder %v2159, %v2159
  %vm2288 = vcmp.ne.f32.partialorder %v2160, %v2160
  %vm2289 = vcmp.ne.f32.partialorder %v2161, %v2161
  %vm2290 = vcmp.ne.f32.partialorder %v2162, %v2162
  %vm2291 = vcmp.ne.f32.partialorder %v2163, %v2163
  %vm2292 = vcmp.ne.f32.partialorder %v2164, %v2164
  %vm2293 = vcmp.ne.f32.partialorder %v2165, %v2165
  %vm2294 = vcmp.ne.f32.partialorder %v2166, %v2166
  %vm2295 = vcmp.ne.f32.partialorder %v2167, %v2167
  %vm2296 = vcmp.ne.f32.partialorder %v2168, %v2168
  %vm2297 = vcmp.ne.f32.partialorder %v2169, %v2169
  %vm2298 = vcmp.ne.f32.partialorder %v2170, %v2170
  %vm2299 = vcmp.ne.f32.partialorder %v2171, %v2171
  %vm2300 = vcmp.ne.f32.partialorder %v2172, %v2172
  %vm2301 = vcmp.ne.f32.partialorder %v2173, %v2173
  %vm2302 = vcmp.ne.f32.partialorder %v2174, %v2174
  %vm2303 = vcmp.ne.f32.partialorder %v2175, %v2175
  %vm2304 = vcmp.ne.f32.partialorder %v2176, %v2176
  %vm2305 = vcmp.ne.f32.partialorder %v2177, %v2177
  %vm2306 = vcmp.ne.f32.partialorder %v2178, %v2178
  %vm2307 = vcmp.ne.f32.partialorder %v2179, %v2179
  %vm2308 = vcmp.ne.f32.partialorder %v2180, %v2180
  %vm2309 = vcmp.ne.f32.partialorder %v2181, %v2181
  %vm2310 = vcmp.ne.f32.partialorder %v2182, %v2182
  %vm2311 = vcmp.ne.f32.partialorder %v2183, %v2183
  %vm2312 = vcmp.ne.f32.partialorder %v2184, %v2184
  %vm2313 = vcmp.ne.f32.partialorder %v2185, %v2185
  %vm2314 = vcmp.ne.f32.partialorder %v2186, %v2186
  %vm2315 = vcmp.ne.f32.partialorder %v2187, %v2187
  %vm2316 = vcmp.ne.f32.partialorder %v2188, %v2188
  %vm2317 = vcmp.ne.f32.partialorder %v2189, %v2189
  %vm2318 = vcmp.ne.f32.partialorder %v2190, %v2190
  %vm2319 = vcmp.ne.f32.partialorder %v2191, %v2191
  %vm2320 = vcmp.ne.f32.partialorder %v2192, %v2192
  %vm2321 = vcmp.ne.f32.partialorder %v2193, %v2193
  %vm2322 = vcmp.ne.f32.partialorder %v2194, %v2194
  %vm2323 = vcmp.ne.f32.partialorder %v2195, %v2195
  %vm2324 = vcmp.ne.f32.partialorder %v2196, %v2196
  %vm2325 = vcmp.ne.f32.partialorder %v2197, %v2197
  %vm2326 = vcmp.ne.f32.partialorder %v2198, %v2198
  %vm2327 = vcmp.ne.f32.partialorder %v2199, %v2199
  %vm2328 = vcmp.ne.f32.partialorder %v2200, %v2200
  %vm2329 = vcmp.ne.f32.partialorder %v2201, %v2201
  %vm2330 = vcmp.ne.f32.partialorder %v2202, %v2202
  %vm2331 = vcmp.ne.f32.partialorder %v2203, %v2203
  %vm2332 = vcmp.ne.f32.partialorder %v2204, %v2204
  %vm2333 = vcmp.ne.f32.partialorder %v2205, %v2205
  %vm2334 = vcmp.ne.f32.partialorder %v2206, %v2206
  %vm2335 = vcmp.ne.f32.partialorder %v2207, %v2207
  %vm2336 = vcmp.ne.f32.partialorder %v2208, %v2208
  %vm2337 = vcmp.ne.f32.partialorder %v2209, %v2209
  %vm2338 = vcmp.ne.f32.partialorder %v2210, %v2210
  %vm2339 = vcmp.ne.f32.partialorder %v2211, %v2211
  %vm2340 = vcmp.ne.f32.partialorder %v2212, %v2212
  %vm2341 = vcmp.ne.f32.partialorder %v2213, %v2213
  %vm2342 = vcmp.ne.f32.partialorder %v2214, %v2214
  %vm2343 = vcmp.ne.f32.partialorder %v2215, %v2215
  %vm2344 = vcmp.ne.f32.partialorder %v2216, %v2216
  %vm2345 = vcmp.ne.f32.partialorder %v2217, %v2217
  %vm2346 = vcmp.ne.f32.partialorder %v2218, %v2218
  %vm2347 = vcmp.ne.f32.partialorder %v2219, %v2219
  %vm2348 = vcmp.ne.f32.partialorder %v2220, %v2220
  %vm2349 = vcmp.ne.f32.partialorder %v2221, %v2221
  %v2350 = vadd.f32 %v2158, 0.0
  %v2351 = vadd.f32 %v2159, 0.0
  %v2352 = vadd.f32 %v2160, 0.0
  %v2353 = vadd.f32 %v2161, 0.0
  %v2354 = vadd.f32 %v2162, 0.0
  %v2355 = vadd.f32 %v2163, 0.0
  %v2356 = vadd.f32 %v2164, 0.0
  %v2357 = vadd.f32 %v2165, 0.0
  %v2358 = vadd.f32 %v2166, 0.0
  %v2359 = vadd.f32 %v2167, 0.0
  %v2360 = vadd.f32 %v2168, 0.0
  %v2361 = vadd.f32 %v2169, 0.0
  %v2362 = vadd.f32 %v2170, 0.0
  %v2363 = vadd.f32 %v2171, 0.0
  %v2364 = vadd.f32 %v2172, 0.0
  %v2365 = vadd.f32 %v2173, 0.0
  %v2366 = vadd.f32 %v2174, 0.0
  %v2367 = vadd.f32 %v2175, 0.0
  %v2368 = vadd.f32 %v2176, 0.0
  %v2369 = vadd.f32 %v2177, 0.0
  %v2370 = vadd.f32 %v2178, 0.0
  %v2371 = vadd.f32 %v2179, 0.0
  %v2372 = vadd.f32 %v2180, 0.0
  %v2373 = vadd.f32 %v2181, 0.0
  %v2374 = vadd.f32 %v2182, 0.0
  %v2375 = vadd.f32 %v2183, 0.0
  %v2376 = vadd.f32 %v2184, 0.0
  %v2377 = vadd.f32 %v2185, 0.0
  %v2378 = vadd.f32 %v2186, 0.0
  %v2379 = vadd.f32 %v2187, 0.0
  %v2380 = vadd.f32 %v2188, 0.0
  %v2381 = vadd.f32 %v2189, 0.0
  %v2382 = vadd.f32 %v2190, 0.0
  %v2383 = vadd.f32 %v2191, 0.0
  %v2384 = vadd.f32 %v2192, 0.0
  %v2385 = vadd.f32 %v2193, 0.0
  %v2386 = vadd.f32 %v2194, 0.0
  %v2387 = vadd.f32 %v2195, 0.0
  %v2388 = vadd.f32 %v2196, 0.0
  %v2389 = vadd.f32 %v2197, 0.0
  %v2390 = vadd.f32 %v2198, 0.0
  %v2391 = vadd.f32 %v2199, 0.0
  %v2392 = vadd.f32 %v2200, 0.0
  %v2393 = vadd.f32 %v2201, 0.0
  %v2394 = vadd.f32 %v2202, 0.0
  %v2395 = vadd.f32 %v2203, 0.0
  %v2396 = vadd.f32 %v2204, 0.0
  %v2397 = vadd.f32 %v2205, 0.0
  %v2398 = vadd.f32 %v2206, 0.0
  %v2399 = vadd.f32 %v2207, 0.0
  %v2400 = vadd.f32 %v2208, 0.0
  %v2401 = vadd.f32 %v2209, 0.0
  %v2402 = vadd.f32 %v2210, 0.0
  %v2403 = vadd.f32 %v2211, 0.0
  %v2404 = vadd.f32 %v2212, 0.0
  %v2405 = vadd.f32 %v2213, 0.0
  %v2406 = vadd.f32 %v2214, 0.0
  %v2407 = vadd.f32 %v2215, 0.0
  %v2408 = vadd.f32 %v2216, 0.0
  %v2409 = vadd.f32 %v2217, 0.0
  %v2410 = vadd.f32 %v2218, 0.0
  %v2411 = vadd.f32 %v2219, 0.0
  %v2412 = vadd.f32 %v2220, 0.0
  %v2413 = vadd.f32 %v2221, 0.0
  %v2414 = vand.u32 2147483647, %v2158
  %v2415 = vand.u32 2147483647, %v2159
  %v2416 = vand.u32 2147483647, %v2160
  %v2417 = vand.u32 2147483647, %v2161
  %v2418 = vand.u32 2147483647, %v2162
  %v2419 = vand.u32 2147483647, %v2163
  %v2420 = vand.u32 2147483647, %v2164
  %v2421 = vand.u32 2147483647, %v2165
  %v2422 = vand.u32 2147483647, %v2166
  %v2423 = vand.u32 2147483647, %v2167
  %v2424 = vand.u32 2147483647, %v2168
  %v2425 = vand.u32 2147483647, %v2169
  %v2426 = vand.u32 2147483647, %v2170
  %v2427 = vand.u32 2147483647, %v2171
  %v2428 = vand.u32 2147483647, %v2172
  %v2429 = vand.u32 2147483647, %v2173
  %v2430 = vand.u32 2147483647, %v2174
  %v2431 = vand.u32 2147483647, %v2175
  %v2432 = vand.u32 2147483647, %v2176
  %v2433 = vand.u32 2147483647, %v2177
  %v2434 = vand.u32 2147483647, %v2178
  %v2435 = vand.u32 2147483647, %v2179
  %v2436 = vand.u32 2147483647, %v2180
  %v2437 = vand.u32 2147483647, %v2181
  %v2438 = vand.u32 2147483647, %v2182
  %v2439 = vand.u32 2147483647, %v2183
  %v2440 = vand.u32 2147483647, %v2184
  %v2441 = vand.u32 2147483647, %v2185
  %v2442 = vand.u32 2147483647, %v2186
  %v2443 = vand.u32 2147483647, %v2187
  %v2444 = vand.u32 2147483647, %v2188
  %v2445 = vand.u32 2147483647, %v2189
  %v2446 = vand.u32 2147483647, %v2190
  %v2447 = vand.u32 2147483647, %v2191
  %v2448 = vand.u32 2147483647, %v2192
  %v2449 = vand.u32 2147483647, %v2193
  %v2450 = vand.u32 2147483647, %v2194
  %v2451 = vand.u32 2147483647, %v2195
  %v2452 = vand.u32 2147483647, %v2196
  %v2453 = vand.u32 2147483647, %v2197
  %v2454 = vand.u32 2147483647, %v2198
  %v2455 = vand.u32 2147483647, %v2199
  %v2456 = vand.u32 2147483647, %v2200
  %v2457 = vand.u32 2147483647, %v2201
  %v2458 = vand.u32 2147483647, %v2202
  %v2459 = vand.u32 2147483647, %v2203
  %v2460 = vand.u32 2147483647, %v2204
  %v2461 = vand.u32 2147483647, %v2205
  %v2462 = vand.u32 2147483647, %v2206
  %v2463 = vand.u32 2147483647, %v2207
  %v2464 = vand.u32 2147483647, %v2208
  %v2465 = vand.u32 2147483647, %v2209
  %v2466 = vand.u32 2147483647, %v2210
  %v2467 = vand.u32 2147483647, %v2211
  %v2468 = vand.u32 2147483647, %v2212
  %v2469 = vand.u32 2147483647, %v2213
  %v2470 = vand.u32 2147483647, %v2214
  %v2471 = vand.u32 2147483647, %v2215
  %v2472 = vand.u32 2147483647, %v2216
  %v2473 = vand.u32 2147483647, %v2217
  %v2474 = vand.u32 2147483647, %v2218
  %v2475 = vand.u32 2147483647, %v2219
  %v2476 = vand.u32 2147483647, %v2220
  %v2477 = vand.u32 2147483647, %v2221
  %v2478 = vsub.f32 0.0, %v2414
  %v2479 = vsub.f32 0.0, %v2415
  %v2480 = vsub.f32 0.0, %v2416
  %v2481 = vsub.f32 0.0, %v2417
  %v2482 = vsub.f32 0.0, %v2418
  %v2483 = vsub.f32 0.0, %v2419
  %v2484 = vsub.f32 0.0, %v2420
  %v2485 = vsub.f32 0.0, %v2421
  %v2486 = vsub.f32 0.0, %v2422
  %v2487 = vsub.f32 0.0, %v2423
  %v2488 = vsub.f32 0.0, %v2424
  %v2489 = vsub.f32 0.0, %v2425
  %v2490 = vsub.f32 0.0, %v2426
  %v2491 = vsub.f32 0.0, %v2427
  %v2492 = vsub.f32 0.0, %v2428
  %v2493 = vsub.f32 0.0, %v2429
  %v2494 = vsub.f32 0.0, %v2430
  %v2495 = vsub.f32 0.0, %v2431
  %v2496 = vsub.f32 0.0, %v2432
  %v2497 = vsub.f32 0.0, %v2433
  %v2498 = vsub.f32 0.0, %v2434
  %v2499 = vsub.f32 0.0, %v2435
  %v2500 = vsub.f32 0.0, %v2436
  %v2501 = vsub.f32 0.0, %v2437
  %v2502 = vsub.f32 0.0, %v2438
  %v2503 = vsub.f32 0.0, %v2439
  %v2504 = vsub.f32 0.0, %v2440
  %v2505 = vsub.f32 0.0, %v2441
  %v2506 = vsub.f32 0.0, %v2442
  %v2507 = vsub.f32 0.0, %v2443
  %v2508 = vsub.f32 0.0, %v2444
  %v2509 = vsub.f32 0.0, %v2445
  %v2510 = vsub.f32 0.0, %v2446
  %v2511 = vsub.f32 0.0, %v2447
  %v2512 = vsub.f32 0.0, %v2448
  %v2513 = vsub.f32 0.0, %v2449
  %v2514 = vsub.f32 0.0, %v2450
  %v2515 = vsub.f32 0.0, %v2451
  %v2516 = vsub.f32 0.0, %v2452
  %v2517 = vsub.f32 0.0, %v2453
  %v2518 = vsub.f32 0.0, %v2454
  %v2519 = vsub.f32 0.0, %v2455
  %v2520 = vsub.f32 0.0, %v2456
  %v2521 = vsub.f32 0.0, %v2457
  %v2522 = vsub.f32 0.0, %v2458
  %v2523 = vsub.f32 0.0, %v2459
  %v2524 = vsub.f32 0.0, %v2460
  %v2525 = vsub.f32 0.0, %v2461
  %v2526 = vsub.f32 0.0, %v2462
  %v2527 = vsub.f32 0.0, %v2463
  %v2528 = vsub.f32 0.0, %v2464
  %v2529 = vsub.f32 0.0, %v2465
  %v2530 = vsub.f32 0.0, %v2466
  %v2531 = vsub.f32 0.0, %v2467
  %v2532 = vsub.f32 0.0, %v2468
  %v2533 = vsub.f32 0.0, %v2469
  %v2534 = vsub.f32 0.0, %v2470
  %v2535 = vsub.f32 0.0, %v2471
  %v2536 = vsub.f32 0.0, %v2472
  %v2537 = vsub.f32 0.0, %v2473
  %v2538 = vsub.f32 0.0, %v2474
  %v2539 = vsub.f32 0.0, %v2475
  %v2540 = vsub.f32 0.0, %v2476
  %v2541 = vsub.f32 0.0, %v2477
  %v2542 = vmul.f32 %v2478, 1.442695
  %v2543 = vpow.pop %v2542
  %v2544 = vmul.f32 %v2479, 1.442695
  %v2545 = vpow.pop %v2544
  %v2546 = vmul.f32 %v2480, 1.442695
  %v2547 = vpow.pop %v2546
  %v2548 = vmul.f32 %v2481, 1.442695
  %v2549 = vpow.pop %v2548
  %v2550 = vmul.f32 %v2482, 1.442695
  %v2551 = vpow.pop %v2550
  %v2552 = vmul.f32 %v2483, 1.442695
  %v2553 = vpow.pop %v2552
  %v2554 = vmul.f32 %v2484, 1.442695
  %v2555 = vpow.pop %v2554
  %v2556 = vmul.f32 %v2485, 1.442695
  %v2557 = vpow.pop %v2556
  %v2558 = vmul.f32 %v2486, 1.442695
  %v2559 = vpow.pop %v2558
  %v2560 = vmul.f32 %v2487, 1.442695
  %v2561 = vpow.pop %v2560
  %v2562 = vmul.f32 %v2488, 1.442695
  %v2563 = vpow.pop %v2562
  %v2564 = vmul.f32 %v2489, 1.442695
  %v2565 = vpow.pop %v2564
  %v2566 = vmul.f32 %v2490, 1.442695
  %v2567 = vpow.pop %v2566
  %v2568 = vmul.f32 %v2491, 1.442695
  %v2569 = vpow.pop %v2568
  %v2570 = vmul.f32 %v2492, 1.442695
  %v2571 = vpow.pop %v2570
  %v2572 = vmul.f32 %v2493, 1.442695
  %v2573 = vpow.pop %v2572
  %v2574 = vmul.f32 %v2494, 1.442695
  %v2575 = vpow.pop %v2574
  %v2576 = vmul.f32 %v2495, 1.442695
  %v2577 = vpow.pop %v2576
  %v2578 = vmul.f32 %v2496, 1.442695
  %v2579 = vpow.pop %v2578
  %v2580 = vmul.f32 %v2497, 1.442695
  %v2581 = vpow.pop %v2580
  %v2582 = vmul.f32 %v2498, 1.442695
  %v2583 = vpow.pop %v2582
  %v2584 = vmul.f32 %v2499, 1.442695
  %v2585 = vpow.pop %v2584
  %v2586 = vmul.f32 %v2500, 1.442695
  %v2587 = vpow.pop %v2586
  %v2588 = vmul.f32 %v2501, 1.442695
  %v2589 = vpow.pop %v2588
  %v2590 = vmul.f32 %v2502, 1.442695
  %v2591 = vpow.pop %v2590
  %v2592 = vmul.f32 %v2503, 1.442695
  %v2593 = vpow.pop %v2592
  %v2594 = vmul.f32 %v2504, 1.442695
  %v2595 = vpow.pop %v2594
  %v2596 = vmul.f32 %v2505, 1.442695
  %v2597 = vpow.pop %v2596
  %v2598 = vmul.f32 %v2506, 1.442695
  %v2599 = vpow.pop %v2598
  %v2600 = vmul.f32 %v2507, 1.442695
  %v2601 = vpow.pop %v2600
  %v2602 = vmul.f32 %v2508, 1.442695
  %v2603 = vpow.pop %v2602
  %v2604 = vmul.f32 %v2509, 1.442695
  %v2605 = vpow.pop %v2604
  %v2606 = vmul.f32 %v2510, 1.442695
  %v2607 = vpow.pop %v2606
  %v2608 = vmul.f32 %v2511, 1.442695
  %v2609 = vpow.pop %v2608
  %v2610 = vmul.f32 %v2512, 1.442695
  %v2611 = vpow.pop %v2610
  %v2612 = vmul.f32 %v2513, 1.442695
  %v2613 = vpow.pop %v2612
  %v2614 = vmul.f32 %v2514, 1.442695
  %v2615 = vpow.pop %v2614
  %v2616 = vmul.f32 %v2515, 1.442695
  %v2617 = vpow.pop %v2616
  %v2618 = vmul.f32 %v2516, 1.442695
  %v2619 = vpow.pop %v2618
  %v2620 = vmul.f32 %v2517, 1.442695
  %v2621 = vpow.pop %v2620
  %v2622 = vmul.f32 %v2518, 1.442695
  %v2623 = vpow.pop %v2622
  %v2624 = vmul.f32 %v2519, 1.442695
  %v2625 = vpow.pop %v2624
  %v2626 = vmul.f32 %v2520, 1.442695
  %v2627 = vpow.pop %v2626
  %v2628 = vmul.f32 %v2521, 1.442695
  %v2629 = vpow.pop %v2628
  %v2630 = vmul.f32 %v2522, 1.442695
  %v2631 = vpow.pop %v2630
  %v2632 = vmul.f32 %v2523, 1.442695
  %v2633 = vpow.pop %v2632
  %v2634 = vmul.f32 %v2524, 1.442695
  %v2635 = vpow.pop %v2634
  %v2636 = vmul.f32 %v2525, 1.442695
  %v2637 = vpow.pop %v2636
  %v2638 = vmul.f32 %v2526, 1.442695
  %v2639 = vpow.pop %v2638
  %v2640 = vmul.f32 %v2527, 1.442695
  %v2641 = vpow.pop %v2640
  %v2642 = vmul.f32 %v2528, 1.442695
  %v2643 = vpow.pop %v2642
  %v2644 = vmul.f32 %v2529, 1.442695
  %v2645 = vpow.pop %v2644
  %v2646 = vmul.f32 %v2530, 1.442695
  %v2647 = vpow.pop %v2646
  %v2648 = vmul.f32 %v2531, 1.442695
  %v2649 = vpow.pop %v2648
  %v2650 = vmul.f32 %v2532, 1.442695
  %v2651 = vpow.pop %v2650
  %v2652 = vmul.f32 %v2533, 1.442695
  %v2653 = vpow.pop %v2652
  %v2654 = vmul.f32 %v2534, 1.442695
  %v2655 = vpow.pop %v2654
  %v2656 = vmul.f32 %v2535, 1.442695
  %v2657 = vpow.pop %v2656
  %v2658 = vmul.f32 %v2536, 1.442695
  %v2659 = vpow.pop %v2658
  %v2660 = vmul.f32 %v2537, 1.442695
  %v2661 = vpow.pop %v2660
  %v2662 = vmul.f32 %v2538, 1.442695
  %v2663 = vpow.pop %v2662
  %v2664 = vmul.f32 %v2539, 1.442695
  %v2665 = vpow.pop %v2664
  %v2666 = vmul.f32 %v2540, 1.442695
  %v2667 = vpow.pop %v2666
  %v2668 = vmul.f32 %v2541, 1.442695
  %v2669 = vpow.pop %v2668
  %v2670 = vadd.f32 %v2543, 1.0
  %v2671 = vlog2.pop %v2670
  %v2672 = vmul.f32 %v2671, 0.6931472
  %v2673 = vmul.f32 -0.5, %v2543
  %v2674 = vadd.f32 %v2673, 1.0
  %v2675 = vmul.f32 %v2674, %v2543
  %v2676 = vand.u32 2147483647, %v2543
  %vm2677 = vcmp.lt.f32.partialorder %v2676, 0.0004427343
  %v2678 = vsel %vm2677, %v2675, %v2672
  %v2679 = vadd.f32 %v2545, 1.0
  %v2680 = vlog2.pop %v2679
  %v2681 = vmul.f32 %v2680, 0.6931472
  %v2682 = vmul.f32 -0.5, %v2545
  %v2683 = vadd.f32 %v2682, 1.0
  %v2684 = vmul.f32 %v2683, %v2545
  %v2685 = vand.u32 2147483647, %v2545
  %vm2686 = vcmp.lt.f32.partialorder %v2685, 0.0004427343
  %v2687 = vsel %vm2686, %v2684, %v2681
  %v2688 = vadd.f32 %v2547, 1.0
  %v2689 = vlog2.pop %v2688
  %v2690 = vmul.f32 %v2689, 0.6931472
  %v2691 = vmul.f32 -0.5, %v2547
  %v2692 = vadd.f32 %v2691, 1.0
  %v2693 = vmul.f32 %v2692, %v2547
  %v2694 = vand.u32 2147483647, %v2547
  %vm2695 = vcmp.lt.f32.partialorder %v2694, 0.0004427343
  %v2696 = vsel %vm2695, %v2693, %v2690
  %v2697 = vadd.f32 %v2549, 1.0
  %v2698 = vlog2.pop %v2697
  %v2699 = vmul.f32 %v2698, 0.6931472
  %v2700 = vmul.f32 -0.5, %v2549
  %v2701 = vadd.f32 %v2700, 1.0
  %v2702 = vmul.f32 %v2701, %v2549
  %v2703 = vand.u32 2147483647, %v2549
  %vm2704 = vcmp.lt.f32.partialorder %v2703, 0.0004427343
  %v2705 = vsel %vm2704, %v2702, %v2699
  %v2706 = vadd.f32 %v2551, 1.0
  %v2707 = vlog2.pop %v2706
  %v2708 = vmul.f32 %v2707, 0.6931472
  %v2709 = vmul.f32 -0.5, %v2551
  %v2710 = vadd.f32 %v2709, 1.0
  %v2711 = vmul.f32 %v2710, %v2551
  %v2712 = vand.u32 2147483647, %v2551
  %vm2713 = vcmp.lt.f32.partialorder %v2712, 0.0004427343
  %v2714 = vsel %vm2713, %v2711, %v2708
  %v2715 = vadd.f32 %v2553, 1.0
  %v2716 = vlog2.pop %v2715
  %v2717 = vmul.f32 %v2716, 0.6931472
  %v2718 = vmul.f32 -0.5, %v2553
  %v2719 = vadd.f32 %v2718, 1.0
  %v2720 = vmul.f32 %v2719, %v2553
  %v2721 = vand.u32 2147483647, %v2553
  %vm2722 = vcmp.lt.f32.partialorder %v2721, 0.0004427343
  %v2723 = vsel %vm2722, %v2720, %v2717
  %v2724 = vadd.f32 %v2555, 1.0
  %v2725 = vlog2.pop %v2724
  %v2726 = vmul.f32 %v2725, 0.6931472
  %v2727 = vmul.f32 -0.5, %v2555
  %v2728 = vadd.f32 %v2727, 1.0
  %v2729 = vmul.f32 %v2728, %v2555
  %v2730 = vand.u32 2147483647, %v2555
  %vm2731 = vcmp.lt.f32.partialorder %v2730, 0.0004427343
  %v2732 = vsel %vm2731, %v2729, %v2726
  %v2733 = vadd.f32 %v2557, 1.0
  %v2734 = vlog2.pop %v2733
  %v2735 = vmul.f32 %v2734, 0.6931472
  %v2736 = vmul.f32 -0.5, %v2557
  %v2737 = vadd.f32 %v2736, 1.0
  %v2738 = vmul.f32 %v2737, %v2557
  %v2739 = vand.u32 2147483647, %v2557
  %vm2740 = vcmp.lt.f32.partialorder %v2739, 0.0004427343
  %v2741 = vsel %vm2740, %v2738, %v2735
  %v2742 = vadd.f32 %v2559, 1.0
  %v2743 = vlog2.pop %v2742
  %v2744 = vmul.f32 %v2743, 0.6931472
  %v2745 = vmul.f32 -0.5, %v2559
  %v2746 = vadd.f32 %v2745, 1.0
  %v2747 = vmul.f32 %v2746, %v2559
  %v2748 = vand.u32 2147483647, %v2559
  %vm2749 = vcmp.lt.f32.partialorder %v2748, 0.0004427343
  %v2750 = vsel %vm2749, %v2747, %v2744
  %v2751 = vadd.f32 %v2561, 1.0
  %v2752 = vlog2.pop %v2751
  %v2753 = vmul.f32 %v2752, 0.6931472
  %v2754 = vmul.f32 -0.5, %v2561
  %v2755 = vadd.f32 %v2754, 1.0
  %v2756 = vmul.f32 %v2755, %v2561
  %v2757 = vand.u32 2147483647, %v2561
  %vm2758 = vcmp.lt.f32.partialorder %v2757, 0.0004427343
  %v2759 = vsel %vm2758, %v2756, %v2753
  %v2760 = vadd.f32 %v2563, 1.0
  %v2761 = vlog2.pop %v2760
  %v2762 = vmul.f32 %v2761, 0.6931472
  %v2763 = vmul.f32 -0.5, %v2563
  %v2764 = vadd.f32 %v2763, 1.0
  %v2765 = vmul.f32 %v2764, %v2563
  %v2766 = vand.u32 2147483647, %v2563
  %vm2767 = vcmp.lt.f32.partialorder %v2766, 0.0004427343
  %v2768 = vsel %vm2767, %v2765, %v2762
  %v2769 = vadd.f32 %v2565, 1.0
  %v2770 = vlog2.pop %v2769
  %v2771 = vmul.f32 %v2770, 0.6931472
  %v2772 = vmul.f32 -0.5, %v2565
  %v2773 = vadd.f32 %v2772, 1.0
  %v2774 = vmul.f32 %v2773, %v2565
  %v2775 = vand.u32 2147483647, %v2565
  %vm2776 = vcmp.lt.f32.partialorder %v2775, 0.0004427343
  %v2777 = vsel %vm2776, %v2774, %v2771
  %v2778 = vadd.f32 %v2567, 1.0
  %v2779 = vlog2.pop %v2778
  %v2780 = vmul.f32 %v2779, 0.6931472
  %v2781 = vmul.f32 -0.5, %v2567
  %v2782 = vadd.f32 %v2781, 1.0
  %v2783 = vmul.f32 %v2782, %v2567
  %v2784 = vand.u32 2147483647, %v2567
  %vm2785 = vcmp.lt.f32.partialorder %v2784, 0.0004427343
  %v2786 = vsel %vm2785, %v2783, %v2780
  %v2787 = vadd.f32 %v2569, 1.0
  %v2788 = vlog2.pop %v2787
  %v2789 = vmul.f32 %v2788, 0.6931472
  %v2790 = vmul.f32 -0.5, %v2569
  %v2791 = vadd.f32 %v2790, 1.0
  %v2792 = vmul.f32 %v2791, %v2569
  %v2793 = vand.u32 2147483647, %v2569
  %vm2794 = vcmp.lt.f32.partialorder %v2793, 0.0004427343
  %v2795 = vsel %vm2794, %v2792, %v2789
  %v2796 = vadd.f32 %v2571, 1.0
  %v2797 = vlog2.pop %v2796
  %v2798 = vmul.f32 %v2797, 0.6931472
  %v2799 = vmul.f32 -0.5, %v2571
  %v2800 = vadd.f32 %v2799, 1.0
  %v2801 = vmul.f32 %v2800, %v2571
  %v2802 = vand.u32 2147483647, %v2571
  %vm2803 = vcmp.lt.f32.partialorder %v2802, 0.0004427343
  %v2804 = vsel %vm2803, %v2801, %v2798
  %v2805 = vadd.f32 %v2573, 1.0
  %v2806 = vlog2.pop %v2805
  %v2807 = vmul.f32 %v2806, 0.6931472
  %v2808 = vmul.f32 -0.5, %v2573
  %v2809 = vadd.f32 %v2808, 1.0
  %v2810 = vmul.f32 %v2809, %v2573
  %v2811 = vand.u32 2147483647, %v2573
  %vm2812 = vcmp.lt.f32.partialorder %v2811, 0.0004427343
  %v2813 = vsel %vm2812, %v2810, %v2807
  %v2814 = vadd.f32 %v2575, 1.0
  %v2815 = vlog2.pop %v2814
  %v2816 = vmul.f32 %v2815, 0.6931472
  %v2817 = vmul.f32 -0.5, %v2575
  %v2818 = vadd.f32 %v2817, 1.0
  %v2819 = vmul.f32 %v2818, %v2575
  %v2820 = vand.u32 2147483647, %v2575
  %vm2821 = vcmp.lt.f32.partialorder %v2820, 0.0004427343
  %v2822 = vsel %vm2821, %v2819, %v2816
  %v2823 = vadd.f32 %v2577, 1.0
  %v2824 = vlog2.pop %v2823
  %v2825 = vmul.f32 %v2824, 0.6931472
  %v2826 = vmul.f32 -0.5, %v2577
  %v2827 = vadd.f32 %v2826, 1.0
  %v2828 = vmul.f32 %v2827, %v2577
  %v2829 = vand.u32 2147483647, %v2577
  %vm2830 = vcmp.lt.f32.partialorder %v2829, 0.0004427343
  %v2831 = vsel %vm2830, %v2828, %v2825
  %v2832 = vadd.f32 %v2579, 1.0
  %v2833 = vlog2.pop %v2832
  %v2834 = vmul.f32 %v2833, 0.6931472
  %v2835 = vmul.f32 -0.5, %v2579
  %v2836 = vadd.f32 %v2835, 1.0
  %v2837 = vmul.f32 %v2836, %v2579
  %v2838 = vand.u32 2147483647, %v2579
  %vm2839 = vcmp.lt.f32.partialorder %v2838, 0.0004427343
  %v2840 = vsel %vm2839, %v2837, %v2834
  %v2841 = vadd.f32 %v2581, 1.0
  %v2842 = vlog2.pop %v2841
  %v2843 = vmul.f32 %v2842, 0.6931472
  %v2844 = vmul.f32 -0.5, %v2581
  %v2845 = vadd.f32 %v2844, 1.0
  %v2846 = vmul.f32 %v2845, %v2581
  %v2847 = vand.u32 2147483647, %v2581
  %vm2848 = vcmp.lt.f32.partialorder %v2847, 0.0004427343
  %v2849 = vsel %vm2848, %v2846, %v2843
  %v2850 = vadd.f32 %v2583, 1.0
  %v2851 = vlog2.pop %v2850
  %v2852 = vmul.f32 %v2851, 0.6931472
  %v2853 = vmul.f32 -0.5, %v2583
  %v2854 = vadd.f32 %v2853, 1.0
  %v2855 = vmul.f32 %v2854, %v2583
  %v2856 = vand.u32 2147483647, %v2583
  %vm2857 = vcmp.lt.f32.partialorder %v2856, 0.0004427343
  %v2858 = vsel %vm2857, %v2855, %v2852
  %v2859 = vadd.f32 %v2585, 1.0
  %v2860 = vlog2.pop %v2859
  %v2861 = vmul.f32 %v2860, 0.6931472
  %v2862 = vmul.f32 -0.5, %v2585
  %v2863 = vadd.f32 %v2862, 1.0
  %v2864 = vmul.f32 %v2863, %v2585
  %v2865 = vand.u32 2147483647, %v2585
  %vm2866 = vcmp.lt.f32.partialorder %v2865, 0.0004427343
  %v2867 = vsel %vm2866, %v2864, %v2861
  %v2868 = vadd.f32 %v2587, 1.0
  %v2869 = vlog2.pop %v2868
  %v2870 = vmul.f32 %v2869, 0.6931472
  %v2871 = vmul.f32 -0.5, %v2587
  %v2872 = vadd.f32 %v2871, 1.0
  %v2873 = vmul.f32 %v2872, %v2587
  %v2874 = vand.u32 2147483647, %v2587
  %vm2875 = vcmp.lt.f32.partialorder %v2874, 0.0004427343
  %v2876 = vsel %vm2875, %v2873, %v2870
  %v2877 = vadd.f32 %v2589, 1.0
  %v2878 = vlog2.pop %v2877
  %v2879 = vmul.f32 %v2878, 0.6931472
  %v2880 = vmul.f32 -0.5, %v2589
  %v2881 = vadd.f32 %v2880, 1.0
  %v2882 = vmul.f32 %v2881, %v2589
  %v2883 = vand.u32 2147483647, %v2589
  %vm2884 = vcmp.lt.f32.partialorder %v2883, 0.0004427343
  %v2885 = vsel %vm2884, %v2882, %v2879
  %v2886 = vadd.f32 %v2591, 1.0
  %v2887 = vlog2.pop %v2886
  %v2888 = vmul.f32 %v2887, 0.6931472
  %v2889 = vmul.f32 -0.5, %v2591
  %v2890 = vadd.f32 %v2889, 1.0
  %v2891 = vmul.f32 %v2890, %v2591
  %v2892 = vand.u32 2147483647, %v2591
  %vm2893 = vcmp.lt.f32.partialorder %v2892, 0.0004427343
  %v2894 = vsel %vm2893, %v2891, %v2888
  %v2895 = vadd.f32 %v2593, 1.0
  %v2896 = vlog2.pop %v2895
  %v2897 = vmul.f32 %v2896, 0.6931472
  %v2898 = vmul.f32 -0.5, %v2593
  %v2899 = vadd.f32 %v2898, 1.0
  %v2900 = vmul.f32 %v2899, %v2593
  %v2901 = vand.u32 2147483647, %v2593
  %vm2902 = vcmp.lt.f32.partialorder %v2901, 0.0004427343
  %v2903 = vsel %vm2902, %v2900, %v2897
  %v2904 = vadd.f32 %v2595, 1.0
  %v2905 = vlog2.pop %v2904
  %v2906 = vmul.f32 %v2905, 0.6931472
  %v2907 = vmul.f32 -0.5, %v2595
  %v2908 = vadd.f32 %v2907, 1.0
  %v2909 = vmul.f32 %v2908, %v2595
  %v2910 = vand.u32 2147483647, %v2595
  %vm2911 = vcmp.lt.f32.partialorder %v2910, 0.0004427343
  %v2912 = vsel %vm2911, %v2909, %v2906
  %v2913 = vadd.f32 %v2597, 1.0
  %v2914 = vlog2.pop %v2913
  %v2915 = vmul.f32 %v2914, 0.6931472
  %v2916 = vmul.f32 -0.5, %v2597
  %v2917 = vadd.f32 %v2916, 1.0
  %v2918 = vmul.f32 %v2917, %v2597
  %v2919 = vand.u32 2147483647, %v2597
  %vm2920 = vcmp.lt.f32.partialorder %v2919, 0.0004427343
  %v2921 = vsel %vm2920, %v2918, %v2915
  %v2922 = vadd.f32 %v2599, 1.0
  %v2923 = vlog2.pop %v2922
  %v2924 = vmul.f32 %v2923, 0.6931472
  %v2925 = vmul.f32 -0.5, %v2599
  %v2926 = vadd.f32 %v2925, 1.0
  %v2927 = vmul.f32 %v2926, %v2599
  %v2928 = vand.u32 2147483647, %v2599
  %vm2929 = vcmp.lt.f32.partialorder %v2928, 0.0004427343
  %v2930 = vsel %vm2929, %v2927, %v2924
  %v2931 = vadd.f32 %v2601, 1.0
  %v2932 = vlog2.pop %v2931
  %v2933 = vmul.f32 %v2932, 0.6931472
  %v2934 = vmul.f32 -0.5, %v2601
  %v2935 = vadd.f32 %v2934, 1.0
  %v2936 = vmul.f32 %v2935, %v2601
  %v2937 = vand.u32 2147483647, %v2601
  %vm2938 = vcmp.lt.f32.partialorder %v2937, 0.0004427343
  %v2939 = vsel %vm2938, %v2936, %v2933
  %v2940 = vadd.f32 %v2603, 1.0
  %v2941 = vlog2.pop %v2940
  %v2942 = vmul.f32 %v2941, 0.6931472
  %v2943 = vmul.f32 -0.5, %v2603
  %v2944 = vadd.f32 %v2943, 1.0
  %v2945 = vmul.f32 %v2944, %v2603
  %v2946 = vand.u32 2147483647, %v2603
  %vm2947 = vcmp.lt.f32.partialorder %v2946, 0.0004427343
  %v2948 = vsel %vm2947, %v2945, %v2942
  %v2949 = vadd.f32 %v2605, 1.0
  %v2950 = vlog2.pop %v2949
  %v2951 = vmul.f32 %v2950, 0.6931472
  %v2952 = vmul.f32 -0.5, %v2605
  %v2953 = vadd.f32 %v2952, 1.0
  %v2954 = vmul.f32 %v2953, %v2605
  %v2955 = vand.u32 2147483647, %v2605
  %vm2956 = vcmp.lt.f32.partialorder %v2955, 0.0004427343
  %v2957 = vsel %vm2956, %v2954, %v2951
  %v2958 = vadd.f32 %v2607, 1.0
  %v2959 = vlog2.pop %v2958
  %v2960 = vmul.f32 %v2959, 0.6931472
  %v2961 = vmul.f32 -0.5, %v2607
  %v2962 = vadd.f32 %v2961, 1.0
  %v2963 = vmul.f32 %v2962, %v2607
  %v2964 = vand.u32 2147483647, %v2607
  %vm2965 = vcmp.lt.f32.partialorder %v2964, 0.0004427343
  %v2966 = vsel %vm2965, %v2963, %v2960
  %v2967 = vadd.f32 %v2609, 1.0
  %v2968 = vlog2.pop %v2967
  %v2969 = vmul.f32 %v2968, 0.6931472
  %v2970 = vmul.f32 -0.5, %v2609
  %v2971 = vadd.f32 %v2970, 1.0
  %v2972 = vmul.f32 %v2971, %v2609
  %v2973 = vand.u32 2147483647, %v2609
  %vm2974 = vcmp.lt.f32.partialorder %v2973, 0.0004427343
  %v2975 = vsel %vm2974, %v2972, %v2969
  %v2976 = vadd.f32 %v2611, 1.0
  %v2977 = vlog2.pop %v2976
  %v2978 = vmul.f32 %v2977, 0.6931472
  %v2979 = vmul.f32 -0.5, %v2611
  %v2980 = vadd.f32 %v2979, 1.0
  %v2981 = vmul.f32 %v2980, %v2611
  %v2982 = vand.u32 2147483647, %v2611
  %vm2983 = vcmp.lt.f32.partialorder %v2982, 0.0004427343
  %v2984 = vsel %vm2983, %v2981, %v2978
  %v2985 = vadd.f32 %v2613, 1.0
  %v2986 = vlog2.pop %v2985
  %v2987 = vmul.f32 %v2986, 0.6931472
  %v2988 = vmul.f32 -0.5, %v2613
  %v2989 = vadd.f32 %v2988, 1.0
  %v2990 = vmul.f32 %v2989, %v2613
  %v2991 = vand.u32 2147483647, %v2613
  %vm2992 = vcmp.lt.f32.partialorder %v2991, 0.0004427343
  %v2993 = vsel %vm2992, %v2990, %v2987
  %v2994 = vadd.f32 %v2615, 1.0
  %v2995 = vlog2.pop %v2994
  %v2996 = vmul.f32 %v2995, 0.6931472
  %v2997 = vmul.f32 -0.5, %v2615
  %v2998 = vadd.f32 %v2997, 1.0
  %v2999 = vmul.f32 %v2998, %v2615
  %v3000 = vand.u32 2147483647, %v2615
  %vm3001 = vcmp.lt.f32.partialorder %v3000, 0.0004427343
  %v3002 = vsel %vm3001, %v2999, %v2996
  %v3003 = vadd.f32 %v2617, 1.0
  %v3004 = vlog2.pop %v3003
  %v3005 = vmul.f32 %v3004, 0.6931472
  %v3006 = vmul.f32 -0.5, %v2617
  %v3007 = vadd.f32 %v3006, 1.0
  %v3008 = vmul.f32 %v3007, %v2617
  %v3009 = vand.u32 2147483647, %v2617
  %vm3010 = vcmp.lt.f32.partialorder %v3009, 0.0004427343
  %v3011 = vsel %vm3010, %v3008, %v3005
  %v3012 = vadd.f32 %v2619, 1.0
  %v3013 = vlog2.pop %v3012
  %v3014 = vmul.f32 %v3013, 0.6931472
  %v3015 = vmul.f32 -0.5, %v2619
  %v3016 = vadd.f32 %v3015, 1.0
  %v3017 = vmul.f32 %v3016, %v2619
  %v3018 = vand.u32 2147483647, %v2619
  %vm3019 = vcmp.lt.f32.partialorder %v3018, 0.0004427343
  %v3020 = vsel %vm3019, %v3017, %v3014
  %v3021 = vadd.f32 %v2621, 1.0
  %v3022 = vlog2.pop %v3021
  %v3023 = vmul.f32 %v3022, 0.6931472
  %v3024 = vmul.f32 -0.5, %v2621
  %v3025 = vadd.f32 %v3024, 1.0
  %v3026 = vmul.f32 %v3025, %v2621
  %v3027 = vand.u32 2147483647, %v2621
  %vm3028 = vcmp.lt.f32.partialorder %v3027, 0.0004427343
  %v3029 = vsel %vm3028, %v3026, %v3023
  %v3030 = vadd.f32 %v2623, 1.0
  %v3031 = vlog2.pop %v3030
  %v3032 = vmul.f32 %v3031, 0.6931472
  %v3033 = vmul.f32 -0.5, %v2623
  %v3034 = vadd.f32 %v3033, 1.0
  %v3035 = vmul.f32 %v3034, %v2623
  %v3036 = vand.u32 2147483647, %v2623
  %vm3037 = vcmp.lt.f32.partialorder %v3036, 0.0004427343
  %v3038 = vsel %vm3037, %v3035, %v3032
  %v3039 = vadd.f32 %v2625, 1.0
  %v3040 = vlog2.pop %v3039
  %v3041 = vmul.f32 %v3040, 0.6931472
  %v3042 = vmul.f32 -0.5, %v2625
  %v3043 = vadd.f32 %v3042, 1.0
  %v3044 = vmul.f32 %v3043, %v2625
  %v3045 = vand.u32 2147483647, %v2625
  %vm3046 = vcmp.lt.f32.partialorder %v3045, 0.0004427343
  %v3047 = vsel %vm3046, %v3044, %v3041
  %v3048 = vadd.f32 %v2627, 1.0
  %v3049 = vlog2.pop %v3048
  %v3050 = vmul.f32 %v3049, 0.6931472
  %v3051 = vmul.f32 -0.5, %v2627
  %v3052 = vadd.f32 %v3051, 1.0
  %v3053 = vmul.f32 %v3052, %v2627
  %v3054 = vand.u32 2147483647, %v2627
  %vm3055 = vcmp.lt.f32.partialorder %v3054, 0.0004427343
  %v3056 = vsel %vm3055, %v3053, %v3050
  %v3057 = vadd.f32 %v2629, 1.0
  %v3058 = vlog2.pop %v3057
  %v3059 = vmul.f32 %v3058, 0.6931472
  %v3060 = vmul.f32 -0.5, %v2629
  %v3061 = vadd.f32 %v3060, 1.0
  %v3062 = vmul.f32 %v3061, %v2629
  %v3063 = vand.u32 2147483647, %v2629
  %vm3064 = vcmp.lt.f32.partialorder %v3063, 0.0004427343
  %v3065 = vsel %vm3064, %v3062, %v3059
  %v3066 = vadd.f32 %v2631, 1.0
  %v3067 = vlog2.pop %v3066
  %v3068 = vmul.f32 %v3067, 0.6931472
  %v3069 = vmul.f32 -0.5, %v2631
  %v3070 = vadd.f32 %v3069, 1.0
  %v3071 = vmul.f32 %v3070, %v2631
  %v3072 = vand.u32 2147483647, %v2631
  %vm3073 = vcmp.lt.f32.partialorder %v3072, 0.0004427343
  %v3074 = vsel %vm3073, %v3071, %v3068
  %v3075 = vadd.f32 %v2633, 1.0
  %v3076 = vlog2.pop %v3075
  %v3077 = vmul.f32 %v3076, 0.6931472
  %v3078 = vmul.f32 -0.5, %v2633
  %v3079 = vadd.f32 %v3078, 1.0
  %v3080 = vmul.f32 %v3079, %v2633
  %v3081 = vand.u32 2147483647, %v2633
  %vm3082 = vcmp.lt.f32.partialorder %v3081, 0.0004427343
  %v3083 = vsel %vm3082, %v3080, %v3077
  %v3084 = vadd.f32 %v2635, 1.0
  %v3085 = vlog2.pop %v3084
  %v3086 = vmul.f32 %v3085, 0.6931472
  %v3087 = vmul.f32 -0.5, %v2635
  %v3088 = vadd.f32 %v3087, 1.0
  %v3089 = vmul.f32 %v3088, %v2635
  %v3090 = vand.u32 2147483647, %v2635
  %vm3091 = vcmp.lt.f32.partialorder %v3090, 0.0004427343
  %v3092 = vsel %vm3091, %v3089, %v3086
  %v3093 = vadd.f32 %v2637, 1.0
  %v3094 = vlog2.pop %v3093
  %v3095 = vmul.f32 %v3094, 0.6931472
  %v3096 = vmul.f32 -0.5, %v2637
  %v3097 = vadd.f32 %v3096, 1.0
  %v3098 = vmul.f32 %v3097, %v2637
  %v3099 = vand.u32 2147483647, %v2637
  %vm3100 = vcmp.lt.f32.partialorder %v3099, 0.0004427343
  %v3101 = vsel %vm3100, %v3098, %v3095
  %v3102 = vadd.f32 %v2639, 1.0
  %v3103 = vlog2.pop %v3102
  %v3104 = vmul.f32 %v3103, 0.6931472
  %v3105 = vmul.f32 -0.5, %v2639
  %v3106 = vadd.f32 %v3105, 1.0
  %v3107 = vmul.f32 %v3106, %v2639
  %v3108 = vand.u32 2147483647, %v2639
  %vm3109 = vcmp.lt.f32.partialorder %v3108, 0.0004427343
  %v3110 = vsel %vm3109, %v3107, %v3104
  %v3111 = vadd.f32 %v2641, 1.0
  %v3112 = vlog2.pop %v3111
  %v3113 = vmul.f32 %v3112, 0.6931472
  %v3114 = vmul.f32 -0.5, %v2641
  %v3115 = vadd.f32 %v3114, 1.0
  %v3116 = vmul.f32 %v3115, %v2641
  %v3117 = vand.u32 2147483647, %v2641
  %vm3118 = vcmp.lt.f32.partialorder %v3117, 0.0004427343
  %v3119 = vsel %vm3118, %v3116, %v3113
  %v3120 = vadd.f32 %v2643, 1.0
  %v3121 = vlog2.pop %v3120
  %v3122 = vmul.f32 %v3121, 0.6931472
  %v3123 = vmul.f32 -0.5, %v2643
  %v3124 = vadd.f32 %v3123, 1.0
  %v3125 = vmul.f32 %v3124, %v2643
  %v3126 = vand.u32 2147483647, %v2643
  %vm3127 = vcmp.lt.f32.partialorder %v3126, 0.0004427343
  %v3128 = vsel %vm3127, %v3125, %v3122
  %v3129 = vadd.f32 %v2645, 1.0
  %v3130 = vlog2.pop %v3129
  %v3131 = vmul.f32 %v3130, 0.6931472
  %v3132 = vmul.f32 -0.5, %v2645
  %v3133 = vadd.f32 %v3132, 1.0
  %v3134 = vmul.f32 %v3133, %v2645
  %v3135 = vand.u32 2147483647, %v2645
  %vm3136 = vcmp.lt.f32.partialorder %v3135, 0.0004427343
  %v3137 = vsel %vm3136, %v3134, %v3131
  %v3138 = vadd.f32 %v2647, 1.0
  %v3139 = vlog2.pop %v3138
  %v3140 = vmul.f32 %v3139, 0.6931472
  %v3141 = vmul.f32 -0.5, %v2647
  %v3142 = vadd.f32 %v3141, 1.0
  %v3143 = vmul.f32 %v3142, %v2647
  %v3144 = vand.u32 2147483647, %v2647
  %vm3145 = vcmp.lt.f32.partialorder %v3144, 0.0004427343
  %v3146 = vsel %vm3145, %v3143, %v3140
  %v3147 = vadd.f32 %v2649, 1.0
  %v3148 = vlog2.pop %v3147
  %v3149 = vmul.f32 %v3148, 0.6931472
  %v3150 = vmul.f32 -0.5, %v2649
  %v3151 = vadd.f32 %v3150, 1.0
  %v3152 = vmul.f32 %v3151, %v2649
  %v3153 = vand.u32 2147483647, %v2649
  %vm3154 = vcmp.lt.f32.partialorder %v3153, 0.0004427343
  %v3155 = vsel %vm3154, %v3152, %v3149
  %v3156 = vadd.f32 %v2651, 1.0
  %v3157 = vlog2.pop %v3156
  %v3158 = vmul.f32 %v3157, 0.6931472
  %v3159 = vmul.f32 -0.5, %v2651
  %v3160 = vadd.f32 %v3159, 1.0
  %v3161 = vmul.f32 %v3160, %v2651
  %v3162 = vand.u32 2147483647, %v2651
  %vm3163 = vcmp.lt.f32.partialorder %v3162, 0.0004427343
  %v3164 = vsel %vm3163, %v3161, %v3158
  %v3165 = vadd.f32 %v2653, 1.0
  %v3166 = vlog2.pop %v3165
  %v3167 = vmul.f32 %v3166, 0.6931472
  %v3168 = vmul.f32 -0.5, %v2653
  %v3169 = vadd.f32 %v3168, 1.0
  %v3170 = vmul.f32 %v3169, %v2653
  %v3171 = vand.u32 2147483647, %v2653
  %vm3172 = vcmp.lt.f32.partialorder %v3171, 0.0004427343
  %v3173 = vsel %vm3172, %v3170, %v3167
  %v3174 = vadd.f32 %v2655, 1.0
  %v3175 = vlog2.pop %v3174
  %v3176 = vmul.f32 %v3175, 0.6931472
  %v3177 = vmul.f32 -0.5, %v2655
  %v3178 = vadd.f32 %v3177, 1.0
  %v3179 = vmul.f32 %v3178, %v2655
  %v3180 = vand.u32 2147483647, %v2655
  %vm3181 = vcmp.lt.f32.partialorder %v3180, 0.0004427343
  %v3182 = vsel %vm3181, %v3179, %v3176
  %v3183 = vadd.f32 %v2657, 1.0
  %v3184 = vlog2.pop %v3183
  %v3185 = vmul.f32 %v3184, 0.6931472
  %v3186 = vmul.f32 -0.5, %v2657
  %v3187 = vadd.f32 %v3186, 1.0
  %v3188 = vmul.f32 %v3187, %v2657
  %v3189 = vand.u32 2147483647, %v2657
  %vm3190 = vcmp.lt.f32.partialorder %v3189, 0.0004427343
  %v3191 = vsel %vm3190, %v3188, %v3185
  %v3192 = vadd.f32 %v2659, 1.0
  %v3193 = vlog2.pop %v3192
  %v3194 = vmul.f32 %v3193, 0.6931472
  %v3195 = vmul.f32 -0.5, %v2659
  %v3196 = vadd.f32 %v3195, 1.0
  %v3197 = vmul.f32 %v3196, %v2659
  %v3198 = vand.u32 2147483647, %v2659
  %vm3199 = vcmp.lt.f32.partialorder %v3198, 0.0004427343
  %v3200 = vsel %vm3199, %v3197, %v3194
  %v3201 = vadd.f32 %v2661, 1.0
  %v3202 = vlog2.pop %v3201
  %v3203 = vmul.f32 %v3202, 0.6931472
  %v3204 = vmul.f32 -0.5, %v2661
  %v3205 = vadd.f32 %v3204, 1.0
  %v3206 = vmul.f32 %v3205, %v2661
  %v3207 = vand.u32 2147483647, %v2661
  %vm3208 = vcmp.lt.f32.partialorder %v3207, 0.0004427343
  %v3209 = vsel %vm3208, %v3206, %v3203
  %v3210 = vadd.f32 %v2663, 1.0
  %v3211 = vlog2.pop %v3210
  %v3212 = vmul.f32 %v3211, 0.6931472
  %v3213 = vmul.f32 -0.5, %v2663
  %v3214 = vadd.f32 %v3213, 1.0
  %v3215 = vmul.f32 %v3214, %v2663
  %v3216 = vand.u32 2147483647, %v2663
  %vm3217 = vcmp.lt.f32.partialorder %v3216, 0.0004427343
  %v3218 = vsel %vm3217, %v3215, %v3212
  %v3219 = vadd.f32 %v2665, 1.0
  %v3220 = vlog2.pop %v3219
  %v3221 = vmul.f32 %v3220, 0.6931472
  %v3222 = vmul.f32 -0.5, %v2665
  %v3223 = vadd.f32 %v3222, 1.0
  %v3224 = vmul.f32 %v3223, %v2665
  %v3225 = vand.u32 2147483647, %v2665
  %vm3226 = vcmp.lt.f32.partialorder %v3225, 0.0004427343
  %v3227 = vsel %vm3226, %v3224, %v3221
  %v3228 = vadd.f32 %v2667, 1.0
  %v3229 = vlog2.pop %v3228
  %v3230 = vmul.f32 %v3229, 0.6931472
  %v3231 = vmul.f32 -0.5, %v2667
  %v3232 = vadd.f32 %v3231, 1.0
  %v3233 = vmul.f32 %v3232, %v2667
  %v3234 = vand.u32 2147483647, %v2667
  %vm3235 = vcmp.lt.f32.partialorder %v3234, 0.0004427343
  %v3236 = vsel %vm3235, %v3233, %v3230
  %v3237 = vadd.f32 %v2669, 1.0
  %v3238 = vlog2.pop %v3237
  %v3239 = vmul.f32 %v3238, 0.6931472
  %v3240 = vmul.f32 -0.5, %v2669
  %v3241 = vadd.f32 %v3240, 1.0
  %v3242 = vmul.f32 %v3241, %v2669
  %v3243 = vand.u32 2147483647, %v2669
  %vm3244 = vcmp.lt.f32.partialorder %v3243, 0.0004427343
  %v3245 = vsel %vm3244, %v3242, %v3239
  %v3246 = vadd.f32 %v2222, %v2678
  %v3247 = vadd.f32 %v2223, %v2687
  %v3248 = vadd.f32 %v2224, %v2696
  %v3249 = vadd.f32 %v2225, %v2705
  %v3250 = vadd.f32 %v2226, %v2714
  %v3251 = vadd.f32 %v2227, %v2723
  %v3252 = vadd.f32 %v2228, %v2732
  %v3253 = vadd.f32 %v2229, %v2741
  %v3254 = vadd.f32 %v2230, %v2750
  %v3255 = vadd.f32 %v2231, %v2759
  %v3256 = vadd.f32 %v2232, %v2768
  %v3257 = vadd.f32 %v2233, %v2777
  %v3258 = vadd.f32 %v2234, %v2786
  %v3259 = vadd.f32 %v2235, %v2795
  %v3260 = vadd.f32 %v2236, %v2804
  %v3261 = vadd.f32 %v2237, %v2813
  %v3262 = vadd.f32 %v2238, %v2822
  %v3263 = vadd.f32 %v2239, %v2831
  %v3264 = vadd.f32 %v2240, %v2840
  %v3265 = vadd.f32 %v2241, %v2849
  %v3266 = vadd.f32 %v2242, %v2858
  %v3267 = vadd.f32 %v2243, %v2867
  %v3268 = vadd.f32 %v2244, %v2876
  %v3269 = vadd.f32 %v2245, %v2885
  %v3270 = vadd.f32 %v2246, %v2894
  %v3271 = vadd.f32 %v2247, %v2903
  %v3272 = vadd.f32 %v2248, %v2912
  %v3273 = vadd.f32 %v2249, %v2921
  %v3274 = vadd.f32 %v2250, %v2930
  %v3275 = vadd.f32 %v2251, %v2939
  %v3276 = vadd.f32 %v2252, %v2948
  %v3277 = vadd.f32 %v2253, %v2957
  %v3278 = vadd.f32 %v2254, %v2966
  %v3279 = vadd.f32 %v2255, %v2975
  %v3280 = vadd.f32 %v2256, %v2984
  %v3281 = vadd.f32 %v2257, %v2993
  %v3282 = vadd.f32 %v2258, %v3002
  %v3283 = vadd.f32 %v2259, %v3011
  %v3284 = vadd.f32 %v2260, %v3020
  %v3285 = vadd.f32 %v2261, %v3029
  %v3286 = vadd.f32 %v2262, %v3038
  %v3287 = vadd.f32 %v2263, %v3047
  %v3288 = vadd.f32 %v2264, %v3056
  %v3289 = vadd.f32 %v2265, %v3065
  %v3290 = vadd.f32 %v2266, %v3074
  %v3291 = vadd.f32 %v2267, %v3083
  %v3292 = vadd.f32 %v2268, %v3092
  %v3293 = vadd.f32 %v2269, %v3101
  %v3294 = vadd.f32 %v2270, %v3110
  %v3295 = vadd.f32 %v2271, %v3119
  %v3296 = vadd.f32 %v2272, %v3128
  %v3297 = vadd.f32 %v2273, %v3137
  %v3298 = vadd.f32 %v2274, %v3146
  %v3299 = vadd.f32 %v2275, %v3155
  %v3300 = vadd.f32 %v2276, %v3164
  %v3301 = vadd.f32 %v2277, %v3173
  %v3302 = vadd.f32 %v2278, %v3182
  %v3303 = vadd.f32 %v2279, %v3191
  %v3304 = vadd.f32 %v2280, %v3200
  %v3305 = vadd.f32 %v2281, %v3209
  %v3306 = vadd.f32 %v2282, %v3218
  %v3307 = vadd.f32 %v2283, %v3227
  %v3308 = vadd.f32 %v2284, %v3236
  %v3309 = vadd.f32 %v2285, %v3245
  %v3310 = vsel %vm2286, %v2350, %v3246
  %v3311 = vsel %vm2287, %v2351, %v3247
  %v3312 = vsel %vm2288, %v2352, %v3248
  %v3313 = vsel %vm2289, %v2353, %v3249
  %v3314 = vsel %vm2290, %v2354, %v3250
  %v3315 = vsel %vm2291, %v2355, %v3251
  %v3316 = vsel %vm2292, %v2356, %v3252
  %v3317 = vsel %vm2293, %v2357, %v3253
  %v3318 = vsel %vm2294, %v2358, %v3254
  %v3319 = vsel %vm2295, %v2359, %v3255
  %v3320 = vsel %vm2296, %v2360, %v3256
  %v3321 = vsel %vm2297, %v2361, %v3257
  %v3322 = vsel %vm2298, %v2362, %v3258
  %v3323 = vsel %vm2299, %v2363, %v3259
  %v3324 = vsel %vm2300, %v2364, %v3260
  %v3325 = vsel %vm2301, %v2365, %v3261
  %v3326 = vsel %vm2302, %v2366, %v3262
  %v3327 = vsel %vm2303, %v2367, %v3263
  %v3328 = vsel %vm2304, %v2368, %v3264
  %v3329 = vsel %vm2305, %v2369, %v3265
  %v3330 = vsel %vm2306, %v2370, %v3266
  %v3331 = vsel %vm2307, %v2371, %v3267
  %v3332 = vsel %vm2308, %v2372, %v3268
  %v3333 = vsel %vm2309, %v2373, %v3269
  %v3334 = vsel %vm2310, %v2374, %v3270
  %v3335 = vsel %vm2311, %v2375, %v3271
  %v3336 = vsel %vm2312, %v2376, %v3272
  %v3337 = vsel %vm2313, %v2377, %v3273
  %v3338 = vsel %vm2314, %v2378, %v3274
  %v3339 = vsel %vm2315, %v2379, %v3275
  %v3340 = vsel %vm2316, %v2380, %v3276
  %v3341 = vsel %vm2317, %v2381, %v3277
  %v3342 = vsel %vm2318, %v2382, %v3278
  %v3343 = vsel %vm2319, %v2383, %v3279
  %v3344 = vsel %vm2320, %v2384, %v3280
  %v3345 = vsel %vm2321, %v2385, %v3281
  %v3346 = vsel %vm2322, %v2386, %v3282
  %v3347 = vsel %vm2323, %v2387, %v3283
  %v3348 = vsel %vm2324, %v2388, %v3284
  %v3349 = vsel %vm2325, %v2389, %v3285
  %v3350 = vsel %vm2326, %v2390, %v3286
  %v3351 = vsel %vm2327, %v2391, %v3287
  %v3352 = vsel %vm2328, %v2392, %v3288
  %v3353 = vsel %vm2329, %v2393, %v3289
  %v3354 = vsel %vm2330, %v2394, %v3290
  %v3355 = vsel %vm2331, %v2395, %v3291
  %v3356 = vsel %vm2332, %v2396, %v3292
  %v3357 = vsel %vm2333, %v2397, %v3293
  %v3358 = vsel %vm2334, %v2398, %v3294
  %v3359 = vsel %vm2335, %v2399, %v3295
  %v3360 = vsel %vm2336, %v2400, %v3296
  %v3361 = vsel %vm2337, %v2401, %v3297
  %v3362 = vsel %vm2338, %v2402, %v3298
  %v3363 = vsel %vm2339, %v2403, %v3299
  %v3364 = vsel %vm2340, %v2404, %v3300
  %v3365 = vsel %vm2341, %v2405, %v3301
  %v3366 = vsel %vm2342, %v2406, %v3302
  %v3367 = vsel %vm2343, %v2407, %v3303
  %v3368 = vsel %vm2344, %v2408, %v3304
  %v3369 = vsel %vm2345, %v2409, %v3305
  %v3370 = vsel %vm2346, %v2410, %v3306
  %v3371 = vsel %vm2347, %v2411, %v3307
  %v3372 = vsel %vm2348, %v2412, %v3308
  %v3373 = vsel %vm2349, %v2413, %v3309
  %v3374 = vadd.f32 %v3310, %v3311
  %3375 = vadd.xlane.f32.xlu0 %v3374
  %v3376 = vpop.xlane.xlu0 %3375
  %v3377 = vadd.f32 %v3312, %v3313
  %3378 = vadd.xlane.f32.xlu0 %v3377
  %v3379 = vpop.xlane.xlu0 %3378
  %v3380 = vadd.f32 %v3314, %v3315
  %3381 = vadd.xlane.f32.xlu0 %v3380
  %v3382 = vpop.xlane.xlu0 %3381
  %v3383 = vadd.f32 %v3316, %v3317
  %3384 = vadd.xlane.f32.xlu0 %v3383
  %v3385 = vpop.xlane.xlu0 %3384
  %v3386 = vadd.f32 %v3318, %v3319
  %3387 = vadd.xlane.f32.xlu0 %v3386
  %v3388 = vpop.xlane.xlu0 %3387
  %v3389 = vadd.f32 %v3320, %v3321
  %3390 = vadd.xlane.f32.xlu0 %v3389
  %v3391 = vpop.xlane.xlu0 %3390
  %v3392 = vadd.f32 %v3322, %v3323
  %3393 = vadd.xlane.f32.xlu0 %v3392
  %v3394 = vpop.xlane.xlu0 %3393
  %v3395 = vadd.f32 %v3324, %v3325
  %3396 = vadd.xlane.f32.xlu0 %v3395
  %v3397 = vpop.xlane.xlu0 %3396
  %v3398 = vadd.f32 %v3326, %v3327
  %3399 = vadd.xlane.f32.xlu0 %v3398
  %v3400 = vpop.xlane.xlu0 %3399
  %v3401 = vadd.f32 %v3328, %v3329
  %3402 = vadd.xlane.f32.xlu0 %v3401
  %v3403 = vpop.xlane.xlu0 %3402
  %v3404 = vadd.f32 %v3330, %v3331
  %3405 = vadd.xlane.f32.xlu0 %v3404
  %v3406 = vpop.xlane.xlu0 %3405
  %v3407 = vadd.f32 %v3332, %v3333
  %3408 = vadd.xlane.f32.xlu0 %v3407
  %v3409 = vpop.xlane.xlu0 %3408
  %v3410 = vadd.f32 %v3334, %v3335
  %3411 = vadd.xlane.f32.xlu0 %v3410
  %v3412 = vpop.xlane.xlu0 %3411
  %v3413 = vadd.f32 %v3336, %v3337
  %3414 = vadd.xlane.f32.xlu0 %v3413
  %v3415 = vpop.xlane.xlu0 %3414
  %v3416 = vadd.f32 %v3338, %v3339
  %3417 = vadd.xlane.f32.xlu0 %v3416
  %v3418 = vpop.xlane.xlu0 %3417
  %v3419 = vadd.f32 %v3340, %v3341
  %3420 = vadd.xlane.f32.xlu0 %v3419
  %v3421 = vpop.xlane.xlu0 %3420
  %v3422 = vadd.f32 %v3342, %v3343
  %3423 = vadd.xlane.f32.xlu0 %v3422
  %v3424 = vpop.xlane.xlu0 %3423
  %v3425 = vadd.f32 %v3344, %v3345
  %3426 = vadd.xlane.f32.xlu0 %v3425
  %v3427 = vpop.xlane.xlu0 %3426
  %v3428 = vadd.f32 %v3346, %v3347
  %3429 = vadd.xlane.f32.xlu0 %v3428
  %v3430 = vpop.xlane.xlu0 %3429
  %v3431 = vadd.f32 %v3348, %v3349
  %3432 = vadd.xlane.f32.xlu0 %v3431
  %v3433 = vpop.xlane.xlu0 %3432
  %v3434 = vadd.f32 %v3350, %v3351
  %3435 = vadd.xlane.f32.xlu0 %v3434
  %v3436 = vpop.xlane.xlu0 %3435
  %v3437 = vadd.f32 %v3352, %v3353
  %3438 = vadd.xlane.f32.xlu0 %v3437
  %v3439 = vpop.xlane.xlu0 %3438
  %v3440 = vadd.f32 %v3354, %v3355
  %3441 = vadd.xlane.f32.xlu0 %v3440
  %v3442 = vpop.xlane.xlu0 %3441
  %v3443 = vadd.f32 %v3356, %v3357
  %3444 = vadd.xlane.f32.xlu0 %v3443
  %v3445 = vpop.xlane.xlu0 %3444
  %v3446 = vadd.f32 %v3358, %v3359
  %3447 = vadd.xlane.f32.xlu0 %v3446
  %v3448 = vpop.xlane.xlu0 %3447
  %v3449 = vadd.f32 %v3360, %v3361
  %3450 = vadd.xlane.f32.xlu0 %v3449
  %v3451 = vpop.xlane.xlu0 %3450
  %v3452 = vadd.f32 %v3362, %v3363
  %3453 = vadd.xlane.f32.xlu0 %v3452
  %v3454 = vpop.xlane.xlu0 %3453
  %v3455 = vadd.f32 %v3364, %v3365
  %3456 = vadd.xlane.f32.xlu0 %v3455
  %v3457 = vpop.xlane.xlu0 %3456
  %v3458 = vadd.f32 %v3366, %v3367
  %3459 = vadd.xlane.f32.xlu0 %v3458
  %v3460 = vpop.xlane.xlu0 %3459
  %v3461 = vadd.f32 %v3368, %v3369
  %3462 = vadd.xlane.f32.xlu0 %v3461
  %v3463 = vpop.xlane.xlu0 %3462
  %v3464 = vadd.f32 %v3370, %v3371
  %3465 = vadd.xlane.f32.xlu0 %v3464
  %v3466 = vpop.xlane.xlu0 %3465
  %v3467 = vadd.f32 %v3372, %v3373
  %3468 = vadd.xlane.f32.xlu0 %v3467
  %v3469 = vpop.xlane.xlu0 %3468
  %v3470 = vsub.f32 0.0, %v3376
  %v3471 = vsub.f32 0.0, %v3379
  %v3472 = vsub.f32 0.0, %v3382
  %v3473 = vsub.f32 0.0, %v3385
  %v3474 = vsub.f32 0.0, %v3388
  %v3475 = vsub.f32 0.0, %v3391
  %v3476 = vsub.f32 0.0, %v3394
  %v3477 = vsub.f32 0.0, %v3397
  %v3478 = vsub.f32 0.0, %v3400
  %v3479 = vsub.f32 0.0, %v3403
  %v3480 = vsub.f32 0.0, %v3406
  %v3481 = vsub.f32 0.0, %v3409
  %v3482 = vsub.f32 0.0, %v3412
  %v3483 = vsub.f32 0.0, %v3415
  %v3484 = vsub.f32 0.0, %v3418
  %v3485 = vsub.f32 0.0, %v3421
  %v3486 = vsub.f32 0.0, %v3424
  %v3487 = vsub.f32 0.0, %v3427
  %v3488 = vsub.f32 0.0, %v3430
  %v3489 = vsub.f32 0.0, %v3433
  %v3490 = vsub.f32 0.0, %v3436
  %v3491 = vsub.f32 0.0, %v3439
  %v3492 = vsub.f32 0.0, %v3442
  %v3493 = vsub.f32 0.0, %v3445
  %v3494 = vsub.f32 0.0, %v3448
  %v3495 = vsub.f32 0.0, %v3451
  %v3496 = vsub.f32 0.0, %v3454
  %v3497 = vsub.f32 0.0, %v3457
  %v3498 = vsub.f32 0.0, %v3460
  %v3499 = vsub.f32 0.0, %v3463
  %v3500 = vsub.f32 0.0, %v3466
  %v3501 = vsub.f32 0.0, %v3469
  %v3502 = vsub.f32 %v3470, %v1273
  %v3503 = vsub.f32 %v3471, %v1274
  %v3504 = vsub.f32 %v3472, %v1275
  %v3505 = vsub.f32 %v3473, %v1276
  %v3506 = vsub.f32 %v3474, %v1277
  %v3507 = vsub.f32 %v3475, %v1278
  %v3508 = vsub.f32 %v3476, %v1279
  %v3509 = vsub.f32 %v3477, %v1280
  %v3510 = vsub.f32 %v3478, %v1281
  %v3511 = vsub.f32 %v3479, %v1282
  %v3512 = vsub.f32 %v3480, %v1283
  %v3513 = vsub.f32 %v3481, %v1284
  %v3514 = vsub.f32 %v3482, %v1285
  %v3515 = vsub.f32 %v3483, %v1286
  %v3516 = vsub.f32 %v3484, %v1287
  %v3517 = vsub.f32 %v3485, %v1288
  %v3518 = vsub.f32 %v3486, %v1289
  %v3519 = vsub.f32 %v3487, %v1290
  %v3520 = vsub.f32 %v3488, %v1291
  %v3521 = vsub.f32 %v3489, %v1292
  %v3522 = vsub.f32 %v3490, %v1293
  %v3523 = vsub.f32 %v3491, %v1294
  %v3524 = vsub.f32 %v3492, %v1295
  %v3525 = vsub.f32 %v3493, %v1296
  %v3526 = vsub.f32 %v3494, %v1297
  %v3527 = vsub.f32 %v3495, %v1298
  %v3528 = vsub.f32 %v3496, %v1299
  %v3529 = vsub.f32 %v3497, %v1300
  %v3530 = vsub.f32 %v3498, %v1301
  %v3531 = vsub.f32 %v3499, %v1302
  %v3532 = vsub.f32 %v3500, %v1303
  %v3533 = vsub.f32 %v3501, %v1304
  %v3534 = vadd.f32 %v3502, %v3503
  %v3535 = vadd.f32 %v3534, %v3504
  %v3536 = vadd.f32 %v3535, %v3505
  %v3537 = vadd.f32 %v3536, %v3506
  %v3538 = vadd.f32 %v3537, %v3507
  %v3539 = vadd.f32 %v3538, %v3508
  %v3540 = vadd.f32 %v3539, %v3509
  %v3541 = vadd.f32 %v3540, %v3510
  %v3542 = vadd.f32 %v3541, %v3511
  %v3543 = vadd.f32 %v3542, %v3512
  %v3544 = vadd.f32 %v3543, %v3513
  %v3545 = vadd.f32 %v3544, %v3514
  %v3546 = vadd.f32 %v3545, %v3515
  %v3547 = vadd.f32 %v3546, %v3516
  %v3548 = vadd.f32 %v3547, %v3517
  %v3549 = vadd.f32 %v3548, %v3518
  %v3550 = vadd.f32 %v3549, %v3519
  %v3551 = vadd.f32 %v3550, %v3520
  %v3552 = vadd.f32 %v3551, %v3521
  %v3553 = vadd.f32 %v3552, %v3522
  %v3554 = vadd.f32 %v3553, %v3523
  %v3555 = vadd.f32 %v3554, %v3524
  %v3556 = vadd.f32 %v3555, %v3525
  %v3557 = vadd.f32 %v3556, %v3526
  %v3558 = vadd.f32 %v3557, %v3527
  %v3559 = vadd.f32 %v3558, %v3528
  %v3560 = vadd.f32 %v3559, %v3529
  %v3561 = vadd.f32 %v3560, %v3530
  %v3562 = vadd.f32 %v3561, %v3531
  %v3563 = vadd.f32 %v3562, %v3532
  %v3564 = vadd.f32 %v3563, %v3533
  %v3565 = vrot.slane %v3564, 4
  %v3566 = vadd.f32 %v3564, %v3565
  %v3567 = vrot.slane %v3566, 2
  %v3568 = vadd.f32 %v3566, %v3567
  %v3569 = vrot.slane %v3568, 1
  %v3570 = vadd.f32 %v3568, %v3569
  %3571 = vst [vmem:[%s4] sm:$0xff] %v3570
  // Predicated region
  $region18: #{vae_forward.1} parent=0 // pred_check
    _
  $region19: #{vae_forward.1} parent=0 // pred_check_branch
    %3573 = sbr.rel (0) target = $region21
  $region20: #{vae_forward.1} parent=0 // pred_region
    _
  $region21: #{vae_forward.1} parent=0 // pred_fallthru
    _
  // Predicated region
  $region22: #{vae_forward.1} parent=0 // pred_check
    _
  $region23: #{vae_forward.1} parent=0 // pred_check_branch
    %3575 = sbr.rel (0) target = $region25
  $region24: #{vae_forward.1} parent=0 // pred_region
    _
  $region25: #{vae_forward.1} parent=0 // pred_fallthru
    _

</llo_original>
